<compile_context>
chip_gen: v6e
topology: v6e:2x2x1
jax: 0.10.0
libtpu: 0.0.40
codegen_flags: <defaults>
</compile_context>

<pallas_src>
import functools
import math

import jax
import jax.numpy as jnp
import numpy as np
from jax import lax
from jax.experimental import pallas as pl
from jax.experimental.pallas import tpu as pltpu

EPS = 1e-6


def _encoder_layer_kernel(n_heads, tq, inv_scale, approx,
                          x_ref,                                   # [1, T, D] f32
                          wq_ref, wk_ref, wv_ref, wo_ref,          # [D, D] compute dtype
                          g1_ref, be1_ref,                         # [1, D] f32
                          w1_ref, bb1_ref, w2_ref, bb2_ref,        # FFN weights / biases
                          g2_ref, be2_ref,                         # [1, D] f32
                          o_ref,                                   # [1, tq, D] f32
                          k_ref, v_ref, ctx_ref):                  # VMEM scratch
    qi = pl.program_id(1)
    D = x_ref.shape[-1]
    hd = D // n_heads
    cdt = wq_ref.dtype            # MXU compute dtype (bf16 fast mode / f32 precise mode)

    # --- K/V projections once per batch (qi axis is "arbitrary": qi==0 runs first) ---
    @pl.when(qi == 0)
    def _():
        xkv = x_ref[0].astype(cdt)                                             # [T, D]
        k_ref[...] = jnp.dot(xkv, wk_ref[...],
                             preferred_element_type=jnp.float32).astype(cdt)
        v_ref[...] = jnp.dot(xkv, wv_ref[...],
                             preferred_element_type=jnp.float32).astype(cdt)

    # --- query tile: slice rows of the resident full-sequence block ---
    start = pl.multiple_of(qi * tq, tq)
    xq = x_ref[0, pl.ds(start, tq), :]                                         # [tq, D] f32

    q = jnp.dot(xq.astype(cdt), wq_ref[...],
                preferred_element_type=jnp.float32)                            # [tq, D] f32
    q = (q * inv_scale).astype(cdt)     # scale in f32 (matches reference), cast once
    k = k_ref[...]                      # [T, D] cdt
    v = v_ref[...]                      # [T, D] cdt

    # --- per-head attention (no causal mask) into a context scratch ---
    dn = (((1,), (1,)), ((), ()))       # contract last dims of both operands
    for h in range(n_heads):
        lo, hi = h * hd, (h + 1) * hd
        s = lax.dot_general(q[:, lo:hi], k[:, lo:hi], dn,
                            preferred_element_type=jnp.float32)                # [tq, T]
        s = s - jnp.max(s, axis=-1, keepdims=True)
        e = jnp.exp(s)
        p = e * pl.reciprocal(jnp.sum(e, axis=-1, keepdims=True), approx=approx)
        oh = jnp.dot(p.astype(cdt), v[:, lo:hi],
                     preferred_element_type=jnp.float32)                       # [tq, hd]
        ctx_ref[:, lo:hi] = oh.astype(cdt)

    # --- output projection: single full-depth matmul == concat(heads) @ Wo ---
    attn = jnp.dot(ctx_ref[...], wo_ref[...],
                   preferred_element_type=jnp.float32)                         # [tq, D]

    # --- residual + LayerNorm 1 (torch.std: unbiased; divide by std + eps) ---
    y1 = xq + attn
    m1 = jnp.mean(y1, axis=-1, keepdims=True)
    std1 = jnp.sqrt(jnp.sum((y1 - m1) ** 2, axis=-1, keepdims=True) / (D - 1))
    z1 = g1_ref[...] * (y1 - m1) / (std1 + EPS) + be1_ref[...]

    # --- feed-forward ---
    # TODO(synk): tile the hidden dim H for v7x-scale configs instead of full-H in VMEM.
    hdn = jnp.dot(z1.astype(cdt), w1_ref[...],
                  preferred_element_type=jnp.float32) + bb1_ref[...]
    hdn = jnp.maximum(hdn, 0.0)
    f = jnp.dot(hdn.astype(cdt), w2_ref[...],
                preferred_element_type=jnp.float32) + bb2_ref[...]

    # --- residual + LayerNorm 2 ---
    y2 = z1 + f
    m2 = jnp.mean(y2, axis=-1, keepdims=True)
    std2 = jnp.sqrt(jnp.sum((y2 - m2) ** 2, axis=-1, keepdims=True) / (D - 1))
    o_ref[0] = (g2_ref[...] * (y2 - m2) / (std2 + EPS) + be2_ref[...]).astype(o_ref.dtype)


def _largest_divisor_leq(n, cap):
    for d in range(min(cap, n), 0, -1):
        if n % d == 0:
            return d
    return n


def _vmem_limit_bytes(T, tq, D, H, wbytes):
    """Generous VMEM budget (bytes) for this kernel's tiles, weights and scratch."""
    f32 = 4
    weights = (4 * D * D + 2 * D * H) * wbytes          # single-buffered matmul weights
    vecs = (6 * D + 2 * H) * f32                        # biases / gamma / beta
    x_in = 2 * T * D * f32                              # full-seq input (double buffered)
    out = 2 * tq * D * f32                              # output tile (double buffered)
    scratch = (2 * T + tq) * D * wbytes                 # K / V / context scratch
    interm = tq * T * f32 * 3 + tq * H * f32 + 6 * tq * D * f32
    need = weights + vecs + x_in + out + scratch + interm
    # TODO(synk): v7x has only 64 MiB physical VMEM; at model scale shrink tq / tile H.
    return int(min(max(2 * need, 32 * 1024 * 1024), 96 * 1024 * 1024))


def encoder_layer(x, params, n_heads, *, precise=False, tq=None):
    """x: [B, T, D] float32. params: dict of PyTorch-layout weights (see main).

    precise=True  -> f32 MXU inputs + exact reciprocals (matches the reference math).
    precise=False -> bf16 MXU inputs (f32 accumulation) + approx softmax reciprocal.
    """
    B, T, D = x.shape
    H = params["w1"].shape[0]
    assert D % n_heads == 0, "d_model must be divisible by n_heads"

    if tq is None:
        tq = 256                          # v7x-safe default (scores tile = tq*T*4 bytes)
    tq = min(tq, T)
    if T % tq != 0:
        tq = _largest_divisor_leq(T, tq)  # keep query tiling instead of falling back to T
    num_q = T // tq

    wdt = jnp.float32 if precise else jnp.bfloat16
    wbytes = 4 if precise else 2
    inv_scale = 1.0 / math.sqrt(D)        # reference scale uses d_key == d_model

    # Pre-transpose weights once at trace time to [D_in, D_out]; cast matmul weights
    # to the MXU compute dtype (halves weight DMA bytes in fast mode).
    wq_t = params["wq"].T.astype(wdt)
    wk_t = params["wk"].T.astype(wdt)
    wv_t = params["wv"].T.astype(wdt)
    wo_t = params["wo"].T.astype(wdt)
    w1_t = params["w1"].T.astype(wdt)     # [D, H]
    w2_t = params["w2"].T.astype(wdt)     # [H, D]

    kernel = functools.partial(_encoder_layer_kernel, n_heads, tq, inv_scale, not precise)

    def build(single_buffer_weights):
        def const_spec(shape):
            index_map = lambda b, qi: (0, 0)
            buffered = getattr(pl, "Buffered", None)
            if single_buffer_weights and buffered is not None:
                try:
                    return pl.BlockSpec(shape, index_map, pipeline_mode=buffered(1))
                except TypeError:           # jax version without pipeline_mode kwarg
                    pass
            return pl.BlockSpec(shape, index_map)

        return pl.pallas_call(
            kernel,
            out_shape=jax.ShapeDtypeStruct((B, T, D), jnp.float32),
            grid_spec=pltpu.PrefetchScalarGridSpec(
                num_scalar_prefetch=0,
                grid=(B, num_q),
                in_specs=[
                    pl.BlockSpec((1, T, D), lambda b, qi: (b, 0, 0)),  # x: full seq/batch
                    const_spec((D, D)),   # wq (pre-transposed)
                    const_spec((D, D)),   # wk
                    const_spec((D, D)),   # wv
                    const_spec((D, D)),   # wo
                    const_spec((1, D)),   # gamma1
                    const_spec((1, D)),   # beta1
                    const_spec((D, H)),   # w1 (pre-transposed)
                    const_spec((1, H)),   # b1
                    const_spec((H, D)),   # w2 (pre-transposed)
                    const_spec((1, D)),   # b2
                    const_spec((1, D)),   # gamma2
                    const_spec((1, D)),   # beta2
                ],
                out_specs=pl.BlockSpec((1, tq, D), lambda b, qi: (b, qi, 0)),
                scratch_shapes=[
                    pltpu.VMEM((T, D), wdt),    # K projection cache (per batch)
                    pltpu.VMEM((T, D), wdt),    # V projection cache (per batch)
                    pltpu.VMEM((tq, D), wdt),   # per-head context (concat of heads)
                ],
            ),
            compiler_params=pltpu.CompilerParams(
                dimension_semantics=("parallel", "arbitrary"),
                vmem_limit_bytes=_vmem_limit_bytes(T, tq, D, H, wbytes)),
        )

    args = (x, wq_t, wk_t, wv_t, wo_t,
            params["gamma1"], params["beta1"], w1_t, params["b1"],
            w2_t, params["b2"], params["gamma2"], params["beta2"])
    try:
        return build(True)(*args)
    except Exception:
        # Fallback for environments where Buffered(1) single-buffering is rejected.
        return build(False)(*args)


def encoder_layer_ref(x, p, n_heads):
    """Pure-JAX f32 reference mirroring the PyTorch forward."""
    B, T, D = x.shape
    hd = D // n_heads
    q = x @ p["wq"].T
    k = x @ p["wk"].T
    v = x @ p["wv"].T
    outs = []
    for h in range(n_heads):
        qh, kh, vh = (a[..., h * hd:(h + 1) * hd] for a in (q, k, v))
        s = jnp.einsum("btd,bsd->bts", qh, kh) / math.sqrt(D)
        pmat = jax.nn.softmax(s, axis=-1)
        outs.append(jnp.einsum("bts,bsd->btd", pmat, vh))
    attn = jnp.concatenate(outs, axis=-1) @ p["wo"].T

    def ln(y, g, b):
        m = jnp.mean(y, axis=-1, keepdims=True)
        std = jnp.sqrt(jnp.sum((y - m) ** 2, axis=-1, keepdims=True) / (D - 1))
        return g * (y - m) / (std + EPS) + b

    z1 = ln(x + attn, p["gamma1"], p["beta1"])
    f = jax.nn.relu(z1 @ p["w1"].T + p["b1"]) @ p["w2"].T + p["b2"]
    return ln(z1 + f, p["gamma2"], p["beta2"])


if __name__ == "__main__":
    def make_params(key, D, H):
        ks = jax.random.split(key, 8)
        init = lambda k, shape: (0.05 * jax.random.normal(k, shape)).astype(jnp.float32)
        return {
            "wq": init(ks[0], (D, D)),
            "wk": init(ks[1], (D, D)),
            "wv": init(ks[2], (D, D)),
            "wo": init(ks[3], (D, D)),
            "gamma1": jnp.ones((1, D), jnp.float32),
            "beta1": jnp.zeros((1, D), jnp.float32),
            "w1": init(ks[4], (H, D)),      # torch Linear layout [out, in]
            "b1": init(ks[5], (1, H)),
            "w2": init(ks[6], (D, H)),
            "b2": init(ks[7], (1, D)),
            "gamma2": jnp.ones((1, D), jnp.float32),
            "beta2": jnp.zeros((1, D), jnp.float32),
        }

    key = jax.random.PRNGKey(0)
    kp, kx1, kx2 = jax.random.split(key, 3)

    # Config 1: single query tile per batch (B=2, T=8, D=32, H=64, 4 heads).
    B, T, D, H, N_HEADS = 2, 8, 32, 64, 4
    params = make_params(kp, D, H)
    x = jax.random.normal(kx1, (B, T, D), jnp.float32)
    ref = jax.block_until_ready(encoder_layer_ref(x, params, N_HEADS))

    # Precise path (f32 MXU inputs, exact reciprocals): tight semantic check.
    out_precise = jax.block_until_ready(encoder_layer(x, params, N_HEADS, precise=True))
    np.testing.assert_allclose(np.asarray(out_precise), np.asarray(ref),
                               rtol=1e-4, atol=1e-4)

    # Fast path (bf16 MXU inputs, approx softmax reciprocal): looser numerical check.
    out_fast = jax.block_until_ready(encoder_layer(x, params, N_HEADS, precise=False))
    np.testing.assert_allclose(np.asarray(out_fast), np.asarray(ref),
                               rtol=5e-2, atol=5e-2)

    # Config 2: multiple query tiles per batch — exercises the cached-K/V scratch path.
    T2 = 16
    x2 = jax.random.normal(kx2, (B, T2, D), jnp.float32)
    ref2 = jax.block_until_ready(encoder_layer_ref(x2, params, N_HEADS))
    out2 = jax.block_until_ready(encoder_layer(x2, params, N_HEADS, precise=True, tq=8))
    np.testing.assert_allclose(np.asarray(out2), np.asarray(ref2),
                               rtol=1e-4, atol=1e-4)

    print("KERNEL_OK")
</pallas_src>

<mosaic_0001>
module attributes {stable_mosaic.version = 11 : i64} {
  func.func @_encoder_layer_kernel(%arg0: i32, %arg1: i32, %arg2: memref<1x8x32xf32, #tpu.memory_space<vmem>>, %arg3: memref<32x32xf32, #tpu.memory_space<vmem>>, %arg4: memref<32x32xf32, #tpu.memory_space<vmem>>, %arg5: memref<32x32xf32, #tpu.memory_space<vmem>>, %arg6: memref<32x32xf32, #tpu.memory_space<vmem>>, %arg7: memref<1x32xf32, #tpu.memory_space<vmem>>, %arg8: memref<1x32xf32, #tpu.memory_space<vmem>>, %arg9: memref<32x64xf32, #tpu.memory_space<vmem>>, %arg10: memref<1x64xf32, #tpu.memory_space<vmem>>, %arg11: memref<64x32xf32, #tpu.memory_space<vmem>>, %arg12: memref<1x32xf32, #tpu.memory_space<vmem>>, %arg13: memref<1x32xf32, #tpu.memory_space<vmem>>, %arg14: memref<1x32xf32, #tpu.memory_space<vmem>>, %arg15: memref<1x8x32xf32, #tpu.memory_space<vmem>>, %arg16: memref<8x32xf32, #tpu.memory_space<vmem>>, %arg17: memref<8x32xf32, #tpu.memory_space<vmem>>, %arg18: memref<8x32xf32, #tpu.memory_space<vmem>>) attributes {dimension_semantics = [#tpu.dimension_semantics<parallel>, #tpu.dimension_semantics<arbitrary>], iteration_bounds = array<i64: 2, 1>, scalar_prefetch = 0 : i64, scratch_operands = 3 : i64, tpu.core_type = #tpu.core_type<tc>, window_params = [{transform_indices = @transform_0, window_bounds = array<i64: 1, 8, 32>}, {pipeline_mode = #tpu.pipeline_mode<synchronous>, transform_indices = @transform_1, window_bounds = array<i64: 32, 32>}, {pipeline_mode = #tpu.pipeline_mode<synchronous>, transform_indices = @transform_2, window_bounds = array<i64: 32, 32>}, {pipeline_mode = #tpu.pipeline_mode<synchronous>, transform_indices = @transform_3, window_bounds = array<i64: 32, 32>}, {pipeline_mode = #tpu.pipeline_mode<synchronous>, transform_indices = @transform_4, window_bounds = array<i64: 32, 32>}, {pipeline_mode = #tpu.pipeline_mode<synchronous>, transform_indices = @transform_5, window_bounds = array<i64: 1, 32>}, {pipeline_mode = #tpu.pipeline_mode<synchronous>, transform_indices = @transform_6, window_bounds = array<i64: 1, 32>}, {pipeline_mode = #tpu.pipeline_mode<synchronous>, transform_indices = @transform_7, window_bounds = array<i64: 32, 64>}, {pipeline_mode = #tpu.pipeline_mode<synchronous>, transform_indices = @transform_8, window_bounds = array<i64: 1, 64>}, {pipeline_mode = #tpu.pipeline_mode<synchronous>, transform_indices = @transform_9, window_bounds = array<i64: 64, 32>}, {pipeline_mode = #tpu.pipeline_mode<synchronous>, transform_indices = @transform_10, window_bounds = array<i64: 1, 32>}, {pipeline_mode = #tpu.pipeline_mode<synchronous>, transform_indices = @transform_11, window_bounds = array<i64: 1, 32>}, {pipeline_mode = #tpu.pipeline_mode<synchronous>, transform_indices = @transform_12, window_bounds = array<i64: 1, 32>}, {transform_indices = @transform_13, window_bounds = array<i64: 1, 8, 32>}]} {
    %c0_i32 = arith.constant 0 : i32
    %0 = arith.cmpi eq, %arg1, %c0_i32 : i32
    %1 = arith.extui %0 : i1 to i32
    %c0_i32_0 = arith.constant 0 : i32
    %2 = arith.cmpi ne, %1, %c0_i32_0 : i32
    scf.if %2 {
      %c0_67 = arith.constant 0 : index
      %c0_68 = arith.constant 0 : index
      %c0_69 = arith.constant 0 : index
      %146 = vector.load %arg2[%c0_67, %c0_68, %c0_69] : memref<1x8x32xf32, #tpu.memory_space<vmem>>, vector<1x8x32xf32>
      %147 = vector.shape_cast %146 : vector<1x8x32xf32> to vector<8x32xf32>
      %c0_70 = arith.constant 0 : index
      %c0_71 = arith.constant 0 : index
      %148 = vector.load %arg4[%c0_70, %c0_71] : memref<32x32xf32, #tpu.memory_space<vmem>>, vector<32x32xf32>
      %cst_72 = arith.constant dense<0.000000e+00> : vector<8x32xf32>
      %149 = tpu.matmul %147, %148, %cst_72 {dimension_numbers = #tpu.dot_dimension_numbers<[1], [0], [0], [1], [0, 0, 1, 1], [], []>} : vector<8x32xf32>, vector<32x32xf32>, vector<8x32xf32> -> vector<8x32xf32>
      %c0_73 = arith.constant 0 : index
      %c0_74 = arith.constant 0 : index
      %150 = vector.load %arg16[%c0_73, %c0_74] : memref<8x32xf32, #tpu.memory_space<vmem>>, vector<8x32xf32>
      tpu.vector_store %arg16[%c0_73, %c0_74], %149 {strides = array<i32>} : memref<8x32xf32, #tpu.memory_space<vmem>>, vector<8x32xf32>,
      %c0_75 = arith.constant 0 : index
      %c0_76 = arith.constant 0 : index
      %151 = vector.load %arg5[%c0_75, %c0_76] : memref<32x32xf32, #tpu.memory_space<vmem>>, vector<32x32xf32>
      %cst_77 = arith.constant dense<0.000000e+00> : vector<8x32xf32>
      %152 = tpu.matmul %147, %151, %cst_77 {dimension_numbers = #tpu.dot_dimension_numbers<[1], [0], [0], [1], [0, 0, 1, 1], [], []>} : vector<8x32xf32>, vector<32x32xf32>, vector<8x32xf32> -> vector<8x32xf32>
      %c0_78 = arith.constant 0 : index
      %c0_79 = arith.constant 0 : index
      %153 = vector.load %arg17[%c0_78, %c0_79] : memref<8x32xf32, #tpu.memory_space<vmem>>, vector<8x32xf32>
      tpu.vector_store %arg17[%c0_78, %c0_79], %152 {strides = array<i32>} : memref<8x32xf32, #tpu.memory_space<vmem>>, vector<8x32xf32>,
    } else {
    }
    %c8_i32 = arith.constant 8 : i32
    %3 = arith.muli %arg1, %c8_i32 : i32
    %4 = tpu.assume_multiple %3, 8 : i32
    %c0 = arith.constant 0 : index
    %5 = arith.index_cast %4 : i32 to index
    %c0_1 = arith.constant 0 : index
    %6 = vector.load %arg2[%c0, %5, %c0_1] : memref<1x8x32xf32, #tpu.memory_space<vmem>>, vector<1x8x32xf32>
    %7 = vector.shape_cast %6 : vector<1x8x32xf32> to vector<8x32xf32>
    %c0_2 = arith.constant 0 : index
    %c0_3 = arith.constant 0 : index
    %8 = vector.load %arg3[%c0_2, %c0_3] : memref<32x32xf32, #tpu.memory_space<vmem>>, vector<32x32xf32>
    %cst = arith.constant dense<0.000000e+00> : vector<8x32xf32>
    %9 = tpu.matmul %7, %8, %cst {dimension_numbers = #tpu.dot_dimension_numbers<[1], [0], [0], [1], [0, 0, 1, 1], [], []>} : vector<8x32xf32>, vector<32x32xf32>, vector<8x32xf32> -> vector<8x32xf32>
    %cst_4 = arith.constant 0.176776692 : f32
    %10 = vector.broadcast %cst_4 : f32 to vector<8x32xf32>
    %11 = arith.mulf %9, %10 : vector<8x32xf32>
    %c0_5 = arith.constant 0 : index
    %c0_6 = arith.constant 0 : index
    %12 = vector.load %arg16[%c0_5, %c0_6] : memref<8x32xf32, #tpu.memory_space<vmem>>, vector<8x32xf32>
    %c0_7 = arith.constant 0 : index
    %c0_8 = arith.constant 0 : index
    %13 = vector.load %arg17[%c0_7, %c0_8] : memref<8x32xf32, #tpu.memory_space<vmem>>, vector<8x32xf32>
    %14 = vector.extract_strided_slice %11 {offsets = [0, 0], sizes = [8, 8], strides = [1, 1]} : vector<8x32xf32> to vector<8x8xf32>
    %15 = vector.extract_strided_slice %12 {offsets = [0, 0], sizes = [8, 8], strides = [1, 1]} : vector<8x32xf32> to vector<8x8xf32>
    %cst_9 = arith.constant dense<0.000000e+00> : vector<8x8xf32>
    %16 = tpu.matmul %14, %15, %cst_9 {dimension_numbers = #tpu.dot_dimension_numbers<[1], [1], [0], [0], [0, 0, 1, 0], [], []>} : vector<8x8xf32>, vector<8x8xf32>, vector<8x8xf32> -> vector<8x8xf32>
    %cst_10 = arith.constant dense<0xFF800000> : vector<8xf32>
    %17 = vector.multi_reduction <maximumf>, %16, %cst_10 [1] : vector<8x8xf32> to vector<8xf32>
    %18 = vector.shape_cast %17 : vector<8xf32> to vector<8x1xf32>
    %19 = vector.broadcast %18 : vector<8x1xf32> to vector<8x8xf32>
    %20 = arith.subf %16, %19 : vector<8x8xf32>
    %21 = math.exp %20 : vector<8x8xf32>
    %cst_11 = arith.constant dense<0.000000e+00> : vector<8xf32>
    %22 = vector.multi_reduction <add>, %21, %cst_11 [1] : vector<8x8xf32> to vector<8xf32>
    %23 = vector.shape_cast %22 : vector<8xf32> to vector<8x1xf32>
    %24 = tpu.reciprocal %23 : vector<8x1xf32> -> vector<8x1xf32>
    %25 = vector.broadcast %24 : vector<8x1xf32> to vector<8x8xf32>
    %26 = arith.mulf %21, %25 : vector<8x8xf32>
    %27 = vector.extract_strided_slice %13 {offsets = [0, 0], sizes = [8, 8], strides = [1, 1]} : vector<8x32xf32> to vector<8x8xf32>
    %cst_12 = arith.constant dense<0.000000e+00> : vector<8x8xf32>
    %28 = tpu.matmul %26, %27, %cst_12 {dimension_numbers = #tpu.dot_dimension_numbers<[1], [0], [0], [1], [0, 0, 1, 1], [], []>} : vector<8x8xf32>, vector<8x8xf32>, vector<8x8xf32> -> vector<8x8xf32>
    %c0_13 = arith.constant 0 : index
    %c0_14 = arith.constant 0 : index
    %29 = vector.load %arg18[%c0_13, %c0_14] : memref<8x32xf32, #tpu.memory_space<vmem>>, vector<8x8xf32>
    tpu.vector_store %arg18[%c0_13, %c0_14], %28 {strides = array<i32>} : memref<8x32xf32, #tpu.memory_space<vmem>>, vector<8x8xf32>,
    %30 = vector.extract_strided_slice %11 {offsets = [0, 8], sizes = [8, 8], strides = [1, 1]} : vector<8x32xf32> to vector<8x8xf32>
    %31 = vector.extract_strided_slice %12 {offsets = [0, 8], sizes = [8, 8], strides = [1, 1]} : vector<8x32xf32> to vector<8x8xf32>
    %cst_15 = arith.constant dense<0.000000e+00> : vector<8x8xf32>
    %32 = tpu.matmul %30, %31, %cst_15 {dimension_numbers = #tpu.dot_dimension_numbers<[1], [1], [0], [0], [0, 0, 1, 0], [], []>} : vector<8x8xf32>, vector<8x8xf32>, vector<8x8xf32> -> vector<8x8xf32>
    %cst_16 = arith.constant dense<0xFF800000> : vector<8xf32>
    %33 = vector.multi_reduction <maximumf>, %32, %cst_16 [1] : vector<8x8xf32> to vector<8xf32>
    %34 = vector.shape_cast %33 : vector<8xf32> to vector<8x1xf32>
    %35 = vector.broadcast %34 : vector<8x1xf32> to vector<8x8xf32>
    %36 = arith.subf %32, %35 : vector<8x8xf32>
    %37 = math.exp %36 : vector<8x8xf32>
    %cst_17 = arith.constant dense<0.000000e+00> : vector<8xf32>
    %38 = vector.multi_reduction <add>, %37, %cst_17 [1] : vector<8x8xf32> to vector<8xf32>
    %39 = vector.shape_cast %38 : vector<8xf32> to vector<8x1xf32>
    %40 = tpu.reciprocal %39 : vector<8x1xf32> -> vector<8x1xf32>
    %41 = vector.broadcast %40 : vector<8x1xf32> to vector<8x8xf32>
    %42 = arith.mulf %37, %41 : vector<8x8xf32>
    %43 = vector.extract_strided_slice %13 {offsets = [0, 8], sizes = [8, 8], strides = [1, 1]} : vector<8x32xf32> to vector<8x8xf32>
    %cst_18 = arith.constant dense<0.000000e+00> : vector<8x8xf32>
    %44 = tpu.matmul %42, %43, %cst_18 {dimension_numbers = #tpu.dot_dimension_numbers<[1], [0], [0], [1], [0, 0, 1, 1], [], []>} : vector<8x8xf32>, vector<8x8xf32>, vector<8x8xf32> -> vector<8x8xf32>
    %c0_19 = arith.constant 0 : index
    %c8 = arith.constant 8 : index
    %45 = vector.load %arg18[%c0_19, %c8] : memref<8x32xf32, #tpu.memory_space<vmem>>, vector<8x8xf32>
    tpu.vector_store %arg18[%c0_19, %c8], %44 {strides = array<i32>} : memref<8x32xf32, #tpu.memory_space<vmem>>, vector<8x8xf32>,
    %46 = vector.extract_strided_slice %11 {offsets = [0, 16], sizes = [8, 8], strides = [1, 1]} : vector<8x32xf32> to vector<8x8xf32>
    %47 = vector.extract_strided_slice %12 {offsets = [0, 16], sizes = [8, 8], strides = [1, 1]} : vector<8x32xf32> to vector<8x8xf32>
    %cst_20 = arith.constant dense<0.000000e+00> : vector<8x8xf32>
    %48 = tpu.matmul %46, %47, %cst_20 {dimension_numbers = #tpu.dot_dimension_numbers<[1], [1], [0], [0], [0, 0, 1, 0], [], []>} : vector<8x8xf32>, vector<8x8xf32>, vector<8x8xf32> -> vector<8x8xf32>
    %cst_21 = arith.constant dense<0xFF800000> : vector<8xf32>
    %49 = vector.multi_reduction <maximumf>, %48, %cst_21 [1] : vector<8x8xf32> to vector<8xf32>
    %50 = vector.shape_cast %49 : vector<8xf32> to vector<8x1xf32>
    %51 = vector.broadcast %50 : vector<8x1xf32> to vector<8x8xf32>
    %52 = arith.subf %48, %51 : vector<8x8xf32>
    %53 = math.exp %52 : vector<8x8xf32>
    %cst_22 = arith.constant dense<0.000000e+00> : vector<8xf32>
    %54 = vector.multi_reduction <add>, %53, %cst_22 [1] : vector<8x8xf32> to vector<8xf32>
    %55 = vector.shape_cast %54 : vector<8xf32> to vector<8x1xf32>
    %56 = tpu.reciprocal %55 : vector<8x1xf32> -> vector<8x1xf32>
    %57 = vector.broadcast %56 : vector<8x1xf32> to vector<8x8xf32>
    %58 = arith.mulf %53, %57 : vector<8x8xf32>
    %59 = vector.extract_strided_slice %13 {offsets = [0, 16], sizes = [8, 8], strides = [1, 1]} : vector<8x32xf32> to vector<8x8xf32>
    %cst_23 = arith.constant dense<0.000000e+00> : vector<8x8xf32>
    %60 = tpu.matmul %58, %59, %cst_23 {dimension_numbers = #tpu.dot_dimension_numbers<[1], [0], [0], [1], [0, 0, 1, 1], [], []>} : vector<8x8xf32>, vector<8x8xf32>, vector<8x8xf32> -> vector<8x8xf32>
    %c0_24 = arith.constant 0 : index
    %c16 = arith.constant 16 : index
    %61 = vector.load %arg18[%c0_24, %c16] : memref<8x32xf32, #tpu.memory_space<vmem>>, vector<8x8xf32>
    tpu.vector_store %arg18[%c0_24, %c16], %60 {strides = array<i32>} : memref<8x32xf32, #tpu.memory_space<vmem>>, vector<8x8xf32>,
    %62 = vector.extract_strided_slice %11 {offsets = [0, 24], sizes = [8, 8], strides = [1, 1]} : vector<8x32xf32> to vector<8x8xf32>
    %63 = vector.extract_strided_slice %12 {offsets = [0, 24], sizes = [8, 8], strides = [1, 1]} : vector<8x32xf32> to vector<8x8xf32>
    %cst_25 = arith.constant dense<0.000000e+00> : vector<8x8xf32>
    %64 = tpu.matmul %62, %63, %cst_25 {dimension_numbers = #tpu.dot_dimension_numbers<[1], [1], [0], [0], [0, 0, 1, 0], [], []>} : vector<8x8xf32>, vector<8x8xf32>, vector<8x8xf32> -> vector<8x8xf32>
    %cst_26 = arith.constant dense<0xFF800000> : vector<8xf32>
    %65 = vector.multi_reduction <maximumf>, %64, %cst_26 [1] : vector<8x8xf32> to vector<8xf32>
    %66 = vector.shape_cast %65 : vector<8xf32> to vector<8x1xf32>
    %67 = vector.broadcast %66 : vector<8x1xf32> to vector<8x8xf32>
    %68 = arith.subf %64, %67 : vector<8x8xf32>
    %69 = math.exp %68 : vector<8x8xf32>
    %cst_27 = arith.constant dense<0.000000e+00> : vector<8xf32>
    %70 = vector.multi_reduction <add>, %69, %cst_27 [1] : vector<8x8xf32> to vector<8xf32>
    %71 = vector.shape_cast %70 : vector<8xf32> to vector<8x1xf32>
    %72 = tpu.reciprocal %71 : vector<8x1xf32> -> vector<8x1xf32>
    %73 = vector.broadcast %72 : vector<8x1xf32> to vector<8x8xf32>
    %74 = arith.mulf %69, %73 : vector<8x8xf32>
    %75 = vector.extract_strided_slice %13 {offsets = [0, 24], sizes = [8, 8], strides = [1, 1]} : vector<8x32xf32> to vector<8x8xf32>
    %cst_28 = arith.constant dense<0.000000e+00> : vector<8x8xf32>
    %76 = tpu.matmul %74, %75, %cst_28 {dimension_numbers = #tpu.dot_dimension_numbers<[1], [0], [0], [1], [0, 0, 1, 1], [], []>} : vector<8x8xf32>, vector<8x8xf32>, vector<8x8xf32> -> vector<8x8xf32>
    %c0_29 = arith.constant 0 : index
    %c24 = arith.constant 24 : index
    %77 = vector.load %arg18[%c0_29, %c24] : memref<8x32xf32, #tpu.memory_space<vmem>>, vector<8x8xf32>
    tpu.vector_store %arg18[%c0_29, %c24], %76 {strides = array<i32>} : memref<8x32xf32, #tpu.memory_space<vmem>>, vector<8x8xf32>,
    %c0_30 = arith.constant 0 : index
    %c0_31 = arith.constant 0 : index
    %78 = vector.load %arg18[%c0_30, %c0_31] : memref<8x32xf32, #tpu.memory_space<vmem>>, vector<8x32xf32>
    %c0_32 = arith.constant 0 : index
    %c0_33 = arith.constant 0 : index
    %79 = vector.load %arg6[%c0_32, %c0_33] : memref<32x32xf32, #tpu.memory_space<vmem>>, vector<32x32xf32>
    %cst_34 = arith.constant dense<0.000000e+00> : vector<8x32xf32>
    %80 = tpu.matmul %78, %79, %cst_34 {dimension_numbers = #tpu.dot_dimension_numbers<[1], [0], [0], [1], [0, 0, 1, 1], [], []>} : vector<8x32xf32>, vector<32x32xf32>, vector<8x32xf32> -> vector<8x32xf32>
    %81 = arith.addf %7, %80 : vector<8x32xf32>
    %cst_35 = arith.constant dense<0.000000e+00> : vector<8xf32>
    %82 = vector.multi_reduction <add>, %81, %cst_35 [1] : vector<8x32xf32> to vector<8xf32>
    %83 = vector.shape_cast %82 : vector<8xf32> to vector<8x1xf32>
    %cst_36 = arith.constant 3.200000e+01 : f32
    %84 = vector.broadcast %cst_36 : f32 to vector<8x1xf32>
    %85 = arith.divf %83, %84 : vector<8x1xf32>
    %86 = vector.broadcast %85 : vector<8x1xf32> to vector<8x32xf32>
    %87 = arith.subf %81, %86 : vector<8x32xf32>
    %88 = arith.mulf %87, %87 : vector<8x32xf32>
    %cst_37 = arith.constant dense<0.000000e+00> : vector<8xf32>
    %89 = vector.multi_reduction <add>, %88, %cst_37 [1] : vector<8x32xf32> to vector<8xf32>
    %90 = vector.shape_cast %89 : vector<8xf32> to vector<8x1xf32>
    %cst_38 = arith.constant 3.100000e+01 : f32
    %91 = vector.broadcast %cst_38 : f32 to vector<8x1xf32>
    %92 = arith.divf %90, %91 : vector<8x1xf32>
    %93 = math.sqrt %92 : vector<8x1xf32>
    %c0_39 = arith.constant 0 : index
    %c0_40 = arith.constant 0 : index
    %94 = vector.load %arg7[%c0_39, %c0_40] : memref<1x32xf32, #tpu.memory_space<vmem>>, vector<1x32xf32>
    %95 = vector.broadcast %85 : vector<8x1xf32> to vector<8x32xf32>
    %96 = arith.subf %81, %95 : vector<8x32xf32>
    %97 = vector.broadcast %94 : vector<1x32xf32> to vector<8x32xf32>
    %98 = arith.mulf %97, %96 : vector<8x32xf32>
    %cst_41 = arith.constant 9.99999997E-7 : f32
    %99 = vector.broadcast %cst_41 : f32 to vector<8x1xf32>
    %100 = arith.addf %93, %99 : vector<8x1xf32>
    %101 = vector.broadcast %100 : vector<8x1xf32> to vector<8x32xf32>
    %102 = arith.divf %98, %101 : vector<8x32xf32>
    %c0_42 = arith.constant 0 : index
    %c0_43 = arith.constant 0 : index
    %103 = vector.load %arg8[%c0_42, %c0_43] : memref<1x32xf32, #tpu.memory_space<vmem>>, vector<1x32xf32>
    %104 = vector.broadcast %103 : vector<1x32xf32> to vector<8x32xf32>
    %105 = arith.addf %102, %104 : vector<8x32xf32>
    %c0_44 = arith.constant 0 : index
    %c0_45 = arith.constant 0 : index
    %106 = vector.load %arg9[%c0_44, %c0_45] : memref<32x64xf32, #tpu.memory_space<vmem>>, vector<32x64xf32>
    %cst_46 = arith.constant dense<0.000000e+00> : vector<8x64xf32>
    %107 = tpu.matmul %105, %106, %cst_46 {dimension_numbers = #tpu.dot_dimension_numbers<[1], [0], [0], [1], [0, 0, 1, 1], [], []>} : vector<8x32xf32>, vector<32x64xf32>, vector<8x64xf32> -> vector<8x64xf32>
    %c0_47 = arith.constant 0 : index
    %c0_48 = arith.constant 0 : index
    %108 = vector.load %arg10[%c0_47, %c0_48] : memref<1x64xf32, #tpu.memory_space<vmem>>, vector<1x64xf32>
    %109 = vector.broadcast %108 : vector<1x64xf32> to vector<8x64xf32>
    %110 = arith.addf %107, %109 : vector<8x64xf32>
    %cst_49 = arith.constant 0.000000e+00 : f32
    %111 = vector.broadcast %cst_49 : f32 to vector<8x64xf32>
    %112 = arith.maximumf %110, %111 : vector<8x64xf32>
    %c0_50 = arith.constant 0 : index
    %c0_51 = arith.constant 0 : index
    %113 = vector.load %arg11[%c0_50, %c0_51] : memref<64x32xf32, #tpu.memory_space<vmem>>, vector<64x32xf32>
    %cst_52 = arith.constant dense<0.000000e+00> : vector<8x32xf32>
    %114 = tpu.matmul %112, %113, %cst_52 {dimension_numbers = #tpu.dot_dimension_numbers<[1], [0], [0], [1], [0, 0, 1, 1], [], []>} : vector<8x64xf32>, vector<64x32xf32>, vector<8x32xf32> -> vector<8x32xf32>
    %c0_53 = arith.constant 0 : index
    %c0_54 = arith.constant 0 : index
    %115 = vector.load %arg12[%c0_53, %c0_54] : memref<1x32xf32, #tpu.memory_space<vmem>>, vector<1x32xf32>
    %116 = vector.broadcast %115 : vector<1x32xf32> to vector<8x32xf32>
    %117 = arith.addf %114, %116 : vector<8x32xf32>
    %118 = arith.addf %105, %117 : vector<8x32xf32>
    %cst_55 = arith.constant dense<0.000000e+00> : vector<8xf32>
    %119 = vector.multi_reduction <add>, %118, %cst_55 [1] : vector<8x32xf32> to vector<8xf32>
    %120 = vector.shape_cast %119 : vector<8xf32> to vector<8x1xf32>
    %cst_56 = arith.constant 3.200000e+01 : f32
    %121 = vector.broadcast %cst_56 : f32 to vector<8x1xf32>
    %122 = arith.divf %120, %121 : vector<8x1xf32>
    %123 = vector.broadcast %122 : vector<8x1xf32> to vector<8x32xf32>
    %124 = arith.subf %118, %123 : vector<8x32xf32>
    %125 = arith.mulf %124, %124 : vector<8x32xf32>
    %cst_57 = arith.constant dense<0.000000e+00> : vector<8xf32>
    %126 = vector.multi_reduction <add>, %125, %cst_57 [1] : vector<8x32xf32> to vector<8xf32>
    %127 = vector.shape_cast %126 : vector<8xf32> to vector<8x1xf32>
    %cst_58 = arith.constant 3.100000e+01 : f32
    %128 = vector.broadcast %cst_58 : f32 to vector<8x1xf32>
    %129 = arith.divf %127, %128 : vector<8x1xf32>
    %130 = math.sqrt %129 : vector<8x1xf32>
    %c0_59 = arith.constant 0 : index
    %c0_60 = arith.constant 0 : index
    %131 = vector.load %arg13[%c0_59, %c0_60] : memref<1x32xf32, #tpu.memory_space<vmem>>, vector<1x32xf32>
    %132 = vector.broadcast %122 : vector<8x1xf32> to vector<8x32xf32>
    %133 = arith.subf %118, %132 : vector<8x32xf32>
    %134 = vector.broadcast %131 : vector<1x32xf32> to vector<8x32xf32>
    %135 = arith.mulf %134, %133 : vector<8x32xf32>
    %cst_61 = arith.constant 9.99999997E-7 : f32
    %136 = vector.broadcast %cst_61 : f32 to vector<8x1xf32>
    %137 = arith.addf %130, %136 : vector<8x1xf32>
    %138 = vector.broadcast %137 : vector<8x1xf32> to vector<8x32xf32>
    %139 = arith.divf %135, %138 : vector<8x32xf32>
    %c0_62 = arith.constant 0 : index
    %c0_63 = arith.constant 0 : index
    %140 = vector.load %arg14[%c0_62, %c0_63] : memref<1x32xf32, #tpu.memory_space<vmem>>, vector<1x32xf32>
    %141 = vector.broadcast %140 : vector<1x32xf32> to vector<8x32xf32>
    %142 = arith.addf %139, %141 : vector<8x32xf32>
    %c0_64 = arith.constant 0 : index
    %c0_65 = arith.constant 0 : index
    %c0_66 = arith.constant 0 : index
    %143 = vector.load %arg15[%c0_64, %c0_65, %c0_66] : memref<1x8x32xf32, #tpu.memory_space<vmem>>, vector<1x8x32xf32>
    %144 = vector.shape_cast %143 : vector<1x8x32xf32> to vector<8x32xf32>
    %145 = vector.shape_cast %142 : vector<8x32xf32> to vector<1x8x32xf32>
    tpu.vector_store %arg15[%c0_64, %c0_65, %c0_66], %145 {strides = array<i32>} : memref<1x8x32xf32, #tpu.memory_space<vmem>>, vector<1x8x32xf32>,
    return
  }
  func.func @transform_0(%arg0: i32, %arg1: i32) -> (i32, i32, i32) {
    %c0_i32 = arith.constant 0 : i32
    %c0_i32_0 = arith.constant 0 : i32
    %c0_i32_1 = arith.constant 0 : i32
    return %arg0, %c0_i32, %c0_i32_0 : i32, i32, i32
  }
  func.func @transform_1(%arg0: i32, %arg1: i32) -> (i32, i32) {
    %c0_i32 = arith.constant 0 : i32
    %c0_i32_0 = arith.constant 0 : i32
    %c0_i32_1 = arith.constant 0 : i32
    return %c0_i32, %c0_i32_0 : i32, i32
  }
  func.func @transform_2(%arg0: i32, %arg1: i32) -> (i32, i32) {
    %c0_i32 = arith.constant 0 : i32
    %c0_i32_0 = arith.constant 0 : i32
    %c0_i32_1 = arith.constant 0 : i32
    return %c0_i32, %c0_i32_0 : i32, i32
  }
  func.func @transform_3(%arg0: i32, %arg1: i32) -> (i32, i32) {
    %c0_i32 = arith.constant 0 : i32
    %c0_i32_0 = arith.constant 0 : i32
    %c0_i32_1 = arith.constant 0 : i32
    return %c0_i32, %c0_i32_0 : i32, i32
  }
  func.func @transform_4(%arg0: i32, %arg1: i32) -> (i32, i32) {
    %c0_i32 = arith.constant 0 : i32
    %c0_i32_0 = arith.constant 0 : i32
    %c0_i32_1 = arith.constant 0 : i32
    return %c0_i32, %c0_i32_0 : i32, i32
  }
  func.func @transform_5(%arg0: i32, %arg1: i32) -> (i32, i32) {
    %c0_i32 = arith.constant 0 : i32
    %c0_i32_0 = arith.constant 0 : i32
    %c0_i32_1 = arith.constant 0 : i32
    return %c0_i32, %c0_i32_0 : i32, i32
  }
  func.func @transform_6(%arg0: i32, %arg1: i32) -> (i32, i32) {
    %c0_i32 = arith.constant 0 : i32
    %c0_i32_0 = arith.constant 0 : i32
    %c0_i32_1 = arith.constant 0 : i32
    return %c0_i32, %c0_i32_0 : i32, i32
  }
  func.func @transform_7(%arg0: i32, %arg1: i32) -> (i32, i32) {
    %c0_i32 = arith.constant 0 : i32
    %c0_i32_0 = arith.constant 0 : i32
    %c0_i32_1 = arith.constant 0 : i32
    return %c0_i32, %c0_i32_0 : i32, i32
  }
  func.func @transform_8(%arg0: i32, %arg1: i32) -> (i32, i32) {
    %c0_i32 = arith.constant 0 : i32
    %c0_i32_0 = arith.constant 0 : i32
    %c0_i32_1 = arith.constant 0 : i32
    return %c0_i32, %c0_i32_0 : i32, i32
  }
  func.func @transform_9(%arg0: i32, %arg1: i32) -> (i32, i32) {
    %c0_i32 = arith.constant 0 : i32
    %c0_i32_0 = arith.constant 0 : i32
    %c0_i32_1 = arith.constant 0 : i32
    return %c0_i32, %c0_i32_0 : i32, i32
  }
  func.func @transform_10(%arg0: i32, %arg1: i32) -> (i32, i32) {
    %c0_i32 = arith.constant 0 : i32
    %c0_i32_0 = arith.constant 0 : i32
    %c0_i32_1 = arith.constant 0 : i32
    return %c0_i32, %c0_i32_0 : i32, i32
  }
  func.func @transform_11(%arg0: i32, %arg1: i32) -> (i32, i32) {
    %c0_i32 = arith.constant 0 : i32
    %c0_i32_0 = arith.constant 0 : i32
    %c0_i32_1 = arith.constant 0 : i32
    return %c0_i32, %c0_i32_0 : i32, i32
  }
  func.func @transform_12(%arg0: i32, %arg1: i32) -> (i32, i32) {
    %c0_i32 = arith.constant 0 : i32
    %c0_i32_0 = arith.constant 0 : i32
    %c0_i32_1 = arith.constant 0 : i32
    return %c0_i32, %c0_i32_0 : i32, i32
  }
  func.func @transform_13(%arg0: i32, %arg1: i32) -> (i32, i32, i32) {
    %c0_i32 = arith.constant 0 : i32
    %c0_i32_0 = arith.constant 0 : i32
    return %arg0, %arg1, %c0_i32 : i32, i32, i32
  }
}

module attributes {stable_mosaic.version = 11 : i64} {
  func.func @_encoder_layer_kernel(%arg0: i32, %arg1: i32, %arg2: memref<1x8x32xf32, #tpu.memory_space<vmem>>, %arg3: memref<32x32xf32, #tpu.memory_space<vmem>>, %arg4: memref<32x32xf32, #tpu.memory_space<vmem>>, %arg5: memref<32x32xf32, #tpu.memory_space<vmem>>, %arg6: memref<32x32xf32, #tpu.memory_space<vmem>>, %arg7: memref<1x32xf32, #tpu.memory_space<vmem>>, %arg8: memref<1x32xf32, #tpu.memory_space<vmem>>, %arg9: memref<32x64xf32, #tpu.memory_space<vmem>>, %arg10: memref<1x64xf32, #tpu.memory_space<vmem>>, %arg11: memref<64x32xf32, #tpu.memory_space<vmem>>, %arg12: memref<1x32xf32, #tpu.memory_space<vmem>>, %arg13: memref<1x32xf32, #tpu.memory_space<vmem>>, %arg14: memref<1x32xf32, #tpu.memory_space<vmem>>, %arg15: memref<1x8x32xf32, #tpu.memory_space<vmem>>, %arg16: memref<8x32xf32, #tpu.memory_space<vmem>>, %arg17: memref<8x32xf32, #tpu.memory_space<vmem>>, %arg18: memref<8x32xf32, #tpu.memory_space<vmem>>) attributes {dimension_semantics = [#tpu.dimension_semantics<parallel>, #tpu.dimension_semantics<arbitrary>], iteration_bounds = array<i64: 2, 1>, scalar_prefetch = 0 : i64, scratch_operands = 3 : i64, tpu.core_type = #tpu.core_type<tc>, window_params = [{transform_indices = @transform_0, window_bounds = array<i64: 1, 8, 32>}, {pipeline_mode = #tpu.pipeline_mode<synchronous>, transform_indices = @transform_1, window_bounds = array<i64: 32, 32>}, {pipeline_mode = #tpu.pipeline_mode<synchronous>, transform_indices = @transform_2, window_bounds = array<i64: 32, 32>}, {pipeline_mode = #tpu.pipeline_mode<synchronous>, transform_indices = @transform_3, window_bounds = array<i64: 32, 32>}, {pipeline_mode = #tpu.pipeline_mode<synchronous>, transform_indices = @transform_4, window_bounds = array<i64: 32, 32>}, {pipeline_mode = #tpu.pipeline_mode<synchronous>, transform_indices = @transform_5, window_bounds = array<i64: 1, 32>}, {pipeline_mode = #tpu.pipeline_mode<synchronous>, transform_indices = @transform_6, window_bounds = array<i64: 1, 32>}, {pipeline_mode = #tpu.pipeline_mode<synchronous>, transform_indices = @transform_7, window_bounds = array<i64: 32, 64>}, {pipeline_mode = #tpu.pipeline_mode<synchronous>, transform_indices = @transform_8, window_bounds = array<i64: 1, 64>}, {pipeline_mode = #tpu.pipeline_mode<synchronous>, transform_indices = @transform_9, window_bounds = array<i64: 64, 32>}, {pipeline_mode = #tpu.pipeline_mode<synchronous>, transform_indices = @transform_10, window_bounds = array<i64: 1, 32>}, {pipeline_mode = #tpu.pipeline_mode<synchronous>, transform_indices = @transform_11, window_bounds = array<i64: 1, 32>}, {pipeline_mode = #tpu.pipeline_mode<synchronous>, transform_indices = @transform_12, window_bounds = array<i64: 1, 32>}, {transform_indices = @transform_13, window_bounds = array<i64: 1, 8, 32>}]} {
    %c0_i32 = arith.constant 0 : i32
    %0 = arith.cmpi eq, %arg1, %c0_i32 : i32
    %1 = arith.extui %0 : i1 to i32
    %c0_i32_0 = arith.constant 0 : i32
    %2 = arith.cmpi ne, %1, %c0_i32_0 : i32
    scf.if %2 {
      %c0_67 = arith.constant 0 : index
      %c0_68 = arith.constant 0 : index
      %c0_69 = arith.constant 0 : index
      %146 = vector.load %arg2[%c0_67, %c0_68, %c0_69] : memref<1x8x32xf32, #tpu.memory_space<vmem>>, vector<1x8x32xf32>
      %147 = vector.shape_cast %146 : vector<1x8x32xf32> to vector<8x32xf32>
      %c0_70 = arith.constant 0 : index
      %c0_71 = arith.constant 0 : index
      %148 = vector.load %arg4[%c0_70, %c0_71] : memref<32x32xf32, #tpu.memory_space<vmem>>, vector<32x32xf32>
      %cst_72 = arith.constant dense<0.000000e+00> : vector<8x32xf32>
      %149 = tpu.matmul %147, %148, %cst_72 {dimension_numbers = #tpu.dot_dimension_numbers<[1], [0], [0], [1], [0, 0, 1, 1], [], []>} : vector<8x32xf32>, vector<32x32xf32>, vector<8x32xf32> -> vector<8x32xf32>
      %c0_73 = arith.constant 0 : index
      %c0_74 = arith.constant 0 : index
      %150 = vector.load %arg16[%c0_73, %c0_74] : memref<8x32xf32, #tpu.memory_space<vmem>>, vector<8x32xf32>
      tpu.vector_store %arg16[%c0_73, %c0_74], %149 {strides = array<i32>} : memref<8x32xf32, #tpu.memory_space<vmem>>, vector<8x32xf32>,
      %c0_75 = arith.constant 0 : index
      %c0_76 = arith.constant 0 : index
      %151 = vector.load %arg5[%c0_75, %c0_76] : memref<32x32xf32, #tpu.memory_space<vmem>>, vector<32x32xf32>
      %cst_77 = arith.constant dense<0.000000e+00> : vector<8x32xf32>
      %152 = tpu.matmul %147, %151, %cst_77 {dimension_numbers = #tpu.dot_dimension_numbers<[1], [0], [0], [1], [0, 0, 1, 1], [], []>} : vector<8x32xf32>, vector<32x32xf32>, vector<8x32xf32> -> vector<8x32xf32>
      %c0_78 = arith.constant 0 : index
      %c0_79 = arith.constant 0 : index
      %153 = vector.load %arg17[%c0_78, %c0_79] : memref<8x32xf32, #tpu.memory_space<vmem>>, vector<8x32xf32>
      tpu.vector_store %arg17[%c0_78, %c0_79], %152 {strides = array<i32>} : memref<8x32xf32, #tpu.memory_space<vmem>>, vector<8x32xf32>,
    } else {
    }
    %c8_i32 = arith.constant 8 : i32
    %3 = arith.muli %arg1, %c8_i32 : i32
    %4 = tpu.assume_multiple %3, 8 : i32
    %c0 = arith.constant 0 : index
    %5 = arith.index_cast %4 : i32 to index
    %c0_1 = arith.constant 0 : index
    %6 = vector.load %arg2[%c0, %5, %c0_1] : memref<1x8x32xf32, #tpu.memory_space<vmem>>, vector<1x8x32xf32>
    %7 = vector.shape_cast %6 : vector<1x8x32xf32> to vector<8x32xf32>
    %c0_2 = arith.constant 0 : index
    %c0_3 = arith.constant 0 : index
    %8 = vector.load %arg3[%c0_2, %c0_3] : memref<32x32xf32, #tpu.memory_space<vmem>>, vector<32x32xf32>
    %cst = arith.constant dense<0.000000e+00> : vector<8x32xf32>
    %9 = tpu.matmul %7, %8, %cst {dimension_numbers = #tpu.dot_dimension_numbers<[1], [0], [0], [1], [0, 0, 1, 1], [], []>} : vector<8x32xf32>, vector<32x32xf32>, vector<8x32xf32> -> vector<8x32xf32>
    %cst_4 = arith.constant 0.176776692 : f32
    %10 = vector.broadcast %cst_4 : f32 to vector<8x32xf32>
    %11 = arith.mulf %9, %10 : vector<8x32xf32>
    %c0_5 = arith.constant 0 : index
    %c0_6 = arith.constant 0 : index
    %12 = vector.load %arg16[%c0_5, %c0_6] : memref<8x32xf32, #tpu.memory_space<vmem>>, vector<8x32xf32>
    %c0_7 = arith.constant 0 : index
    %c0_8 = arith.constant 0 : index
    %13 = vector.load %arg17[%c0_7, %c0_8] : memref<8x32xf32, #tpu.memory_space<vmem>>, vector<8x32xf32>
    %14 = vector.extract_strided_slice %11 {offsets = [0, 0], sizes = [8, 8], strides = [1, 1]} : vector<8x32xf32> to vector<8x8xf32>
    %15 = vector.extract_strided_slice %12 {offsets = [0, 0], sizes = [8, 8], strides = [1, 1]} : vector<8x32xf32> to vector<8x8xf32>
    %cst_9 = arith.constant dense<0.000000e+00> : vector<8x8xf32>
    %16 = tpu.matmul %14, %15, %cst_9 {dimension_numbers = #tpu.dot_dimension_numbers<[1], [1], [0], [0], [0, 0, 1, 0], [], []>} : vector<8x8xf32>, vector<8x8xf32>, vector<8x8xf32> -> vector<8x8xf32>
    %cst_10 = arith.constant dense<0xFF800000> : vector<8xf32>
    %17 = vector.multi_reduction <maximumf>, %16, %cst_10 [1] : vector<8x8xf32> to vector<8xf32>
    %18 = vector.shape_cast %17 : vector<8xf32> to vector<8x1xf32>
    %19 = vector.broadcast %18 : vector<8x1xf32> to vector<8x8xf32>
    %20 = arith.subf %16, %19 : vector<8x8xf32>
    %21 = math.exp %20 : vector<8x8xf32>
    %cst_11 = arith.constant dense<0.000000e+00> : vector<8xf32>
    %22 = vector.multi_reduction <add>, %21, %cst_11 [1] : vector<8x8xf32> to vector<8xf32>
    %23 = vector.shape_cast %22 : vector<8xf32> to vector<8x1xf32>
    %24 = tpu.reciprocal %23 : vector<8x1xf32> -> vector<8x1xf32>
    %25 = vector.broadcast %24 : vector<8x1xf32> to vector<8x8xf32>
    %26 = arith.mulf %21, %25 : vector<8x8xf32>
    %27 = vector.extract_strided_slice %13 {offsets = [0, 0], sizes = [8, 8], strides = [1, 1]} : vector<8x32xf32> to vector<8x8xf32>
    %cst_12 = arith.constant dense<0.000000e+00> : vector<8x8xf32>
    %28 = tpu.matmul %26, %27, %cst_12 {dimension_numbers = #tpu.dot_dimension_numbers<[1], [0], [0], [1], [0, 0, 1, 1], [], []>} : vector<8x8xf32>, vector<8x8xf32>, vector<8x8xf32> -> vector<8x8xf32>
    %c0_13 = arith.constant 0 : index
    %c0_14 = arith.constant 0 : index
    %29 = vector.load %arg18[%c0_13, %c0_14] : memref<8x32xf32, #tpu.memory_space<vmem>>, vector<8x8xf32>
    tpu.vector_store %arg18[%c0_13, %c0_14], %28 {strides = array<i32>} : memref<8x32xf32, #tpu.memory_space<vmem>>, vector<8x8xf32>,
    %30 = vector.extract_strided_slice %11 {offsets = [0, 8], sizes = [8, 8], strides = [1, 1]} : vector<8x32xf32> to vector<8x8xf32>
    %31 = vector.extract_strided_slice %12 {offsets = [0, 8], sizes = [8, 8], strides = [1, 1]} : vector<8x32xf32> to vector<8x8xf32>
    %cst_15 = arith.constant dense<0.000000e+00> : vector<8x8xf32>
    %32 = tpu.matmul %30, %31, %cst_15 {dimension_numbers = #tpu.dot_dimension_numbers<[1], [1], [0], [0], [0, 0, 1, 0], [], []>} : vector<8x8xf32>, vector<8x8xf32>, vector<8x8xf32> -> vector<8x8xf32>
    %cst_16 = arith.constant dense<0xFF800000> : vector<8xf32>
    %33 = vector.multi_reduction <maximumf>, %32, %cst_16 [1] : vector<8x8xf32> to vector<8xf32>
    %34 = vector.shape_cast %33 : vector<8xf32> to vector<8x1xf32>
    %35 = vector.broadcast %34 : vector<8x1xf32> to vector<8x8xf32>
    %36 = arith.subf %32, %35 : vector<8x8xf32>
    %37 = math.exp %36 : vector<8x8xf32>
    %cst_17 = arith.constant dense<0.000000e+00> : vector<8xf32>
    %38 = vector.multi_reduction <add>, %37, %cst_17 [1] : vector<8x8xf32> to vector<8xf32>
    %39 = vector.shape_cast %38 : vector<8xf32> to vector<8x1xf32>
    %40 = tpu.reciprocal %39 : vector<8x1xf32> -> vector<8x1xf32>
    %41 = vector.broadcast %40 : vector<8x1xf32> to vector<8x8xf32>
    %42 = arith.mulf %37, %41 : vector<8x8xf32>
    %43 = vector.extract_strided_slice %13 {offsets = [0, 8], sizes = [8, 8], strides = [1, 1]} : vector<8x32xf32> to vector<8x8xf32>
    %cst_18 = arith.constant dense<0.000000e+00> : vector<8x8xf32>
    %44 = tpu.matmul %42, %43, %cst_18 {dimension_numbers = #tpu.dot_dimension_numbers<[1], [0], [0], [1], [0, 0, 1, 1], [], []>} : vector<8x8xf32>, vector<8x8xf32>, vector<8x8xf32> -> vector<8x8xf32>
    %c0_19 = arith.constant 0 : index
    %c8 = arith.constant 8 : index
    %45 = vector.load %arg18[%c0_19, %c8] : memref<8x32xf32, #tpu.memory_space<vmem>>, vector<8x8xf32>
    tpu.vector_store %arg18[%c0_19, %c8], %44 {strides = array<i32>} : memref<8x32xf32, #tpu.memory_space<vmem>>, vector<8x8xf32>,
    %46 = vector.extract_strided_slice %11 {offsets = [0, 16], sizes = [8, 8], strides = [1, 1]} : vector<8x32xf32> to vector<8x8xf32>
    %47 = vector.extract_strided_slice %12 {offsets = [0, 16], sizes = [8, 8], strides = [1, 1]} : vector<8x32xf32> to vector<8x8xf32>
    %cst_20 = arith.constant dense<0.000000e+00> : vector<8x8xf32>
    %48 = tpu.matmul %46, %47, %cst_20 {dimension_numbers = #tpu.dot_dimension_numbers<[1], [1], [0], [0], [0, 0, 1, 0], [], []>} : vector<8x8xf32>, vector<8x8xf32>, vector<8x8xf32> -> vector<8x8xf32>
    %cst_21 = arith.constant dense<0xFF800000> : vector<8xf32>
    %49 = vector.multi_reduction <maximumf>, %48, %cst_21 [1] : vector<8x8xf32> to vector<8xf32>
    %50 = vector.shape_cast %49 : vector<8xf32> to vector<8x1xf32>
    %51 = vector.broadcast %50 : vector<8x1xf32> to vector<8x8xf32>
    %52 = arith.subf %48, %51 : vector<8x8xf32>
    %53 = math.exp %52 : vector<8x8xf32>
    %cst_22 = arith.constant dense<0.000000e+00> : vector<8xf32>
    %54 = vector.multi_reduction <add>, %53, %cst_22 [1] : vector<8x8xf32> to vector<8xf32>
    %55 = vector.shape_cast %54 : vector<8xf32> to vector<8x1xf32>
    %56 = tpu.reciprocal %55 : vector<8x1xf32> -> vector<8x1xf32>
    %57 = vector.broadcast %56 : vector<8x1xf32> to vector<8x8xf32>
    %58 = arith.mulf %53, %57 : vector<8x8xf32>
    %59 = vector.extract_strided_slice %13 {offsets = [0, 16], sizes = [8, 8], strides = [1, 1]} : vector<8x32xf32> to vector<8x8xf32>
    %cst_23 = arith.constant dense<0.000000e+00> : vector<8x8xf32>
    %60 = tpu.matmul %58, %59, %cst_23 {dimension_numbers = #tpu.dot_dimension_numbers<[1], [0], [0], [1], [0, 0, 1, 1], [], []>} : vector<8x8xf32>, vector<8x8xf32>, vector<8x8xf32> -> vector<8x8xf32>
    %c0_24 = arith.constant 0 : index
    %c16 = arith.constant 16 : index
    %61 = vector.load %arg18[%c0_24, %c16] : memref<8x32xf32, #tpu.memory_space<vmem>>, vector<8x8xf32>
    tpu.vector_store %arg18[%c0_24, %c16], %60 {strides = array<i32>} : memref<8x32xf32, #tpu.memory_space<vmem>>, vector<8x8xf32>,
    %62 = vector.extract_strided_slice %11 {offsets = [0, 24], sizes = [8, 8], strides = [1, 1]} : vector<8x32xf32> to vector<8x8xf32>
    %63 = vector.extract_strided_slice %12 {offsets = [0, 24], sizes = [8, 8], strides = [1, 1]} : vector<8x32xf32> to vector<8x8xf32>
    %cst_25 = arith.constant dense<0.000000e+00> : vector<8x8xf32>
    %64 = tpu.matmul %62, %63, %cst_25 {dimension_numbers = #tpu.dot_dimension_numbers<[1], [1], [0], [0], [0, 0, 1, 0], [], []>} : vector<8x8xf32>, vector<8x8xf32>, vector<8x8xf32> -> vector<8x8xf32>
    %cst_26 = arith.constant dense<0xFF800000> : vector<8xf32>
    %65 = vector.multi_reduction <maximumf>, %64, %cst_26 [1] : vector<8x8xf32> to vector<8xf32>
    %66 = vector.shape_cast %65 : vector<8xf32> to vector<8x1xf32>
    %67 = vector.broadcast %66 : vector<8x1xf32> to vector<8x8xf32>
    %68 = arith.subf %64, %67 : vector<8x8xf32>
    %69 = math.exp %68 : vector<8x8xf32>
    %cst_27 = arith.constant dense<0.000000e+00> : vector<8xf32>
    %70 = vector.multi_reduction <add>, %69, %cst_27 [1] : vector<8x8xf32> to vector<8xf32>
    %71 = vector.shape_cast %70 : vector<8xf32> to vector<8x1xf32>
    %72 = tpu.reciprocal %71 : vector<8x1xf32> -> vector<8x1xf32>
    %73 = vector.broadcast %72 : vector<8x1xf32> to vector<8x8xf32>
    %74 = arith.mulf %69, %73 : vector<8x8xf32>
    %75 = vector.extract_strided_slice %13 {offsets = [0, 24], sizes = [8, 8], strides = [1, 1]} : vector<8x32xf32> to vector<8x8xf32>
    %cst_28 = arith.constant dense<0.000000e+00> : vector<8x8xf32>
    %76 = tpu.matmul %74, %75, %cst_28 {dimension_numbers = #tpu.dot_dimension_numbers<[1], [0], [0], [1], [0, 0, 1, 1], [], []>} : vector<8x8xf32>, vector<8x8xf32>, vector<8x8xf32> -> vector<8x8xf32>
    %c0_29 = arith.constant 0 : index
    %c24 = arith.constant 24 : index
    %77 = vector.load %arg18[%c0_29, %c24] : memref<8x32xf32, #tpu.memory_space<vmem>>, vector<8x8xf32>
    tpu.vector_store %arg18[%c0_29, %c24], %76 {strides = array<i32>} : memref<8x32xf32, #tpu.memory_space<vmem>>, vector<8x8xf32>,
    %c0_30 = arith.constant 0 : index
    %c0_31 = arith.constant 0 : index
    %78 = vector.load %arg18[%c0_30, %c0_31] : memref<8x32xf32, #tpu.memory_space<vmem>>, vector<8x32xf32>
    %c0_32 = arith.constant 0 : index
    %c0_33 = arith.constant 0 : index
    %79 = vector.load %arg6[%c0_32, %c0_33] : memref<32x32xf32, #tpu.memory_space<vmem>>, vector<32x32xf32>
    %cst_34 = arith.constant dense<0.000000e+00> : vector<8x32xf32>
    %80 = tpu.matmul %78, %79, %cst_34 {dimension_numbers = #tpu.dot_dimension_numbers<[1], [0], [0], [1], [0, 0, 1, 1], [], []>} : vector<8x32xf32>, vector<32x32xf32>, vector<8x32xf32> -> vector<8x32xf32>
    %81 = arith.addf %7, %80 : vector<8x32xf32>
    %cst_35 = arith.constant dense<0.000000e+00> : vector<8xf32>
    %82 = vector.multi_reduction <add>, %81, %cst_35 [1] : vector<8x32xf32> to vector<8xf32>
    %83 = vector.shape_cast %82 : vector<8xf32> to vector<8x1xf32>
    %cst_36 = arith.constant 3.200000e+01 : f32
    %84 = vector.broadcast %cst_36 : f32 to vector<8x1xf32>
    %85 = arith.divf %83, %84 : vector<8x1xf32>
    %86 = vector.broadcast %85 : vector<8x1xf32> to vector<8x32xf32>
    %87 = arith.subf %81, %86 : vector<8x32xf32>
    %88 = arith.mulf %87, %87 : vector<8x32xf32>
    %cst_37 = arith.constant dense<0.000000e+00> : vector<8xf32>
    %89 = vector.multi_reduction <add>, %88, %cst_37 [1] : vector<8x32xf32> to vector<8xf32>
    %90 = vector.shape_cast %89 : vector<8xf32> to vector<8x1xf32>
    %cst_38 = arith.constant 3.100000e+01 : f32
    %91 = vector.broadcast %cst_38 : f32 to vector<8x1xf32>
    %92 = arith.divf %90, %91 : vector<8x1xf32>
    %93 = math.sqrt %92 : vector<8x1xf32>
    %c0_39 = arith.constant 0 : index
    %c0_40 = arith.constant 0 : index
    %94 = vector.load %arg7[%c0_39, %c0_40] : memref<1x32xf32, #tpu.memory_space<vmem>>, vector<1x32xf32>
    %95 = vector.broadcast %85 : vector<8x1xf32> to vector<8x32xf32>
    %96 = arith.subf %81, %95 : vector<8x32xf32>
    %97 = vector.broadcast %94 : vector<1x32xf32> to vector<8x32xf32>
    %98 = arith.mulf %97, %96 : vector<8x32xf32>
    %cst_41 = arith.constant 9.99999997E-7 : f32
    %99 = vector.broadcast %cst_41 : f32 to vector<8x1xf32>
    %100 = arith.addf %93, %99 : vector<8x1xf32>
    %101 = vector.broadcast %100 : vector<8x1xf32> to vector<8x32xf32>
    %102 = arith.divf %98, %101 : vector<8x32xf32>
    %c0_42 = arith.constant 0 : index
    %c0_43 = arith.constant 0 : index
    %103 = vector.load %arg8[%c0_42, %c0_43] : memref<1x32xf32, #tpu.memory_space<vmem>>, vector<1x32xf32>
    %104 = vector.broadcast %103 : vector<1x32xf32> to vector<8x32xf32>
    %105 = arith.addf %102, %104 : vector<8x32xf32>
    %c0_44 = arith.constant 0 : index
    %c0_45 = arith.constant 0 : index
    %106 = vector.load %arg9[%c0_44, %c0_45] : memref<32x64xf32, #tpu.memory_space<vmem>>, vector<32x64xf32>
    %cst_46 = arith.constant dense<0.000000e+00> : vector<8x64xf32>
    %107 = tpu.matmul %105, %106, %cst_46 {dimension_numbers = #tpu.dot_dimension_numbers<[1], [0], [0], [1], [0, 0, 1, 1], [], []>} : vector<8x32xf32>, vector<32x64xf32>, vector<8x64xf32> -> vector<8x64xf32>
    %c0_47 = arith.constant 0 : index
    %c0_48 = arith.constant 0 : index
    %108 = vector.load %arg10[%c0_47, %c0_48] : memref<1x64xf32, #tpu.memory_space<vmem>>, vector<1x64xf32>
    %109 = vector.broadcast %108 : vector<1x64xf32> to vector<8x64xf32>
    %110 = arith.addf %107, %109 : vector<8x64xf32>
    %cst_49 = arith.constant 0.000000e+00 : f32
    %111 = vector.broadcast %cst_49 : f32 to vector<8x64xf32>
    %112 = arith.maximumf %110, %111 : vector<8x64xf32>
    %c0_50 = arith.constant 0 : index
    %c0_51 = arith.constant 0 : index
    %113 = vector.load %arg11[%c0_50, %c0_51] : memref<64x32xf32, #tpu.memory_space<vmem>>, vector<64x32xf32>
    %cst_52 = arith.constant dense<0.000000e+00> : vector<8x32xf32>
    %114 = tpu.matmul %112, %113, %cst_52 {dimension_numbers = #tpu.dot_dimension_numbers<[1], [0], [0], [1], [0, 0, 1, 1], [], []>} : vector<8x64xf32>, vector<64x32xf32>, vector<8x32xf32> -> vector<8x32xf32>
    %c0_53 = arith.constant 0 : index
    %c0_54 = arith.constant 0 : index
    %115 = vector.load %arg12[%c0_53, %c0_54] : memref<1x32xf32, #tpu.memory_space<vmem>>, vector<1x32xf32>
    %116 = vector.broadcast %115 : vector<1x32xf32> to vector<8x32xf32>
    %117 = arith.addf %114, %116 : vector<8x32xf32>
    %118 = arith.addf %105, %117 : vector<8x32xf32>
    %cst_55 = arith.constant dense<0.000000e+00> : vector<8xf32>
    %119 = vector.multi_reduction <add>, %118, %cst_55 [1] : vector<8x32xf32> to vector<8xf32>
    %120 = vector.shape_cast %119 : vector<8xf32> to vector<8x1xf32>
    %cst_56 = arith.constant 3.200000e+01 : f32
    %121 = vector.broadcast %cst_56 : f32 to vector<8x1xf32>
    %122 = arith.divf %120, %121 : vector<8x1xf32>
    %123 = vector.broadcast %122 : vector<8x1xf32> to vector<8x32xf32>
    %124 = arith.subf %118, %123 : vector<8x32xf32>
    %125 = arith.mulf %124, %124 : vector<8x32xf32>
    %cst_57 = arith.constant dense<0.000000e+00> : vector<8xf32>
    %126 = vector.multi_reduction <add>, %125, %cst_57 [1] : vector<8x32xf32> to vector<8xf32>
    %127 = vector.shape_cast %126 : vector<8xf32> to vector<8x1xf32>
    %cst_58 = arith.constant 3.100000e+01 : f32
    %128 = vector.broadcast %cst_58 : f32 to vector<8x1xf32>
    %129 = arith.divf %127, %128 : vector<8x1xf32>
    %130 = math.sqrt %129 : vector<8x1xf32>
    %c0_59 = arith.constant 0 : index
    %c0_60 = arith.constant 0 : index
    %131 = vector.load %arg13[%c0_59, %c0_60] : memref<1x32xf32, #tpu.memory_space<vmem>>, vector<1x32xf32>
    %132 = vector.broadcast %122 : vector<8x1xf32> to vector<8x32xf32>
    %133 = arith.subf %118, %132 : vector<8x32xf32>
    %134 = vector.broadcast %131 : vector<1x32xf32> to vector<8x32xf32>
    %135 = arith.mulf %134, %133 : vector<8x32xf32>
    %cst_61 = arith.constant 9.99999997E-7 : f32
    %136 = vector.broadcast %cst_61 : f32 to vector<8x1xf32>
    %137 = arith.addf %130, %136 : vector<8x1xf32>
    %138 = vector.broadcast %137 : vector<8x1xf32> to vector<8x32xf32>
    %139 = arith.divf %135, %138 : vector<8x32xf32>
    %c0_62 = arith.constant 0 : index
    %c0_63 = arith.constant 0 : index
    %140 = vector.load %arg14[%c0_62, %c0_63] : memref<1x32xf32, #tpu.memory_space<vmem>>, vector<1x32xf32>
    %141 = vector.broadcast %140 : vector<1x32xf32> to vector<8x32xf32>
    %142 = arith.addf %139, %141 : vector<8x32xf32>
    %c0_64 = arith.constant 0 : index
    %c0_65 = arith.constant 0 : index
    %c0_66 = arith.constant 0 : index
    %143 = vector.load %arg15[%c0_64, %c0_65, %c0_66] : memref<1x8x32xf32, #tpu.memory_space<vmem>>, vector<1x8x32xf32>
    %144 = vector.shape_cast %143 : vector<1x8x32xf32> to vector<8x32xf32>
    %145 = vector.shape_cast %142 : vector<8x32xf32> to vector<1x8x32xf32>
    tpu.vector_store %arg15[%c0_64, %c0_65, %c0_66], %145 {strides = array<i32>} : memref<1x8x32xf32, #tpu.memory_space<vmem>>, vector<1x8x32xf32>,
    return
  }
  func.func @transform_0(%arg0: i32, %arg1: i32) -> (i32, i32, i32) {
    %c0_i32 = arith.constant 0 : i32
    %c0_i32_0 = arith.constant 0 : i32
    %c0_i32_1 = arith.constant 0 : i32
    return %arg0, %c0_i32, %c0_i32_0 : i32, i32, i32
  }
  func.func @transform_1(%arg0: i32, %arg1: i32) -> (i32, i32) {
    %c0_i32 = arith.constant 0 : i32
    %c0_i32_0 = arith.constant 0 : i32
    %c0_i32_1 = arith.constant 0 : i32
    return %c0_i32, %c0_i32_0 : i32, i32
  }
  func.func @transform_2(%arg0: i32, %arg1: i32) -> (i32, i32) {
    %c0_i32 = arith.constant 0 : i32
    %c0_i32_0 = arith.constant 0 : i32
    %c0_i32_1 = arith.constant 0 : i32
    return %c0_i32, %c0_i32_0 : i32, i32
  }
  func.func @transform_3(%arg0: i32, %arg1: i32) -> (i32, i32) {
    %c0_i32 = arith.constant 0 : i32
    %c0_i32_0 = arith.constant 0 : i32
    %c0_i32_1 = arith.constant 0 : i32
    return %c0_i32, %c0_i32_0 : i32, i32
  }
  func.func @transform_4(%arg0: i32, %arg1: i32) -> (i32, i32) {
    %c0_i32 = arith.constant 0 : i32
    %c0_i32_0 = arith.constant 0 : i32
    %c0_i32_1 = arith.constant 0 : i32
    return %c0_i32, %c0_i32_0 : i32, i32
  }
  func.func @transform_5(%arg0: i32, %arg1: i32) -> (i32, i32) {
    %c0_i32 = arith.constant 0 : i32
    %c0_i32_0 = arith.constant 0 : i32
    %c0_i32_1 = arith.constant 0 : i32
    return %c0_i32, %c0_i32_0 : i32, i32
  }
  func.func @transform_6(%arg0: i32, %arg1: i32) -> (i32, i32) {
    %c0_i32 = arith.constant 0 : i32
    %c0_i32_0 = arith.constant 0 : i32
    %c0_i32_1 = arith.constant 0 : i32
    return %c0_i32, %c0_i32_0 : i32, i32
  }
  func.func @transform_7(%arg0: i32, %arg1: i32) -> (i32, i32) {
    %c0_i32 = arith.constant 0 : i32
    %c0_i32_0 = arith.constant 0 : i32
    %c0_i32_1 = arith.constant 0 : i32
    return %c0_i32, %c0_i32_0 : i32, i32
  }
  func.func @transform_8(%arg0: i32, %arg1: i32) -> (i32, i32) {
    %c0_i32 = arith.constant 0 : i32
    %c0_i32_0 = arith.constant 0 : i32
    %c0_i32_1 = arith.constant 0 : i32
    return %c0_i32, %c0_i32_0 : i32, i32
  }
  func.func @transform_9(%arg0: i32, %arg1: i32) -> (i32, i32) {
    %c0_i32 = arith.constant 0 : i32
    %c0_i32_0 = arith.constant 0 : i32
    %c0_i32_1 = arith.constant 0 : i32
    return %c0_i32, %c0_i32_0 : i32, i32
  }
  func.func @transform_10(%arg0: i32, %arg1: i32) -> (i32, i32) {
    %c0_i32 = arith.constant 0 : i32
    %c0_i32_0 = arith.constant 0 : i32
    %c0_i32_1 = arith.constant 0 : i32
    return %c0_i32, %c0_i32_0 : i32, i32
  }
  func.func @transform_11(%arg0: i32, %arg1: i32) -> (i32, i32) {
    %c0_i32 = arith.constant 0 : i32
    %c0_i32_0 = arith.constant 0 : i32
    %c0_i32_1 = arith.constant 0 : i32
    return %c0_i32, %c0_i32_0 : i32, i32
  }
  func.func @transform_12(%arg0: i32, %arg1: i32) -> (i32, i32) {
    %c0_i32 = arith.constant 0 : i32
    %c0_i32_0 = arith.constant 0 : i32
    %c0_i32_1 = arith.constant 0 : i32
    return %c0_i32, %c0_i32_0 : i32, i32
  }
  func.func @transform_13(%arg0: i32, %arg1: i32) -> (i32, i32, i32) {
    %c0_i32 = arith.constant 0 : i32
    %c0_i32_0 = arith.constant 0 : i32
    return %arg0, %arg1, %c0_i32 : i32, i32, i32
  }
}

</mosaic_0001>

<llo_original>
// kernel: tpu_custom_call.1
$region0: #{tpu_custom_call.1}
  #allocation0 [shape = 'u32[]', space=smem, size = 0x4, offset = 0x4, fixed_abs, tag = 'smem constant byte address 0x4 - core index']
  #allocation1 [shape = 'u32[144,128]{1,0:T(1,128)}', space=vmem, size = 0x12000, scoped, tag = 'internal scratch']
  #allocation2 [shape = 'f32[8,32]{1,0:T(8,128)}', space=vmem, size = 0x1000, scoped, tag = 'scratch operand']
  #allocation3 [shape = 'f32[8,32]{1,0:T(8,128)}', space=vmem, size = 0x1000, scoped, tag = 'scratch operand']
  #allocation4 [shape = 'f32[8,32]{1,0:T(8,128)}', space=vmem, size = 0x1000, scoped, tag = 'scratch operand']
  %s0 = inlined_call_operand.hbm [shape: f32[2,8,32], index: 0, kind: input, shape index: {}]
  %s1 = inlined_call_operand.vmem [shape: f32[32,32], index: 1, kind: input, shape index: {}]
  %s2 = inlined_call_operand.vmem [shape: f32[32,32], index: 2, kind: input, shape index: {}]
  %s3 = inlined_call_operand.vmem [shape: f32[32,32], index: 3, kind: input, shape index: {}]
  %s4 = inlined_call_operand.hbm [shape: f32[32,32], index: 4, kind: input, shape index: {}]
  %s5 = inlined_call_operand.vmem [shape: f32[1,32], index: 5, kind: input, shape index: {}]
  %s6 = inlined_call_operand.vmem [shape: f32[1,32], index: 6, kind: input, shape index: {}]
  %s7 = inlined_call_operand.hbm [shape: f32[32,64], index: 7, kind: input, shape index: {}]
  %s8 = inlined_call_operand.vmem [shape: f32[1,64], index: 8, kind: input, shape index: {}]
  %s9 = inlined_call_operand.vmem [shape: f32[64,32], index: 9, kind: input, shape index: {}]
  %s10 = inlined_call_operand.vmem [shape: f32[1,32], index: 10, kind: input, shape index: {}]
  %s11 = inlined_call_operand.vmem [shape: f32[1,32], index: 11, kind: input, shape index: {}]
  %s12 = inlined_call_operand.vmem [shape: f32[1,32], index: 12, kind: input, shape index: {}]
  %s13 = inlined_call_operand.hbm [shape: f32[2,8,32], index: 13, kind: output, shape index: {}]
  %s14 = sld [smem:[#allocation0]]
  $region101: #{tpu_custom_call.1} parent=0
    _
  %s16 = ssub.s32 1, %s14
  %s17 = scalar_select 0, %s16, %s14
  $region1: #{tpu_custom_call.1} parent=0
    #allocation5 [shape = 'u8[8192]{0}', space=vmem, size = 0x2000, scoped, tag = 'input window, operand 0']
    #allocation6 [shape = 's32[2]{0}', space=sflag, size = 0x8, scoped, tag = 'scoped memory for tpu_custom_call.1']
    #allocation7 [shape = 's32[2]{0}', space=sflag, size = 0x8, scoped, tag = 'scoped memory for tpu_custom_call.1']
    #allocation8 [shape = 'u8[16384]{0}', space=vmem, size = 0x4000, scoped, tag = 'input window, operand 4, single buffered']
    #allocation9 [shape = 's32[1]{0}', space=sflag, size = 0x4, scoped, tag = 'scoped memory for tpu_custom_call.1']
    #allocation10 [shape = 'u8[16384]{0}', space=vmem, size = 0x4000, scoped, tag = 'input window, operand 7, single buffered']
    #allocation11 [shape = 'u8[8192]{0}', space=vmem, size = 0x2000, scoped, tag = 'output window, operand 0']
    %18 = vsyncpa [#allocation6], 0
    %s19 = scalar_lea.sflag [#allocation6], 1
    %20 = vsyncpa %s19, 0
    %21 = vsyncpa [#allocation9], 0
    %22 = vsyncpa [#allocation7], 0
    %s23 = scalar_lea.sflag [#allocation7], 1
    %24 = vsyncpa %s23, 0
    loop: start=0, step=1, limit=4
    $region2: #{tpu_custom_call.1} parent=1 // loop_pre_header
      _
    $region3: #{tpu_custom_call.1} parent=1 // loop_header
      %s26 = sphi 0, %s30
      %p27 = scmp.ge.s32.totalorder %s26, 4
      %s33 = sphi 0, %s45
      %s34 = sphi 0, %s41
      %s35 = sphi 0, %s33
      %s36 = sphi 0, %s34
      %s37 = sphi 0, %s35
      %s38 = sphi 0, %s36
      %s48 = sphi 0, %s50
      %s51 = sphi 0, %s48
      %s52 = sphi 0, %s51
      %s68 = sphi 0, %s52
      %s72 = sphi 0, %s72
      %s74 = sphi 0, %s72
      %s75 = sphi 0, %s74
      %s89 = sphi 0, %s75
      %s93 = sphi 0, %s93
      %s95 = sphi 0, %s93
      %s96 = sphi 0, %s95
      %s110 = sphi 0, %s96
      %s114 = sphi 0, %s114
      %s116 = sphi 0, %s114
      %s117 = sphi 0, %s116
      %s131 = sphi 0, %s117
      %s135 = sphi 0, %s135
      %s137 = sphi 0, %s135
      %s138 = sphi 0, %s137
      %s152 = sphi 0, %s138
      %s156 = sphi 0, %s156
      %s158 = sphi 0, %s156
      %s159 = sphi 0, %s158
      %s173 = sphi 0, %s159
      %s177 = sphi 0, %s177
      %s179 = sphi 0, %s177
      %s180 = sphi 0, %s179
      %s194 = sphi 0, %s180
      %s198 = sphi 0, %s198
      %s200 = sphi 0, %s198
      %s201 = sphi 0, %s200
      %s215 = sphi 0, %s201
      %s219 = sphi 0, %s219
      %s221 = sphi 0, %s219
      %s222 = sphi 0, %s221
      %s236 = sphi 0, %s222
      %s240 = sphi 0, %s240
      %s242 = sphi 0, %s240
      %s243 = sphi 0, %s242
      %s257 = sphi 0, %s243
      %s261 = sphi 0, %s261
      %s263 = sphi 0, %s261
      %s264 = sphi 0, %s263
      %s278 = sphi 0, %s264
      %s282 = sphi 0, %s282
      %s284 = sphi 0, %s282
      %s285 = sphi 0, %s284
      %s299 = sphi 0, %s285
      %s303 = sphi 0, %s303
      %s305 = sphi 0, %s303
      %s306 = sphi 0, %s305
      %s320 = sphi 0, %s306
      %s328 = sphi 0, %s330
      %s331 = sphi 0, %s328
      %s332 = sphi 0, %s331
      %s348 = sphi 0, %s332
    $region4: #{tpu_custom_call.1} parent=1 // loop_header_branch
      %29 = sbr.rel (%p27) target = $region8
    $region5: #{tpu_custom_call.1} parent=1 // loop_body
      %s31 = ssub.s32 %s26, 1
      %s32 = ssub.s32 %s26, 2
      %s39 = sadd.s32 1, %s34
      %p40 = scmp.ge.s32.totalorder %s39, 1
      %s41 = scalar_select %p40, 0, %s39
      %s42 = sadd.s32 1, %s33
      %s43 = scalar_select %p40, %s42, %s33
      %p44 = scmp.ge.s32.totalorder %s43, 2
      %s45 = scalar_select %p44, 0, %s43
      %s46 = ssub.s32 %s33, %s45
      %p47 = scmp.eq.s32.totalorder %s46, 0
      %s49 = sadd.s32 %s48, 1
      %s50 = scalar_select %p47, %s48, %s49
      %p53 = pneg %p47
      %p54 = scmp.eq.s32.totalorder %s26, 1
      %p55 = por %p53, %p54
      %p56 = scmp.ne.s32.totalorder %s48, %s51
      %p57 = scmp.eq.s32.totalorder %s26, 0
      %p58 = por %p56, %p57
      %p59 = scmp.ne.s32.totalorder %s48, %s51
      %p60 = scmp.eq.s32.totalorder %s31, 1
      %p61 = por %p59, %p60
      %p62 = scmp.ne.s32.totalorder %s51, %s52
      %p63 = scmp.eq.s32.totalorder %s31, 0
      %p64 = por %p62, %p63
      %p65 = scmp.ne.s32.totalorder %s51, %s52
      %p66 = scmp.eq.s32.totalorder %s32, 1
      %p67 = por %p65, %p66
      %p69 = scmp.ne.s32.totalorder %s52, %s68
      %p70 = scmp.eq.s32.totalorder %s32, 0
      %p71 = por %p69, %p70
      %s73 = sadd.s32 %s72, 1
      %p76 = scmp.eq.s32.totalorder %s26, 1
      %p77 = scmp.ne.s32.totalorder %s72, %s74
      %p78 = scmp.eq.s32.totalorder %s26, 0
      %p79 = por %p77, %p78
      %p80 = scmp.ne.s32.totalorder %s72, %s74
      %p81 = scmp.eq.s32.totalorder %s31, 1
      %p82 = por %p80, %p81
      %p83 = scmp.ne.s32.totalorder %s74, %s75
      %p84 = scmp.eq.s32.totalorder %s31, 0
      %p85 = por %p83, %p84
      %p86 = scmp.ne.s32.totalorder %s74, %s75
      %p87 = scmp.eq.s32.totalorder %s32, 1
      %p88 = por %p86, %p87
      %p90 = scmp.ne.s32.totalorder %s75, %s89
      %p91 = scmp.eq.s32.totalorder %s32, 0
      %p92 = por %p90, %p91
      %s94 = sadd.s32 %s93, 1
      %p97 = scmp.eq.s32.totalorder %s26, 1
      %p98 = scmp.ne.s32.totalorder %s93, %s95
      %p99 = scmp.eq.s32.totalorder %s26, 0
      %p100 = por %p98, %p99
      %p101 = scmp.ne.s32.totalorder %s93, %s95
      %p102 = scmp.eq.s32.totalorder %s31, 1
      %p103 = por %p101, %p102
      %p104 = scmp.ne.s32.totalorder %s95, %s96
      %p105 = scmp.eq.s32.totalorder %s31, 0
      %p106 = por %p104, %p105
      %p107 = scmp.ne.s32.totalorder %s95, %s96
      %p108 = scmp.eq.s32.totalorder %s32, 1
      %p109 = por %p107, %p108
      %p111 = scmp.ne.s32.totalorder %s96, %s110
      %p112 = scmp.eq.s32.totalorder %s32, 0
      %p113 = por %p111, %p112
      %s115 = sadd.s32 %s114, 1
      %p118 = scmp.eq.s32.totalorder %s26, 1
      %p119 = scmp.ne.s32.totalorder %s114, %s116
      %p120 = scmp.eq.s32.totalorder %s26, 0
      %p121 = por %p119, %p120
      %p122 = scmp.ne.s32.totalorder %s114, %s116
      %p123 = scmp.eq.s32.totalorder %s31, 1
      %p124 = por %p122, %p123
      %p125 = scmp.ne.s32.totalorder %s116, %s117
      %p126 = scmp.eq.s32.totalorder %s31, 0
      %p127 = por %p125, %p126
      %p128 = scmp.ne.s32.totalorder %s116, %s117
      %p129 = scmp.eq.s32.totalorder %s32, 1
      %p130 = por %p128, %p129
      %p132 = scmp.ne.s32.totalorder %s117, %s131
      %p133 = scmp.eq.s32.totalorder %s32, 0
      %p134 = por %p132, %p133
      %s136 = sadd.s32 %s135, 1
      %p139 = scmp.eq.s32.totalorder %s26, 1
      %p140 = scmp.ne.s32.totalorder %s135, %s137
      %p141 = scmp.eq.s32.totalorder %s26, 0
      %p142 = por %p140, %p141
      %p143 = scmp.ne.s32.totalorder %s135, %s137
      %p144 = scmp.eq.s32.totalorder %s31, 1
      %p145 = por %p143, %p144
      %p146 = scmp.ne.s32.totalorder %s137, %s138
      %p147 = scmp.eq.s32.totalorder %s31, 0
      %p148 = por %p146, %p147
      %p149 = scmp.ne.s32.totalorder %s137, %s138
      %p150 = scmp.eq.s32.totalorder %s32, 1
      %p151 = por %p149, %p150
      %p153 = scmp.ne.s32.totalorder %s138, %s152
      %p154 = scmp.eq.s32.totalorder %s32, 0
      %p155 = por %p153, %p154
      %s157 = sadd.s32 %s156, 1
      %p160 = scmp.eq.s32.totalorder %s26, 1
      %p161 = scmp.ne.s32.totalorder %s156, %s158
      %p162 = scmp.eq.s32.totalorder %s26, 0
      %p163 = por %p161, %p162
      %p164 = scmp.ne.s32.totalorder %s156, %s158
      %p165 = scmp.eq.s32.totalorder %s31, 1
      %p166 = por %p164, %p165
      %p167 = scmp.ne.s32.totalorder %s158, %s159
      %p168 = scmp.eq.s32.totalorder %s31, 0
      %p169 = por %p167, %p168
      %p170 = scmp.ne.s32.totalorder %s158, %s159
      %p171 = scmp.eq.s32.totalorder %s32, 1
      %p172 = por %p170, %p171
      %p174 = scmp.ne.s32.totalorder %s159, %s173
      %p175 = scmp.eq.s32.totalorder %s32, 0
      %p176 = por %p174, %p175
      %s178 = sadd.s32 %s177, 1
      %p181 = scmp.eq.s32.totalorder %s26, 1
      %p182 = scmp.ne.s32.totalorder %s177, %s179
      %p183 = scmp.eq.s32.totalorder %s26, 0
      %p184 = por %p182, %p183
      %p185 = scmp.ne.s32.totalorder %s177, %s179
      %p186 = scmp.eq.s32.totalorder %s31, 1
      %p187 = por %p185, %p186
      %p188 = scmp.ne.s32.totalorder %s179, %s180
      %p189 = scmp.eq.s32.totalorder %s31, 0
      %p190 = por %p188, %p189
      %p191 = scmp.ne.s32.totalorder %s179, %s180
      %p192 = scmp.eq.s32.totalorder %s32, 1
      %p193 = por %p191, %p192
      %p195 = scmp.ne.s32.totalorder %s180, %s194
      %p196 = scmp.eq.s32.totalorder %s32, 0
      %p197 = por %p195, %p196
      %s199 = sadd.s32 %s198, 1
      %p202 = scmp.eq.s32.totalorder %s26, 1
      %p203 = scmp.ne.s32.totalorder %s198, %s200
      %p204 = scmp.eq.s32.totalorder %s26, 0
      %p205 = por %p203, %p204
      %p206 = scmp.ne.s32.totalorder %s198, %s200
      %p207 = scmp.eq.s32.totalorder %s31, 1
      %p208 = por %p206, %p207
      %p209 = scmp.ne.s32.totalorder %s200, %s201
      %p210 = scmp.eq.s32.totalorder %s31, 0
      %p211 = por %p209, %p210
      %p212 = scmp.ne.s32.totalorder %s200, %s201
      %p213 = scmp.eq.s32.totalorder %s32, 1
      %p214 = por %p212, %p213
      %p216 = scmp.ne.s32.totalorder %s201, %s215
      %p217 = scmp.eq.s32.totalorder %s32, 0
      %p218 = por %p216, %p217
      %s220 = sadd.s32 %s219, 1
      %p223 = scmp.eq.s32.totalorder %s26, 1
      %p224 = scmp.ne.s32.totalorder %s219, %s221
      %p225 = scmp.eq.s32.totalorder %s26, 0
      %p226 = por %p224, %p225
      %p227 = scmp.ne.s32.totalorder %s219, %s221
      %p228 = scmp.eq.s32.totalorder %s31, 1
      %p229 = por %p227, %p228
      %p230 = scmp.ne.s32.totalorder %s221, %s222
      %p231 = scmp.eq.s32.totalorder %s31, 0
      %p232 = por %p230, %p231
      %p233 = scmp.ne.s32.totalorder %s221, %s222
      %p234 = scmp.eq.s32.totalorder %s32, 1
      %p235 = por %p233, %p234
      %p237 = scmp.ne.s32.totalorder %s222, %s236
      %p238 = scmp.eq.s32.totalorder %s32, 0
      %p239 = por %p237, %p238
      %s241 = sadd.s32 %s240, 1
      %p244 = scmp.eq.s32.totalorder %s26, 1
      %p245 = scmp.ne.s32.totalorder %s240, %s242
      %p246 = scmp.eq.s32.totalorder %s26, 0
      %p247 = por %p245, %p246
      %p248 = scmp.ne.s32.totalorder %s240, %s242
      %p249 = scmp.eq.s32.totalorder %s31, 1
      %p250 = por %p248, %p249
      %p251 = scmp.ne.s32.totalorder %s242, %s243
      %p252 = scmp.eq.s32.totalorder %s31, 0
      %p253 = por %p251, %p252
      %p254 = scmp.ne.s32.totalorder %s242, %s243
      %p255 = scmp.eq.s32.totalorder %s32, 1
      %p256 = por %p254, %p255
      %p258 = scmp.ne.s32.totalorder %s243, %s257
      %p259 = scmp.eq.s32.totalorder %s32, 0
      %p260 = por %p258, %p259
      %s262 = sadd.s32 %s261, 1
      %p265 = scmp.eq.s32.totalorder %s26, 1
      %p266 = scmp.ne.s32.totalorder %s261, %s263
      %p267 = scmp.eq.s32.totalorder %s26, 0
      %p268 = por %p266, %p267
      %p269 = scmp.ne.s32.totalorder %s261, %s263
      %p270 = scmp.eq.s32.totalorder %s31, 1
      %p271 = por %p269, %p270
      %p272 = scmp.ne.s32.totalorder %s263, %s264
      %p273 = scmp.eq.s32.totalorder %s31, 0
      %p274 = por %p272, %p273
      %p275 = scmp.ne.s32.totalorder %s263, %s264
      %p276 = scmp.eq.s32.totalorder %s32, 1
      %p277 = por %p275, %p276
      %p279 = scmp.ne.s32.totalorder %s264, %s278
      %p280 = scmp.eq.s32.totalorder %s32, 0
      %p281 = por %p279, %p280
      %s283 = sadd.s32 %s282, 1
      %p286 = scmp.eq.s32.totalorder %s26, 1
      %p287 = scmp.ne.s32.totalorder %s282, %s284
      %p288 = scmp.eq.s32.totalorder %s26, 0
      %p289 = por %p287, %p288
      %p290 = scmp.ne.s32.totalorder %s282, %s284
      %p291 = scmp.eq.s32.totalorder %s31, 1
      %p292 = por %p290, %p291
      %p293 = scmp.ne.s32.totalorder %s284, %s285
      %p294 = scmp.eq.s32.totalorder %s31, 0
      %p295 = por %p293, %p294
      %p296 = scmp.ne.s32.totalorder %s284, %s285
      %p297 = scmp.eq.s32.totalorder %s32, 1
      %p298 = por %p296, %p297
      %p300 = scmp.ne.s32.totalorder %s285, %s299
      %p301 = scmp.eq.s32.totalorder %s32, 0
      %p302 = por %p300, %p301
      %s304 = sadd.s32 %s303, 1
      %p307 = scmp.eq.s32.totalorder %s26, 1
      %p308 = scmp.ne.s32.totalorder %s303, %s305
      %p309 = scmp.eq.s32.totalorder %s26, 0
      %p310 = por %p308, %p309
      %p311 = scmp.ne.s32.totalorder %s303, %s305
      %p312 = scmp.eq.s32.totalorder %s31, 1
      %p313 = por %p311, %p312
      %p314 = scmp.ne.s32.totalorder %s305, %s306
      %p315 = scmp.eq.s32.totalorder %s31, 0
      %p316 = por %p314, %p315
      %p317 = scmp.ne.s32.totalorder %s305, %s306
      %p318 = scmp.eq.s32.totalorder %s32, 1
      %p319 = por %p317, %p318
      %p321 = scmp.ne.s32.totalorder %s306, %s320
      %p322 = scmp.eq.s32.totalorder %s32, 0
      %p323 = por %p321, %p322
      %s324 = ssub.s32 %s33, %s45
      %s325 = ssub.s32 %s34, %s41
      %s326 = sor.u32 %s324, %s325
      %p327 = scmp.eq.s32.totalorder %s326, 0
      %s329 = sadd.s32 %s328, 1
      %s330 = scalar_select %p327, %s328, %s329
      %p333 = pneg %p327
      %p334 = scmp.eq.s32.totalorder %s26, 1
      %p335 = por %p333, %p334
      %p336 = scmp.ne.s32.totalorder %s328, %s331
      %p337 = scmp.eq.s32.totalorder %s26, 0
      %p338 = por %p336, %p337
      %p339 = scmp.ne.s32.totalorder %s328, %s331
      %p340 = scmp.eq.s32.totalorder %s31, 1
      %p341 = por %p339, %p340
      %p342 = scmp.ne.s32.totalorder %s331, %s332
      %p343 = scmp.eq.s32.totalorder %s31, 0
      %p344 = por %p342, %p343
      %p345 = scmp.ne.s32.totalorder %s331, %s332
      %p346 = scmp.eq.s32.totalorder %s32, 1
      %p347 = por %p345, %p346
      %p349 = scmp.ne.s32.totalorder %s332, %s348
      %p350 = scmp.eq.s32.totalorder %s32, 0
      %p351 = por %p349, %p350
      %p352 = scmp.le.s32.totalorder 1, %s26
      %p353 = scmp.lt.s32.totalorder %s26, 3
      %p354 = pnand %p352, %p353
      %p355 = pneg %p354
      // Predicated region
      $region9: #{tpu_custom_call.1} parent=5 // pred_check
        _
      $region10: #{tpu_custom_call.1} parent=5 // pred_check_branch
        %357 = sbr.rel (%p354) target = $region12
      $region11: #{tpu_custom_call.1} parent=5 // pred_region
        %s358 = ssub.s32 %s26, 1
        // Predicated region
        $region13: #{tpu_custom_call.1} parent=11 // pred_check
          %p359 = pneg %p85
        $region14: #{tpu_custom_call.1} parent=11 // pred_check_branch
          %361 = sbr.rel (%p359) target = $region16
        $region15: #{tpu_custom_call.1} parent=11 // pred_region
          _
        $region16: #{tpu_custom_call.1} parent=11 // pred_fallthru
          _
        // Predicated region
        $region17: #{tpu_custom_call.1} parent=11 // pred_check
          %p362 = pneg %p106
        $region18: #{tpu_custom_call.1} parent=11 // pred_check_branch
          %364 = sbr.rel (%p362) target = $region20
        $region19: #{tpu_custom_call.1} parent=11 // pred_region
          _
        $region20: #{tpu_custom_call.1} parent=11 // pred_fallthru
          _
        // Predicated region
        $region21: #{tpu_custom_call.1} parent=11 // pred_check
          %p365 = pneg %p127
        $region22: #{tpu_custom_call.1} parent=11 // pred_check_branch
          %367 = sbr.rel (%p365) target = $region24
        $region23: #{tpu_custom_call.1} parent=11 // pred_region
          _
        $region24: #{tpu_custom_call.1} parent=11 // pred_fallthru
          _
        // Predicated region
        $region25: #{tpu_custom_call.1} parent=11 // pred_check
          %p368 = pneg %p148
        $region26: #{tpu_custom_call.1} parent=11 // pred_check_branch
          %370 = sbr.rel (%p368) target = $region28
        $region27: #{tpu_custom_call.1} parent=11 // pred_region
          %s372 = ssub.s32 512, 512
          %373 = vsyncadd [#allocation9], %s372
          %s374 = sshll.u32 [#allocation8], 4
          %s375 = int_to_ptr.vmem [resolvable:$true] %s374
          %380 = dma.hbm_to_vmem [thread:$0]  %s4, 512, %s375, [#allocation9], 128, 128, 8
        $region28: #{tpu_custom_call.1} parent=11 // pred_fallthru
          _
        // Predicated region
        $region29: #{tpu_custom_call.1} parent=11 // pred_check
          %p381 = pneg %p169
        $region30: #{tpu_custom_call.1} parent=11 // pred_check_branch
          %383 = sbr.rel (%p381) target = $region32
        $region31: #{tpu_custom_call.1} parent=11 // pred_region
          _
        $region32: #{tpu_custom_call.1} parent=11 // pred_fallthru
          _
        // Predicated region
        $region33: #{tpu_custom_call.1} parent=11 // pred_check
          %p384 = pneg %p190
        $region34: #{tpu_custom_call.1} parent=11 // pred_check_branch
          %386 = sbr.rel (%p384) target = $region36
        $region35: #{tpu_custom_call.1} parent=11 // pred_region
          _
        $region36: #{tpu_custom_call.1} parent=11 // pred_fallthru
          _
        // Predicated region
        $region37: #{tpu_custom_call.1} parent=11 // pred_check
          %p387 = pneg %p211
        $region38: #{tpu_custom_call.1} parent=11 // pred_check_branch
          %389 = sbr.rel (%p387) target = $region40
        $region39: #{tpu_custom_call.1} parent=11 // pred_region
          %s391 = ssub.s32 512, 512
          %392 = vsyncadd [#allocation9], %s391
          %s393 = sshll.u32 [#allocation10], 4
          %s394 = int_to_ptr.vmem [resolvable:$true] %s393
          %399 = dma.hbm_to_vmem [thread:$0]  %s7, 512, %s394, [#allocation9], 128, 128, 8
        $region40: #{tpu_custom_call.1} parent=11 // pred_fallthru
          _
        // Predicated region
        $region41: #{tpu_custom_call.1} parent=11 // pred_check
          %p400 = pneg %p232
        $region42: #{tpu_custom_call.1} parent=11 // pred_check_branch
          %402 = sbr.rel (%p400) target = $region44
        $region43: #{tpu_custom_call.1} parent=11 // pred_region
          _
        $region44: #{tpu_custom_call.1} parent=11 // pred_fallthru
          _
        // Predicated region
        $region45: #{tpu_custom_call.1} parent=11 // pred_check
          %p403 = pneg %p253
        $region46: #{tpu_custom_call.1} parent=11 // pred_check_branch
          %405 = sbr.rel (%p403) target = $region48
        $region47: #{tpu_custom_call.1} parent=11 // pred_region
          _
        $region48: #{tpu_custom_call.1} parent=11 // pred_fallthru
          _
        // Predicated region
        $region49: #{tpu_custom_call.1} parent=11 // pred_check
          %p406 = pneg %p274
        $region50: #{tpu_custom_call.1} parent=11 // pred_check_branch
          %408 = sbr.rel (%p406) target = $region52
        $region51: #{tpu_custom_call.1} parent=11 // pred_region
          _
        $region52: #{tpu_custom_call.1} parent=11 // pred_fallthru
          _
        // Predicated region
        $region53: #{tpu_custom_call.1} parent=11 // pred_check
          %p409 = pneg %p295
        $region54: #{tpu_custom_call.1} parent=11 // pred_check_branch
          %411 = sbr.rel (%p409) target = $region56
        $region55: #{tpu_custom_call.1} parent=11 // pred_region
          _
        $region56: #{tpu_custom_call.1} parent=11 // pred_fallthru
          _
        // Predicated region
        $region57: #{tpu_custom_call.1} parent=11 // pred_check
          %p412 = pneg %p316
        $region58: #{tpu_custom_call.1} parent=11 // pred_check_branch
          %414 = sbr.rel (%p412) target = $region60
        $region59: #{tpu_custom_call.1} parent=11 // pred_region
          _
        $region60: #{tpu_custom_call.1} parent=11 // pred_fallthru
          _
      $region12: #{tpu_custom_call.1} parent=5 // pred_fallthru
        _
      %p415 = scmp.lt.s32.totalorder %s26, 2
      // Predicated region
      $region61: #{tpu_custom_call.1} parent=5 // pred_check
        %p416 = pneg %p415
      $region62: #{tpu_custom_call.1} parent=5 // pred_check_branch
        %418 = sbr.rel (%p416) target = $region64
      $region63: #{tpu_custom_call.1} parent=5 // pred_region
        // Predicated region
        $region65: #{tpu_custom_call.1} parent=63 // pred_check
          %p419 = pneg %p58
        $region66: #{tpu_custom_call.1} parent=63 // pred_check_branch
          %421 = sbr.rel (%p419) target = $region68
        $region67: #{tpu_custom_call.1} parent=63 // pred_region
          %s422 = sand.u32 %s48, 1
          %s423 = scalar_lea.sflag [#allocation6], %s422
          %s424 = sand.u32 %s48, 1
          %s425 = smul.addr %s424, 8
          %s426 = scalar_lea.vmem [#allocation5], %s425
          %s428 = ssub.s32 128, 128
          %429 = vsyncadd %s423, %s428
          %s430 = smul.addr %s33, 128
          %s431 = scalar_lea.hbm %s0, %s430
          %s433 = sshll.u32 %s426, 4
          %s434 = int_to_ptr.vmem [resolvable:$true] %s433
          %436 = dma.hbm_to_vmem [thread:$0]  %s431, 128, %s434, %s423
        $region68: #{tpu_custom_call.1} parent=63 // pred_fallthru
          _
      $region64: #{tpu_custom_call.1} parent=5 // pred_fallthru
        _
      %p437 = scmp.le.s32.totalorder 1, %s26
      %p438 = scmp.lt.s32.totalorder %s26, 3
      %p439 = pnand %p437, %p438
      %p440 = pneg %p439
      // Predicated region
      $region69: #{tpu_custom_call.1} parent=5 // pred_check
        _
      $region70: #{tpu_custom_call.1} parent=5 // pred_check_branch
        %442 = sbr.rel (%p439) target = $region72
      $region71: #{tpu_custom_call.1} parent=5 // pred_region
        %s443 = ssub.s32 %s26, 1
        %s444 = sand.u32 %s51, 1
        %s445 = scalar_lea.sflag [#allocation6], %s444
        %s446 = sand.u32 %s51, 1
        %s447 = smul.addr %s446, 8
        %s448 = scalar_lea.vmem [#allocation5], %s447
        // Predicated region
        $region73: #{tpu_custom_call.1} parent=71 // pred_check
          %p449 = pneg %p64
        $region74: #{tpu_custom_call.1} parent=71 // pred_check_branch
          %451 = sbr.rel (%p449) target = $region76
        $region75: #{tpu_custom_call.1} parent=71 // pred_region
          %452 = dma.done %s445, 128
        $region76: #{tpu_custom_call.1} parent=71 // pred_fallthru
          _
        // Predicated region
        $region77: #{tpu_custom_call.1} parent=71 // pred_check
          %p453 = pneg %p148
        $region78: #{tpu_custom_call.1} parent=71 // pred_check_branch
          %455 = sbr.rel (%p453) target = $region80
        $region79: #{tpu_custom_call.1} parent=71 // pred_region
          %456 = dma.done [#allocation9], 512
        $region80: #{tpu_custom_call.1} parent=71 // pred_fallthru
          _
        // Predicated region
        $region81: #{tpu_custom_call.1} parent=71 // pred_check
          %p457 = pneg %p211
        $region82: #{tpu_custom_call.1} parent=71 // pred_check_branch
          %459 = sbr.rel (%p457) target = $region84
        $region83: #{tpu_custom_call.1} parent=71 // pred_region
          %460 = dma.done [#allocation9], 512
        $region84: #{tpu_custom_call.1} parent=71 // pred_fallthru
          _
        %s461 = sand.u32 %s51, 1
        %s462 = scalar_lea.sflag [#allocation6], %s461
        %s463 = sand.u32 %s51, 1
        %s464 = smul.addr %s463, 8
        %s465 = scalar_lea.vmem [#allocation5], %s464
        %p466 = pneg %p64
        %p467 = pneg %p61
        %p468 = pneg %p85
        %p469 = pneg %p82
        %p470 = pneg %p106
        %p471 = pneg %p103
        %p472 = pneg %p127
        %p473 = pneg %p124
        %p474 = pneg %p148
        %p475 = pneg %p145
        %p476 = pneg %p169
        %p477 = pneg %p166
        %p478 = pneg %p190
        %p479 = pneg %p187
        %p480 = pneg %p211
        %p481 = pneg %p208
        %p482 = pneg %p232
        %p483 = pneg %p229
        %p484 = pneg %p253
        %p485 = pneg %p250
        %p486 = pneg %p274
        %p487 = pneg %p271
        %p488 = pneg %p295
        %p489 = pneg %p292
        %p490 = pneg %p316
        %p491 = pneg %p313
        %p492 = pneg %p344
        %p493 = pneg %p341
        %s494 = sand.u32 %s331, 1
        %s495 = scalar_lea.sflag [#allocation7], %s494
        %s496 = sand.u32 %s331, 1
        %s497 = smul.addr %s496, 8
        %s498 = scalar_lea.vmem [#allocation11], %s497
        %p499 = scmp.eq.s32.totalorder %s36, 0
        // Predicated region
        $region85: #{tpu_custom_call.1} parent=71 // pred_check
          %p500 = pneg %p499
        $region86: #{tpu_custom_call.1} parent=71 // pred_check_branch
          %502 = sbr.rel (%p500) target = $region88
        $region87: #{tpu_custom_call.1} parent=71 // pred_region
          %v503 = vld [vmem:[%s448] sm:$0xff]
          %v504 = vld [vmem:[%s2] sm:$0xff]
          %v505 = vld [vmem:[%s2 + $0x8] sm:$0xff]
          %v506 = vld [vmem:[%s2 + $0x10] sm:$0xff]
          %v507 = vld [vmem:[%s2 + $0x18] sm:$0xff]
          %vm508 = vcmask 261120
          %v510 = vsel %vm508, %v503, 0
          %512 = vmatprep.subr.mxu0 0.0
          %513 = vmatpush1.msra.mxu0 0.0
          %514 = vmatprep.subr.mxu0 0.0
          %515 = vmatpush1.msra.mxu0 0.0
          %516 = vmatprep.subr.mxu0 0.0
          %517 = vmatpush1.msra.mxu0 0.0
          %518 = vmatprep.subr.mxu0 0.0
          %519 = vmatpush1.msra.mxu0 0.0
          %520 = vmatprep.subr.mxu0 0.0
          %521 = vmatpush1.msra.mxu0 0.0
          %522 = vmatprep.subr.mxu0 0.0
          %523 = vmatpush1.msra.mxu0 0.0
          %524 = vmatprep.subr.mxu0 0.0
          %525 = vmatpush1.msra.mxu0 0.0
          %526 = vmatprep.subr.mxu0 0.0
          %527 = vmatpush1.msra.mxu0 0.0
          %528 = vmatprep.subr.mxu0 0.0
          %529 = vmatpush1.msra.mxu0 0.0
          %530 = vmatprep.subr.mxu0 0.0
          %531 = vmatpush1.msra.mxu0 0.0
          %532 = vmatprep.subr.mxu0 0.0
          %533 = vmatpush1.msra.mxu0 0.0
          %534 = vmatprep.subr.mxu0 0.0
          %535 = vmatpush1.msra.mxu0 0.0
          %536 = vmatprep.subr.mxu0 0.0
          %537 = vmatpush1.msra.mxu0 %v507
          %538 = vmatprep.subr.mxu0 0.0
          %539 = vmatpush1.msra.mxu0 %v506
          %540 = vmatprep.subr.mxu0 0.0
          %541 = vmatpush1.msra.mxu0 %v505
          %542 = vmatprep.subr.mxu0 0.0
          %543 = vmatpush1.msra.mxu0 %v504
          %544 = vmatprep.subr.mxu0 0.0
          %545 = vmatpush2.msra.mxu0 0.0
          %546 = vmatprep.subr.mxu0 0.0
          %547 = vmatpush2.msra.mxu0 0.0
          %548 = vmatprep.subr.mxu0 0.0
          %549 = vmatpush2.msra.mxu0 0.0
          %550 = vmatprep.subr.mxu0 0.0
          %551 = vmatpush2.msra.mxu0 0.0
          %552 = vmatprep.subr.mxu0 0.0
          %553 = vmatpush2.msra.mxu0 0.0
          %554 = vmatprep.subr.mxu0 0.0
          %555 = vmatpush2.msra.mxu0 0.0
          %556 = vmatprep.subr.mxu0 0.0
          %557 = vmatpush2.msra.mxu0 0.0
          %558 = vmatprep.subr.mxu0 0.0
          %559 = vmatpush2.msra.mxu0 0.0
          %560 = vmatprep.subr.mxu0 0.0
          %561 = vmatpush2.msra.mxu0 0.0
          %562 = vmatprep.subr.mxu0 0.0
          %563 = vmatpush2.msra.mxu0 0.0
          %564 = vmatprep.subr.mxu0 0.0
          %565 = vmatpush2.msra.mxu0 0.0
          %566 = vmatprep.subr.mxu0 0.0
          %567 = vmatpush2.msra.mxu0 0.0
          %568 = vmatprep.subr.mxu0 0.0
          %569 = vmatpush2.msra.mxu0 0.0
          %570 = vmatprep.subr.mxu0 0.0
          %571 = vmatpush2.msra.mxu0 0.0
          %572 = vmatprep.subr.mxu0 0.0
          %573 = vmatpush2.msra.mxu0 0.0
          %574 = vmatprep.subr.mxu0 0.0
          %575 = vmatpush2.msra.mxu0 0.0
          %576 = vmatprep.mubr.f32.mxu0 0.0
          %577 = vmatmul.mubr.f32.gmra.mxu0 %v510
          %v578 = vpop.f32.mrf.mxu0
          %v579 = vadd.f32 0.0, %v578
          %v580 = vpop.f32.mrf.mxu0
          %581 = vdwg.mxu0
          %582 = vst.msk [vmem:[#allocation2] sm:$0xff] %vm508, %v579
          %v583 = vld [vmem:[%s3] sm:$0xff]
          %v584 = vld [vmem:[%s3 + $0x8] sm:$0xff]
          %v585 = vld [vmem:[%s3 + $0x10] sm:$0xff]
          %v586 = vld [vmem:[%s3 + $0x18] sm:$0xff]
          %587 = vmatprep.subr.mxu0 0.0
          %588 = vmatpush1.msra.mxu0 0.0
          %589 = vmatprep.subr.mxu0 0.0
          %590 = vmatpush1.msra.mxu0 0.0
          %591 = vmatprep.subr.mxu0 0.0
          %592 = vmatpush1.msra.mxu0 0.0
          %593 = vmatprep.subr.mxu0 0.0
          %594 = vmatpush1.msra.mxu0 0.0
          %595 = vmatprep.subr.mxu0 0.0
          %596 = vmatpush1.msra.mxu0 0.0
          %597 = vmatprep.subr.mxu0 0.0
          %598 = vmatpush1.msra.mxu0 0.0
          %599 = vmatprep.subr.mxu0 0.0
          %600 = vmatpush1.msra.mxu0 0.0
          %601 = vmatprep.subr.mxu0 0.0
          %602 = vmatpush1.msra.mxu0 0.0
          %603 = vmatprep.subr.mxu0 0.0
          %604 = vmatpush1.msra.mxu0 0.0
          %605 = vmatprep.subr.mxu0 0.0
          %606 = vmatpush1.msra.mxu0 0.0
          %607 = vmatprep.subr.mxu0 0.0
          %608 = vmatpush1.msra.mxu0 0.0
          %609 = vmatprep.subr.mxu0 0.0
          %610 = vmatpush1.msra.mxu0 0.0
          %611 = vmatprep.subr.mxu0 0.0
          %612 = vmatpush1.msra.mxu0 %v586
          %613 = vmatprep.subr.mxu0 0.0
          %614 = vmatpush1.msra.mxu0 %v585
          %615 = vmatprep.subr.mxu0 0.0
          %616 = vmatpush1.msra.mxu0 %v584
          %617 = vmatprep.subr.mxu0 0.0
          %618 = vmatpush1.msra.mxu0 %v583
          %619 = vmatprep.subr.mxu0 0.0
          %620 = vmatpush2.msra.mxu0 0.0
          %621 = vmatprep.subr.mxu0 0.0
          %622 = vmatpush2.msra.mxu0 0.0
          %623 = vmatprep.subr.mxu0 0.0
          %624 = vmatpush2.msra.mxu0 0.0
          %625 = vmatprep.subr.mxu0 0.0
          %626 = vmatpush2.msra.mxu0 0.0
          %627 = vmatprep.subr.mxu0 0.0
          %628 = vmatpush2.msra.mxu0 0.0
          %629 = vmatprep.subr.mxu0 0.0
          %630 = vmatpush2.msra.mxu0 0.0
          %631 = vmatprep.subr.mxu0 0.0
          %632 = vmatpush2.msra.mxu0 0.0
          %633 = vmatprep.subr.mxu0 0.0
          %634 = vmatpush2.msra.mxu0 0.0
          %635 = vmatprep.subr.mxu0 0.0
          %636 = vmatpush2.msra.mxu0 0.0
          %637 = vmatprep.subr.mxu0 0.0
          %638 = vmatpush2.msra.mxu0 0.0
          %639 = vmatprep.subr.mxu0 0.0
          %640 = vmatpush2.msra.mxu0 0.0
          %641 = vmatprep.subr.mxu0 0.0
          %642 = vmatpush2.msra.mxu0 0.0
          %643 = vmatprep.subr.mxu0 0.0
          %644 = vmatpush2.msra.mxu0 0.0
          %645 = vmatprep.subr.mxu0 0.0
          %646 = vmatpush2.msra.mxu0 0.0
          %647 = vmatprep.subr.mxu0 0.0
          %648 = vmatpush2.msra.mxu0 0.0
          %649 = vmatprep.subr.mxu0 0.0
          %650 = vmatpush2.msra.mxu0 0.0
          %651 = vmatprep.mubr.f32.mxu0 0.0
          %652 = vmatmul.mubr.f32.gmra.mxu0 %v510
          %v653 = vpop.f32.mrf.mxu0
          %v654 = vadd.f32 0.0, %v653
          %v655 = vpop.f32.mrf.mxu0
          %656 = vdwg.mxu0
          %657 = vst.msk [vmem:[#allocation3] sm:$0xff] %vm508, %v654
        $region88: #{tpu_custom_call.1} parent=71 // pred_fallthru
          _
        %s658 = smul.u32 %s36, 8
        %s659 = scalar_lea.vmem %s448, %s658 [#allocation5]
        %v660 = vld [vmem:[%s659] sm:$0xff]
        %v661 = vld [vmem:[%s1] sm:$0xff]
        %v662 = vld [vmem:[%s1 + $0x8] sm:$0xff]
        %v663 = vld [vmem:[%s1 + $0x10] sm:$0xff]
        %v664 = vld [vmem:[%s1 + $0x18] sm:$0xff]
        %vm665 = vcmask 261120
        %v667 = vsel %vm665, %v660, 0
        %669 = vmatprep.subr.mxu0 0.0
        %670 = vmatpush1.msra.mxu0 0.0
        %671 = vmatprep.subr.mxu0 0.0
        %672 = vmatpush1.msra.mxu0 0.0
        %673 = vmatprep.subr.mxu0 0.0
        %674 = vmatpush1.msra.mxu0 0.0
        %675 = vmatprep.subr.mxu0 0.0
        %676 = vmatpush1.msra.mxu0 0.0
        %677 = vmatprep.subr.mxu0 0.0
        %678 = vmatpush1.msra.mxu0 0.0
        %679 = vmatprep.subr.mxu0 0.0
        %680 = vmatpush1.msra.mxu0 0.0
        %681 = vmatprep.subr.mxu0 0.0
        %682 = vmatpush1.msra.mxu0 0.0
        %683 = vmatprep.subr.mxu0 0.0
        %684 = vmatpush1.msra.mxu0 0.0
        %685 = vmatprep.subr.mxu0 0.0
        %686 = vmatpush1.msra.mxu0 0.0
        %687 = vmatprep.subr.mxu0 0.0
        %688 = vmatpush1.msra.mxu0 0.0
        %689 = vmatprep.subr.mxu0 0.0
        %690 = vmatpush1.msra.mxu0 0.0
        %691 = vmatprep.subr.mxu0 0.0
        %692 = vmatpush1.msra.mxu0 0.0
        %693 = vmatprep.subr.mxu0 0.0
        %694 = vmatpush1.msra.mxu0 %v664
        %695 = vmatprep.subr.mxu0 0.0
        %696 = vmatpush1.msra.mxu0 %v663
        %697 = vmatprep.subr.mxu0 0.0
        %698 = vmatpush1.msra.mxu0 %v662
        %699 = vmatprep.subr.mxu0 0.0
        %700 = vmatpush1.msra.mxu0 %v661
        %701 = vmatprep.subr.mxu0 0.0
        %702 = vmatpush2.msra.mxu0 0.0
        %703 = vmatprep.subr.mxu0 0.0
        %704 = vmatpush2.msra.mxu0 0.0
        %705 = vmatprep.subr.mxu0 0.0
        %706 = vmatpush2.msra.mxu0 0.0
        %707 = vmatprep.subr.mxu0 0.0
        %708 = vmatpush2.msra.mxu0 0.0
        %709 = vmatprep.subr.mxu0 0.0
        %710 = vmatpush2.msra.mxu0 0.0
        %711 = vmatprep.subr.mxu0 0.0
        %712 = vmatpush2.msra.mxu0 0.0
        %713 = vmatprep.subr.mxu0 0.0
        %714 = vmatpush2.msra.mxu0 0.0
        %715 = vmatprep.subr.mxu0 0.0
        %716 = vmatpush2.msra.mxu0 0.0
        %717 = vmatprep.subr.mxu0 0.0
        %718 = vmatpush2.msra.mxu0 0.0
        %719 = vmatprep.subr.mxu0 0.0
        %720 = vmatpush2.msra.mxu0 0.0
        %721 = vmatprep.subr.mxu0 0.0
        %722 = vmatpush2.msra.mxu0 0.0
        %723 = vmatprep.subr.mxu0 0.0
        %724 = vmatpush2.msra.mxu0 0.0
        %725 = vmatprep.subr.mxu0 0.0
        %726 = vmatpush2.msra.mxu0 0.0
        %727 = vmatprep.subr.mxu0 0.0
        %728 = vmatpush2.msra.mxu0 0.0
        %729 = vmatprep.subr.mxu0 0.0
        %730 = vmatpush2.msra.mxu0 0.0
        %731 = vmatprep.subr.mxu0 0.0
        %732 = vmatpush2.msra.mxu0 0.0
        %733 = vmatprep.mubr.f32.mxu0 0.0
        %734 = vmatmul.mubr.f32.gmra.mxu0 %v667
        %v735 = vpop.f32.mrf.mxu0
        %v736 = vadd.f32 0.0, %v735
        %v737 = vpop.f32.mrf.mxu0
        %738 = vdwg.mxu0
        %v739 = vmul.f32 %v736, 0.17677669
        %v740 = vld [vmem:[#allocation2] sm:$0xff]
        %v741 = vld [vmem:[#allocation3] sm:$0xff]
        %vm742 = vcmask 64512
        %v744 = vsel %vm742, %v739, 0
        %v747 = vsel %vm742, %v740, 0
        %749 = vmatprep.subr.mxu0 0.0
        %750 = vmatpush1.xpose.msra.mxu0 0.0
        %751 = vmatprep.subr.mxu0 0.0
        %752 = vmatpush1.xpose.msra.mxu0 0.0
        %753 = vmatprep.subr.mxu0 0.0
        %754 = vmatpush1.xpose.msra.mxu0 0.0
        %755 = vmatprep.subr.mxu0 0.0
        %756 = vmatpush1.xpose.msra.mxu0 0.0
        %757 = vmatprep.subr.mxu0 0.0
        %758 = vmatpush1.xpose.msra.mxu0 0.0
        %759 = vmatprep.subr.mxu0 0.0
        %760 = vmatpush1.xpose.msra.mxu0 0.0
        %761 = vmatprep.subr.mxu0 0.0
        %762 = vmatpush1.xpose.msra.mxu0 0.0
        %763 = vmatprep.subr.mxu0 0.0
        %764 = vmatpush1.xpose.msra.mxu0 0.0
        %765 = vmatprep.subr.mxu0 0.0
        %766 = vmatpush1.xpose.msra.mxu0 0.0
        %767 = vmatprep.subr.mxu0 0.0
        %768 = vmatpush1.xpose.msra.mxu0 0.0
        %769 = vmatprep.subr.mxu0 0.0
        %770 = vmatpush1.xpose.msra.mxu0 0.0
        %771 = vmatprep.subr.mxu0 0.0
        %772 = vmatpush1.xpose.msra.mxu0 0.0
        %773 = vmatprep.subr.mxu0 0.0
        %774 = vmatpush1.xpose.msra.mxu0 0.0
        %775 = vmatprep.subr.mxu0 0.0
        %776 = vmatpush1.xpose.msra.mxu0 0.0
        %777 = vmatprep.subr.mxu0 0.0
        %778 = vmatpush1.xpose.msra.mxu0 0.0
        %779 = vmatprep.subr.mxu0 0.0
        %780 = vmatpush1.xpose.msra.mxu0 %v747
        %781 = vmatprep.subr.mxu0 0.0
        %782 = vmatpush2.xpose.msra.mxu0 0.0
        %783 = vmatprep.subr.mxu0 0.0
        %784 = vmatpush2.xpose.msra.mxu0 0.0
        %785 = vmatprep.subr.mxu0 0.0
        %786 = vmatpush2.xpose.msra.mxu0 0.0
        %787 = vmatprep.subr.mxu0 0.0
        %788 = vmatpush2.xpose.msra.mxu0 0.0
        %789 = vmatprep.subr.mxu0 0.0
        %790 = vmatpush2.xpose.msra.mxu0 0.0
        %791 = vmatprep.subr.mxu0 0.0
        %792 = vmatpush2.xpose.msra.mxu0 0.0
        %793 = vmatprep.subr.mxu0 0.0
        %794 = vmatpush2.xpose.msra.mxu0 0.0
        %795 = vmatprep.subr.mxu0 0.0
        %796 = vmatpush2.xpose.msra.mxu0 0.0
        %797 = vmatprep.subr.mxu0 0.0
        %798 = vmatpush2.xpose.msra.mxu0 0.0
        %799 = vmatprep.subr.mxu0 0.0
        %800 = vmatpush2.xpose.msra.mxu0 0.0
        %801 = vmatprep.subr.mxu0 0.0
        %802 = vmatpush2.xpose.msra.mxu0 0.0
        %803 = vmatprep.subr.mxu0 0.0
        %804 = vmatpush2.xpose.msra.mxu0 0.0
        %805 = vmatprep.subr.mxu0 0.0
        %806 = vmatpush2.xpose.msra.mxu0 0.0
        %807 = vmatprep.subr.mxu0 0.0
        %808 = vmatpush2.xpose.msra.mxu0 0.0
        %809 = vmatprep.subr.mxu0 0.0
        %810 = vmatpush2.xpose.msra.mxu0 0.0
        %811 = vmatprep.subr.mxu0 0.0
        %812 = vmatpush2.xpose.msra.mxu0 0.0
        %813 = vmatprep.mubr.f32.mxu0 0.0
        %814 = vmatmul.mubr.f32.gmra.mxu0 %v744
        %v815 = vpop.f32.mrf.mxu0
        %v816 = vadd.f32 0.0, %v815
        %v817 = vpop.f32.mrf.mxu0
        %818 = vdwg.mxu0
        %v819 = vsel %vm742, %v816, -inf
        %820 = vmax.xlane.f32.xlu0 %v819
        %v821 = vpop.xlane.xlu0 %820
        %v822 = vsub.f32 %v816, %v821
        %v823 = vmul.f32 %v822, 1.442695
        %v824 = vpow.pop %v823
        %v825 = vsel %vm742, %v824, 0.0
        %826 = vadd.xlane.f32.xlu0 %v825
        %v827 = vpop.xlane.xlu0 %826
        %v828 = vrcp.pop %v827
        %v829 = vmul.f32 %v824, %v828
        %v831 = vsel %vm742, %v829, 0
        %833 = vmatprep.subr.mxu0 0.0
        %834 = vmatpush1.msra.mxu0 0.0
        %835 = vmatprep.subr.mxu0 0.0
        %836 = vmatpush1.msra.mxu0 0.0
        %837 = vmatprep.subr.mxu0 0.0
        %838 = vmatpush1.msra.mxu0 0.0
        %839 = vmatprep.subr.mxu0 0.0
        %840 = vmatpush1.msra.mxu0 0.0
        %841 = vmatprep.subr.mxu0 0.0
        %842 = vmatpush1.msra.mxu0 0.0
        %843 = vmatprep.subr.mxu0 0.0
        %844 = vmatpush1.msra.mxu0 0.0
        %845 = vmatprep.subr.mxu0 0.0
        %846 = vmatpush1.msra.mxu0 0.0
        %847 = vmatprep.subr.mxu0 0.0
        %848 = vmatpush1.msra.mxu0 0.0
        %849 = vmatprep.subr.mxu0 0.0
        %850 = vmatpush1.msra.mxu0 0.0
        %851 = vmatprep.subr.mxu0 0.0
        %852 = vmatpush1.msra.mxu0 0.0
        %853 = vmatprep.subr.mxu0 0.0
        %854 = vmatpush1.msra.mxu0 0.0
        %855 = vmatprep.subr.mxu0 0.0
        %856 = vmatpush1.msra.mxu0 0.0
        %857 = vmatprep.subr.mxu0 0.0
        %858 = vmatpush1.msra.mxu0 0.0
        %859 = vmatprep.subr.mxu0 0.0
        %860 = vmatpush1.msra.mxu0 0.0
        %861 = vmatprep.subr.mxu0 0.0
        %862 = vmatpush1.msra.mxu0 0.0
        %863 = vmatprep.subr.mxu0 0.0
        %864 = vmatpush1.msra.mxu0 %v741
        %865 = vmatprep.subr.mxu0 0.0
        %866 = vmatpush2.msra.mxu0 0.0
        %867 = vmatprep.subr.mxu0 0.0
        %868 = vmatpush2.msra.mxu0 0.0
        %869 = vmatprep.subr.mxu0 0.0
        %870 = vmatpush2.msra.mxu0 0.0
        %871 = vmatprep.subr.mxu0 0.0
        %872 = vmatpush2.msra.mxu0 0.0
        %873 = vmatprep.subr.mxu0 0.0
        %874 = vmatpush2.msra.mxu0 0.0
        %875 = vmatprep.subr.mxu0 0.0
        %876 = vmatpush2.msra.mxu0 0.0
        %877 = vmatprep.subr.mxu0 0.0
        %878 = vmatpush2.msra.mxu0 0.0
        %879 = vmatprep.subr.mxu0 0.0
        %880 = vmatpush2.msra.mxu0 0.0
        %881 = vmatprep.subr.mxu0 0.0
        %882 = vmatpush2.msra.mxu0 0.0
        %883 = vmatprep.subr.mxu0 0.0
        %884 = vmatpush2.msra.mxu0 0.0
        %885 = vmatprep.subr.mxu0 0.0
        %886 = vmatpush2.msra.mxu0 0.0
        %887 = vmatprep.subr.mxu0 0.0
        %888 = vmatpush2.msra.mxu0 0.0
        %889 = vmatprep.subr.mxu0 0.0
        %890 = vmatpush2.msra.mxu0 0.0
        %891 = vmatprep.subr.mxu0 0.0
        %892 = vmatpush2.msra.mxu0 0.0
        %893 = vmatprep.subr.mxu0 0.0
        %894 = vmatpush2.msra.mxu0 0.0
        %895 = vmatprep.subr.mxu0 0.0
        %896 = vmatpush2.msra.mxu0 0.0
        %897 = vmatprep.mubr.f32.mxu0 0.0
        %898 = vmatmul.mubr.f32.gmra.mxu0 %v831
        %v899 = vpop.f32.mrf.mxu0
        %v900 = vadd.f32 0.0, %v899
        %v901 = vpop.f32.mrf.mxu0
        %902 = vdwg.mxu0
        %903 = vst.msk [vmem:[#allocation4] sm:$0xff] %vm742, %v900
        %904 = vrot.lane.b32.xlu0 %v739, 120
        %v905 = vpop.permute.xlu0 %904
        %906 = vrot.lane.b32.xlu0 %v740, 120
        %v907 = vpop.permute.xlu0 %906
        %v908 = vsel %vm742, %v905, 0
        %v910 = vsel %vm742, %v907, 0
        %912 = vmatprep.subr.mxu0 0.0
        %913 = vmatpush1.xpose.msra.mxu0 0.0
        %914 = vmatprep.subr.mxu0 0.0
        %915 = vmatpush1.xpose.msra.mxu0 0.0
        %916 = vmatprep.subr.mxu0 0.0
        %917 = vmatpush1.xpose.msra.mxu0 0.0
        %918 = vmatprep.subr.mxu0 0.0
        %919 = vmatpush1.xpose.msra.mxu0 0.0
        %920 = vmatprep.subr.mxu0 0.0
        %921 = vmatpush1.xpose.msra.mxu0 0.0
        %922 = vmatprep.subr.mxu0 0.0
        %923 = vmatpush1.xpose.msra.mxu0 0.0
        %924 = vmatprep.subr.mxu0 0.0
        %925 = vmatpush1.xpose.msra.mxu0 0.0
        %926 = vmatprep.subr.mxu0 0.0
        %927 = vmatpush1.xpose.msra.mxu0 0.0
        %928 = vmatprep.subr.mxu0 0.0
        %929 = vmatpush1.xpose.msra.mxu0 0.0
        %930 = vmatprep.subr.mxu0 0.0
        %931 = vmatpush1.xpose.msra.mxu0 0.0
        %932 = vmatprep.subr.mxu0 0.0
        %933 = vmatpush1.xpose.msra.mxu0 0.0
        %934 = vmatprep.subr.mxu0 0.0
        %935 = vmatpush1.xpose.msra.mxu0 0.0
        %936 = vmatprep.subr.mxu0 0.0
        %937 = vmatpush1.xpose.msra.mxu0 0.0
        %938 = vmatprep.subr.mxu0 0.0
        %939 = vmatpush1.xpose.msra.mxu0 0.0
        %940 = vmatprep.subr.mxu0 0.0
        %941 = vmatpush1.xpose.msra.mxu0 0.0
        %942 = vmatprep.subr.mxu0 0.0
        %943 = vmatpush1.xpose.msra.mxu0 %v910
        %944 = vmatprep.subr.mxu0 0.0
        %945 = vmatpush2.xpose.msra.mxu0 0.0
        %946 = vmatprep.subr.mxu0 0.0
        %947 = vmatpush2.xpose.msra.mxu0 0.0
        %948 = vmatprep.subr.mxu0 0.0
        %949 = vmatpush2.xpose.msra.mxu0 0.0
        %950 = vmatprep.subr.mxu0 0.0
        %951 = vmatpush2.xpose.msra.mxu0 0.0
        %952 = vmatprep.subr.mxu0 0.0
        %953 = vmatpush2.xpose.msra.mxu0 0.0
        %954 = vmatprep.subr.mxu0 0.0
        %955 = vmatpush2.xpose.msra.mxu0 0.0
        %956 = vmatprep.subr.mxu0 0.0
        %957 = vmatpush2.xpose.msra.mxu0 0.0
        %958 = vmatprep.subr.mxu0 0.0
        %959 = vmatpush2.xpose.msra.mxu0 0.0
        %960 = vmatprep.subr.mxu0 0.0
        %961 = vmatpush2.xpose.msra.mxu0 0.0
        %962 = vmatprep.subr.mxu0 0.0
        %963 = vmatpush2.xpose.msra.mxu0 0.0
        %964 = vmatprep.subr.mxu0 0.0
        %965 = vmatpush2.xpose.msra.mxu0 0.0
        %966 = vmatprep.subr.mxu0 0.0
        %967 = vmatpush2.xpose.msra.mxu0 0.0
        %968 = vmatprep.subr.mxu0 0.0
        %969 = vmatpush2.xpose.msra.mxu0 0.0
        %970 = vmatprep.subr.mxu0 0.0
        %971 = vmatpush2.xpose.msra.mxu0 0.0
        %972 = vmatprep.subr.mxu0 0.0
        %973 = vmatpush2.xpose.msra.mxu0 0.0
        %974 = vmatprep.subr.mxu0 0.0
        %975 = vmatpush2.xpose.msra.mxu0 0.0
        %976 = vmatprep.mubr.f32.mxu0 0.0
        %977 = vmatmul.mubr.f32.gmra.mxu0 %v908
        %v978 = vpop.f32.mrf.mxu0
        %v979 = vadd.f32 0.0, %v978
        %v980 = vpop.f32.mrf.mxu0
        %981 = vdwg.mxu0
        %v982 = vsel %vm742, %v979, -inf
        %983 = vmax.xlane.f32.xlu0 %v982
        %v984 = vpop.xlane.xlu0 %983
        %v985 = vsub.f32 %v979, %v984
        %v986 = vmul.f32 %v985, 1.442695
        %v987 = vpow.pop %v986
        %v988 = vsel %vm742, %v987, 0.0
        %989 = vadd.xlane.f32.xlu0 %v988
        %v990 = vpop.xlane.xlu0 %989
        %v991 = vrcp.pop %v990
        %v992 = vmul.f32 %v987, %v991
        %994 = vrot.lane.b32.xlu0 %v741, 120
        %v995 = vpop.permute.xlu0 %994
        %v998 = vsel %vm742, %v992, 0
        %1000 = vmatprep.subr.mxu0 0.0
        %1001 = vmatpush1.msra.mxu0 0.0
        %1002 = vmatprep.subr.mxu0 0.0
        %1003 = vmatpush1.msra.mxu0 0.0
        %1004 = vmatprep.subr.mxu0 0.0
        %1005 = vmatpush1.msra.mxu0 0.0
        %1006 = vmatprep.subr.mxu0 0.0
        %1007 = vmatpush1.msra.mxu0 0.0
        %1008 = vmatprep.subr.mxu0 0.0
        %1009 = vmatpush1.msra.mxu0 0.0
        %1010 = vmatprep.subr.mxu0 0.0
        %1011 = vmatpush1.msra.mxu0 0.0
        %1012 = vmatprep.subr.mxu0 0.0
        %1013 = vmatpush1.msra.mxu0 0.0
        %1014 = vmatprep.subr.mxu0 0.0
        %1015 = vmatpush1.msra.mxu0 0.0
        %1016 = vmatprep.subr.mxu0 0.0
        %1017 = vmatpush1.msra.mxu0 0.0
        %1018 = vmatprep.subr.mxu0 0.0
        %1019 = vmatpush1.msra.mxu0 0.0
        %1020 = vmatprep.subr.mxu0 0.0
        %1021 = vmatpush1.msra.mxu0 0.0
        %1022 = vmatprep.subr.mxu0 0.0
        %1023 = vmatpush1.msra.mxu0 0.0
        %1024 = vmatprep.subr.mxu0 0.0
        %1025 = vmatpush1.msra.mxu0 0.0
        %1026 = vmatprep.subr.mxu0 0.0
        %1027 = vmatpush1.msra.mxu0 0.0
        %1028 = vmatprep.subr.mxu0 0.0
        %1029 = vmatpush1.msra.mxu0 0.0
        %1030 = vmatprep.subr.mxu0 0.0
        %1031 = vmatpush1.msra.mxu0 %v995
        %1032 = vmatprep.subr.mxu0 0.0
        %1033 = vmatpush2.msra.mxu0 0.0
        %1034 = vmatprep.subr.mxu0 0.0
        %1035 = vmatpush2.msra.mxu0 0.0
        %1036 = vmatprep.subr.mxu0 0.0
        %1037 = vmatpush2.msra.mxu0 0.0
        %1038 = vmatprep.subr.mxu0 0.0
        %1039 = vmatpush2.msra.mxu0 0.0
        %1040 = vmatprep.subr.mxu0 0.0
        %1041 = vmatpush2.msra.mxu0 0.0
        %1042 = vmatprep.subr.mxu0 0.0
        %1043 = vmatpush2.msra.mxu0 0.0
        %1044 = vmatprep.subr.mxu0 0.0
        %1045 = vmatpush2.msra.mxu0 0.0
        %1046 = vmatprep.subr.mxu0 0.0
        %1047 = vmatpush2.msra.mxu0 0.0
        %1048 = vmatprep.subr.mxu0 0.0
        %1049 = vmatpush2.msra.mxu0 0.0
        %1050 = vmatprep.subr.mxu0 0.0
        %1051 = vmatpush2.msra.mxu0 0.0
        %1052 = vmatprep.subr.mxu0 0.0
        %1053 = vmatpush2.msra.mxu0 0.0
        %1054 = vmatprep.subr.mxu0 0.0
        %1055 = vmatpush2.msra.mxu0 0.0
        %1056 = vmatprep.subr.mxu0 0.0
        %1057 = vmatpush2.msra.mxu0 0.0
        %1058 = vmatprep.subr.mxu0 0.0
        %1059 = vmatpush2.msra.mxu0 0.0
        %1060 = vmatprep.subr.mxu0 0.0
        %1061 = vmatpush2.msra.mxu0 0.0
        %1062 = vmatprep.subr.mxu0 0.0
        %1063 = vmatpush2.msra.mxu0 0.0
        %1064 = vmatprep.mubr.f32.mxu0 0.0
        %1065 = vmatmul.mubr.f32.gmra.mxu0 %v998
        %v1066 = vpop.f32.mrf.mxu0
        %v1067 = vadd.f32 0.0, %v1066
        %v1068 = vpop.f32.mrf.mxu0
        %1069 = vdwg.mxu0
        %1071 = vrot.lane.b32.xlu0 %v1067, 8
        %v1072 = vpop.permute.xlu0 %1071
        %vm1074 = vcmask 130112
        %1075 = vst.msk [vmem:[#allocation4] sm:$0xff] %vm1074, %v1072
        %1076 = vrot.lane.b32.xlu0 %v739, 112
        %v1077 = vpop.permute.xlu0 %1076
        %1078 = vrot.lane.b32.xlu0 %v740, 112
        %v1079 = vpop.permute.xlu0 %1078
        %v1080 = vsel %vm742, %v1077, 0
        %v1082 = vsel %vm742, %v1079, 0
        %1084 = vmatprep.subr.mxu0 0.0
        %1085 = vmatpush1.xpose.msra.mxu0 0.0
        %1086 = vmatprep.subr.mxu0 0.0
        %1087 = vmatpush1.xpose.msra.mxu0 0.0
        %1088 = vmatprep.subr.mxu0 0.0
        %1089 = vmatpush1.xpose.msra.mxu0 0.0
        %1090 = vmatprep.subr.mxu0 0.0
        %1091 = vmatpush1.xpose.msra.mxu0 0.0
        %1092 = vmatprep.subr.mxu0 0.0
        %1093 = vmatpush1.xpose.msra.mxu0 0.0
        %1094 = vmatprep.subr.mxu0 0.0
        %1095 = vmatpush1.xpose.msra.mxu0 0.0
        %1096 = vmatprep.subr.mxu0 0.0
        %1097 = vmatpush1.xpose.msra.mxu0 0.0
        %1098 = vmatprep.subr.mxu0 0.0
        %1099 = vmatpush1.xpose.msra.mxu0 0.0
        %1100 = vmatprep.subr.mxu0 0.0
        %1101 = vmatpush1.xpose.msra.mxu0 0.0
        %1102 = vmatprep.subr.mxu0 0.0
        %1103 = vmatpush1.xpose.msra.mxu0 0.0
        %1104 = vmatprep.subr.mxu0 0.0
        %1105 = vmatpush1.xpose.msra.mxu0 0.0
        %1106 = vmatprep.subr.mxu0 0.0
        %1107 = vmatpush1.xpose.msra.mxu0 0.0
        %1108 = vmatprep.subr.mxu0 0.0
        %1109 = vmatpush1.xpose.msra.mxu0 0.0
        %1110 = vmatprep.subr.mxu0 0.0
        %1111 = vmatpush1.xpose.msra.mxu0 0.0
        %1112 = vmatprep.subr.mxu0 0.0
        %1113 = vmatpush1.xpose.msra.mxu0 0.0
        %1114 = vmatprep.subr.mxu0 0.0
        %1115 = vmatpush1.xpose.msra.mxu0 %v1082
        %1116 = vmatprep.subr.mxu0 0.0
        %1117 = vmatpush2.xpose.msra.mxu0 0.0
        %1118 = vmatprep.subr.mxu0 0.0
        %1119 = vmatpush2.xpose.msra.mxu0 0.0
        %1120 = vmatprep.subr.mxu0 0.0
        %1121 = vmatpush2.xpose.msra.mxu0 0.0
        %1122 = vmatprep.subr.mxu0 0.0
        %1123 = vmatpush2.xpose.msra.mxu0 0.0
        %1124 = vmatprep.subr.mxu0 0.0
        %1125 = vmatpush2.xpose.msra.mxu0 0.0
        %1126 = vmatprep.subr.mxu0 0.0
        %1127 = vmatpush2.xpose.msra.mxu0 0.0
        %1128 = vmatprep.subr.mxu0 0.0
        %1129 = vmatpush2.xpose.msra.mxu0 0.0
        %1130 = vmatprep.subr.mxu0 0.0
        %1131 = vmatpush2.xpose.msra.mxu0 0.0
        %1132 = vmatprep.subr.mxu0 0.0
        %1133 = vmatpush2.xpose.msra.mxu0 0.0
        %1134 = vmatprep.subr.mxu0 0.0
        %1135 = vmatpush2.xpose.msra.mxu0 0.0
        %1136 = vmatprep.subr.mxu0 0.0
        %1137 = vmatpush2.xpose.msra.mxu0 0.0
        %1138 = vmatprep.subr.mxu0 0.0
        %1139 = vmatpush2.xpose.msra.mxu0 0.0
        %1140 = vmatprep.subr.mxu0 0.0
        %1141 = vmatpush2.xpose.msra.mxu0 0.0
        %1142 = vmatprep.subr.mxu0 0.0
        %1143 = vmatpush2.xpose.msra.mxu0 0.0
        %1144 = vmatprep.subr.mxu0 0.0
        %1145 = vmatpush2.xpose.msra.mxu0 0.0
        %1146 = vmatprep.subr.mxu0 0.0
        %1147 = vmatpush2.xpose.msra.mxu0 0.0
        %1148 = vmatprep.mubr.f32.mxu0 0.0
        %1149 = vmatmul.mubr.f32.gmra.mxu0 %v1080
        %v1150 = vpop.f32.mrf.mxu0
        %v1151 = vadd.f32 0.0, %v1150
        %v1152 = vpop.f32.mrf.mxu0
        %1153 = vdwg.mxu0
        %v1154 = vsel %vm742, %v1151, -inf
        %1155 = vmax.xlane.f32.xlu0 %v1154
        %v1156 = vpop.xlane.xlu0 %1155
        %v1157 = vsub.f32 %v1151, %v1156
        %v1158 = vmul.f32 %v1157, 1.442695
        %v1159 = vpow.pop %v1158
        %v1160 = vsel %vm742, %v1159, 0.0
        %1161 = vadd.xlane.f32.xlu0 %v1160
        %v1162 = vpop.xlane.xlu0 %1161
        %v1163 = vrcp.pop %v1162
        %v1164 = vmul.f32 %v1159, %v1163
        %1165 = vrot.lane.b32.xlu0 %v741, 112
        %v1166 = vpop.permute.xlu0 %1165
        %v1169 = vsel %vm742, %v1164, 0
        %1171 = vmatprep.subr.mxu0 0.0
        %1172 = vmatpush1.msra.mxu0 0.0
        %1173 = vmatprep.subr.mxu0 0.0
        %1174 = vmatpush1.msra.mxu0 0.0
        %1175 = vmatprep.subr.mxu0 0.0
        %1176 = vmatpush1.msra.mxu0 0.0
        %1177 = vmatprep.subr.mxu0 0.0
        %1178 = vmatpush1.msra.mxu0 0.0
        %1179 = vmatprep.subr.mxu0 0.0
        %1180 = vmatpush1.msra.mxu0 0.0
        %1181 = vmatprep.subr.mxu0 0.0
        %1182 = vmatpush1.msra.mxu0 0.0
        %1183 = vmatprep.subr.mxu0 0.0
        %1184 = vmatpush1.msra.mxu0 0.0
        %1185 = vmatprep.subr.mxu0 0.0
        %1186 = vmatpush1.msra.mxu0 0.0
        %1187 = vmatprep.subr.mxu0 0.0
        %1188 = vmatpush1.msra.mxu0 0.0
        %1189 = vmatprep.subr.mxu0 0.0
        %1190 = vmatpush1.msra.mxu0 0.0
        %1191 = vmatprep.subr.mxu0 0.0
        %1192 = vmatpush1.msra.mxu0 0.0
        %1193 = vmatprep.subr.mxu0 0.0
        %1194 = vmatpush1.msra.mxu0 0.0
        %1195 = vmatprep.subr.mxu0 0.0
        %1196 = vmatpush1.msra.mxu0 0.0
        %1197 = vmatprep.subr.mxu0 0.0
        %1198 = vmatpush1.msra.mxu0 0.0
        %1199 = vmatprep.subr.mxu0 0.0
        %1200 = vmatpush1.msra.mxu0 0.0
        %1201 = vmatprep.subr.mxu0 0.0
        %1202 = vmatpush1.msra.mxu0 %v1166
        %1203 = vmatprep.subr.mxu0 0.0
        %1204 = vmatpush2.msra.mxu0 0.0
        %1205 = vmatprep.subr.mxu0 0.0
        %1206 = vmatpush2.msra.mxu0 0.0
        %1207 = vmatprep.subr.mxu0 0.0
        %1208 = vmatpush2.msra.mxu0 0.0
        %1209 = vmatprep.subr.mxu0 0.0
        %1210 = vmatpush2.msra.mxu0 0.0
        %1211 = vmatprep.subr.mxu0 0.0
        %1212 = vmatpush2.msra.mxu0 0.0
        %1213 = vmatprep.subr.mxu0 0.0
        %1214 = vmatpush2.msra.mxu0 0.0
        %1215 = vmatprep.subr.mxu0 0.0
        %1216 = vmatpush2.msra.mxu0 0.0
        %1217 = vmatprep.subr.mxu0 0.0
        %1218 = vmatpush2.msra.mxu0 0.0
        %1219 = vmatprep.subr.mxu0 0.0
        %1220 = vmatpush2.msra.mxu0 0.0
        %1221 = vmatprep.subr.mxu0 0.0
        %1222 = vmatpush2.msra.mxu0 0.0
        %1223 = vmatprep.subr.mxu0 0.0
        %1224 = vmatpush2.msra.mxu0 0.0
        %1225 = vmatprep.subr.mxu0 0.0
        %1226 = vmatpush2.msra.mxu0 0.0
        %1227 = vmatprep.subr.mxu0 0.0
        %1228 = vmatpush2.msra.mxu0 0.0
        %1229 = vmatprep.subr.mxu0 0.0
        %1230 = vmatpush2.msra.mxu0 0.0
        %1231 = vmatprep.subr.mxu0 0.0
        %1232 = vmatpush2.msra.mxu0 0.0
        %1233 = vmatprep.subr.mxu0 0.0
        %1234 = vmatpush2.msra.mxu0 0.0
        %1235 = vmatprep.mubr.f32.mxu0 0.0
        %1236 = vmatmul.mubr.f32.gmra.mxu0 %v1169
        %v1237 = vpop.f32.mrf.mxu0
        %v1238 = vadd.f32 0.0, %v1237
        %v1239 = vpop.f32.mrf.mxu0
        %1240 = vdwg.mxu0
        %1242 = vrot.lane.b32.xlu0 %v1238, 16
        %v1243 = vpop.permute.xlu0 %1242
        %vm1245 = vcmask 195712
        %1246 = vst.msk [vmem:[#allocation4] sm:$0xff] %vm1245, %v1243
        %1247 = vrot.lane.b32.xlu0 %v739, 104
        %v1248 = vpop.permute.xlu0 %1247
        %1249 = vrot.lane.b32.xlu0 %v740, 104
        %v1250 = vpop.permute.xlu0 %1249
        %v1251 = vsel %vm742, %v1248, 0
        %v1253 = vsel %vm742, %v1250, 0
        %1255 = vmatprep.subr.mxu0 0.0
        %1256 = vmatpush1.xpose.msra.mxu0 0.0
        %1257 = vmatprep.subr.mxu0 0.0
        %1258 = vmatpush1.xpose.msra.mxu0 0.0
        %1259 = vmatprep.subr.mxu0 0.0
        %1260 = vmatpush1.xpose.msra.mxu0 0.0
        %1261 = vmatprep.subr.mxu0 0.0
        %1262 = vmatpush1.xpose.msra.mxu0 0.0
        %1263 = vmatprep.subr.mxu0 0.0
        %1264 = vmatpush1.xpose.msra.mxu0 0.0
        %1265 = vmatprep.subr.mxu0 0.0
        %1266 = vmatpush1.xpose.msra.mxu0 0.0
        %1267 = vmatprep.subr.mxu0 0.0
        %1268 = vmatpush1.xpose.msra.mxu0 0.0
        %1269 = vmatprep.subr.mxu0 0.0
        %1270 = vmatpush1.xpose.msra.mxu0 0.0
        %1271 = vmatprep.subr.mxu0 0.0
        %1272 = vmatpush1.xpose.msra.mxu0 0.0
        %1273 = vmatprep.subr.mxu0 0.0
        %1274 = vmatpush1.xpose.msra.mxu0 0.0
        %1275 = vmatprep.subr.mxu0 0.0
        %1276 = vmatpush1.xpose.msra.mxu0 0.0
        %1277 = vmatprep.subr.mxu0 0.0
        %1278 = vmatpush1.xpose.msra.mxu0 0.0
        %1279 = vmatprep.subr.mxu0 0.0
        %1280 = vmatpush1.xpose.msra.mxu0 0.0
        %1281 = vmatprep.subr.mxu0 0.0
        %1282 = vmatpush1.xpose.msra.mxu0 0.0
        %1283 = vmatprep.subr.mxu0 0.0
        %1284 = vmatpush1.xpose.msra.mxu0 0.0
        %1285 = vmatprep.subr.mxu0 0.0
        %1286 = vmatpush1.xpose.msra.mxu0 %v1253
        %1287 = vmatprep.subr.mxu0 0.0
        %1288 = vmatpush2.xpose.msra.mxu0 0.0
        %1289 = vmatprep.subr.mxu0 0.0
        %1290 = vmatpush2.xpose.msra.mxu0 0.0
        %1291 = vmatprep.subr.mxu0 0.0
        %1292 = vmatpush2.xpose.msra.mxu0 0.0
        %1293 = vmatprep.subr.mxu0 0.0
        %1294 = vmatpush2.xpose.msra.mxu0 0.0
        %1295 = vmatprep.subr.mxu0 0.0
        %1296 = vmatpush2.xpose.msra.mxu0 0.0
        %1297 = vmatprep.subr.mxu0 0.0
        %1298 = vmatpush2.xpose.msra.mxu0 0.0
        %1299 = vmatprep.subr.mxu0 0.0
        %1300 = vmatpush2.xpose.msra.mxu0 0.0
        %1301 = vmatprep.subr.mxu0 0.0
        %1302 = vmatpush2.xpose.msra.mxu0 0.0
        %1303 = vmatprep.subr.mxu0 0.0
        %1304 = vmatpush2.xpose.msra.mxu0 0.0
        %1305 = vmatprep.subr.mxu0 0.0
        %1306 = vmatpush2.xpose.msra.mxu0 0.0
        %1307 = vmatprep.subr.mxu0 0.0
        %1308 = vmatpush2.xpose.msra.mxu0 0.0
        %1309 = vmatprep.subr.mxu0 0.0
        %1310 = vmatpush2.xpose.msra.mxu0 0.0
        %1311 = vmatprep.subr.mxu0 0.0
        %1312 = vmatpush2.xpose.msra.mxu0 0.0
        %1313 = vmatprep.subr.mxu0 0.0
        %1314 = vmatpush2.xpose.msra.mxu0 0.0
        %1315 = vmatprep.subr.mxu0 0.0
        %1316 = vmatpush2.xpose.msra.mxu0 0.0
        %1317 = vmatprep.subr.mxu0 0.0
        %1318 = vmatpush2.xpose.msra.mxu0 0.0
        %1319 = vmatprep.mubr.f32.mxu0 0.0
        %1320 = vmatmul.mubr.f32.gmra.mxu0 %v1251
        %v1321 = vpop.f32.mrf.mxu0
        %v1322 = vadd.f32 0.0, %v1321
        %v1323 = vpop.f32.mrf.mxu0
        %1324 = vdwg.mxu0
        %v1325 = vsel %vm742, %v1322, -inf
        %1326 = vmax.xlane.f32.xlu0 %v1325
        %v1327 = vpop.xlane.xlu0 %1326
        %v1328 = vsub.f32 %v1322, %v1327
        %v1329 = vmul.f32 %v1328, 1.442695
        %v1330 = vpow.pop %v1329
        %v1331 = vsel %vm742, %v1330, 0.0
        %1332 = vadd.xlane.f32.xlu0 %v1331
        %v1333 = vpop.xlane.xlu0 %1332
        %v1334 = vrcp.pop %v1333
        %v1335 = vmul.f32 %v1330, %v1334
        %1336 = vrot.lane.b32.xlu0 %v741, 104
        %v1337 = vpop.permute.xlu0 %1336
        %v1340 = vsel %vm742, %v1335, 0
        %1342 = vmatprep.subr.mxu0 0.0
        %1343 = vmatpush1.msra.mxu0 0.0
        %1344 = vmatprep.subr.mxu0 0.0
        %1345 = vmatpush1.msra.mxu0 0.0
        %1346 = vmatprep.subr.mxu0 0.0
        %1347 = vmatpush1.msra.mxu0 0.0
        %1348 = vmatprep.subr.mxu0 0.0
        %1349 = vmatpush1.msra.mxu0 0.0
        %1350 = vmatprep.subr.mxu0 0.0
        %1351 = vmatpush1.msra.mxu0 0.0
        %1352 = vmatprep.subr.mxu0 0.0
        %1353 = vmatpush1.msra.mxu0 0.0
        %1354 = vmatprep.subr.mxu0 0.0
        %1355 = vmatpush1.msra.mxu0 0.0
        %1356 = vmatprep.subr.mxu0 0.0
        %1357 = vmatpush1.msra.mxu0 0.0
        %1358 = vmatprep.subr.mxu0 0.0
        %1359 = vmatpush1.msra.mxu0 0.0
        %1360 = vmatprep.subr.mxu0 0.0
        %1361 = vmatpush1.msra.mxu0 0.0
        %1362 = vmatprep.subr.mxu0 0.0
        %1363 = vmatpush1.msra.mxu0 0.0
        %1364 = vmatprep.subr.mxu0 0.0
        %1365 = vmatpush1.msra.mxu0 0.0
        %1366 = vmatprep.subr.mxu0 0.0
        %1367 = vmatpush1.msra.mxu0 0.0
        %1368 = vmatprep.subr.mxu0 0.0
        %1369 = vmatpush1.msra.mxu0 0.0
        %1370 = vmatprep.subr.mxu0 0.0
        %1371 = vmatpush1.msra.mxu0 0.0
        %1372 = vmatprep.subr.mxu0 0.0
        %1373 = vmatpush1.msra.mxu0 %v1337
        %1374 = vmatprep.subr.mxu0 0.0
        %1375 = vmatpush2.msra.mxu0 0.0
        %1376 = vmatprep.subr.mxu0 0.0
        %1377 = vmatpush2.msra.mxu0 0.0
        %1378 = vmatprep.subr.mxu0 0.0
        %1379 = vmatpush2.msra.mxu0 0.0
        %1380 = vmatprep.subr.mxu0 0.0
        %1381 = vmatpush2.msra.mxu0 0.0
        %1382 = vmatprep.subr.mxu0 0.0
        %1383 = vmatpush2.msra.mxu0 0.0
        %1384 = vmatprep.subr.mxu0 0.0
        %1385 = vmatpush2.msra.mxu0 0.0
        %1386 = vmatprep.subr.mxu0 0.0
        %1387 = vmatpush2.msra.mxu0 0.0
        %1388 = vmatprep.subr.mxu0 0.0
        %1389 = vmatpush2.msra.mxu0 0.0
        %1390 = vmatprep.subr.mxu0 0.0
        %1391 = vmatpush2.msra.mxu0 0.0
        %1392 = vmatprep.subr.mxu0 0.0
        %1393 = vmatpush2.msra.mxu0 0.0
        %1394 = vmatprep.subr.mxu0 0.0
        %1395 = vmatpush2.msra.mxu0 0.0
        %1396 = vmatprep.subr.mxu0 0.0
        %1397 = vmatpush2.msra.mxu0 0.0
        %1398 = vmatprep.subr.mxu0 0.0
        %1399 = vmatpush2.msra.mxu0 0.0
        %1400 = vmatprep.subr.mxu0 0.0
        %1401 = vmatpush2.msra.mxu0 0.0
        %1402 = vmatprep.subr.mxu0 0.0
        %1403 = vmatpush2.msra.mxu0 0.0
        %1404 = vmatprep.subr.mxu0 0.0
        %1405 = vmatpush2.msra.mxu0 0.0
        %1406 = vmatprep.mubr.f32.mxu0 0.0
        %1407 = vmatmul.mubr.f32.gmra.mxu0 %v1340
        %v1408 = vpop.f32.mrf.mxu0
        %v1409 = vadd.f32 0.0, %v1408
        %v1410 = vpop.f32.mrf.mxu0
        %1411 = vdwg.mxu0
        %1413 = vrot.lane.b32.xlu0 %v1409, 24
        %v1414 = vpop.permute.xlu0 %1413
        %vm1416 = vcmask 261312
        %1417 = vst.msk [vmem:[#allocation4] sm:$0xff] %vm1416, %v1414
        %v1418 = vld [vmem:[#allocation4] sm:$0xff]
        %v1419 = vld [vmem:[#allocation8] sm:$0xff]
        %v1420 = vld [vmem:[#allocation8 + $0x8] sm:$0xff]
        %v1421 = vld [vmem:[#allocation8 + $0x10] sm:$0xff]
        %v1422 = vld [vmem:[#allocation8 + $0x18] sm:$0xff]
        %v1424 = vsel %vm665, %v1418, 0
        %1426 = vmatprep.subr.mxu0 0.0
        %1427 = vmatpush1.msra.mxu0 0.0
        %1428 = vmatprep.subr.mxu0 0.0
        %1429 = vmatpush1.msra.mxu0 0.0
        %1430 = vmatprep.subr.mxu0 0.0
        %1431 = vmatpush1.msra.mxu0 0.0
        %1432 = vmatprep.subr.mxu0 0.0
        %1433 = vmatpush1.msra.mxu0 0.0
        %1434 = vmatprep.subr.mxu0 0.0
        %1435 = vmatpush1.msra.mxu0 0.0
        %1436 = vmatprep.subr.mxu0 0.0
        %1437 = vmatpush1.msra.mxu0 0.0
        %1438 = vmatprep.subr.mxu0 0.0
        %1439 = vmatpush1.msra.mxu0 0.0
        %1440 = vmatprep.subr.mxu0 0.0
        %1441 = vmatpush1.msra.mxu0 0.0
        %1442 = vmatprep.subr.mxu0 0.0
        %1443 = vmatpush1.msra.mxu0 0.0
        %1444 = vmatprep.subr.mxu0 0.0
        %1445 = vmatpush1.msra.mxu0 0.0
        %1446 = vmatprep.subr.mxu0 0.0
        %1447 = vmatpush1.msra.mxu0 0.0
        %1448 = vmatprep.subr.mxu0 0.0
        %1449 = vmatpush1.msra.mxu0 0.0
        %1450 = vmatprep.subr.mxu0 0.0
        %1451 = vmatpush1.msra.mxu0 %v1422
        %1452 = vmatprep.subr.mxu0 0.0
        %1453 = vmatpush1.msra.mxu0 %v1421
        %1454 = vmatprep.subr.mxu0 0.0
        %1455 = vmatpush1.msra.mxu0 %v1420
        %1456 = vmatprep.subr.mxu0 0.0
        %1457 = vmatpush1.msra.mxu0 %v1419
        %1458 = vmatprep.subr.mxu0 0.0
        %1459 = vmatpush2.msra.mxu0 0.0
        %1460 = vmatprep.subr.mxu0 0.0
        %1461 = vmatpush2.msra.mxu0 0.0
        %1462 = vmatprep.subr.mxu0 0.0
        %1463 = vmatpush2.msra.mxu0 0.0
        %1464 = vmatprep.subr.mxu0 0.0
        %1465 = vmatpush2.msra.mxu0 0.0
        %1466 = vmatprep.subr.mxu0 0.0
        %1467 = vmatpush2.msra.mxu0 0.0
        %1468 = vmatprep.subr.mxu0 0.0
        %1469 = vmatpush2.msra.mxu0 0.0
        %1470 = vmatprep.subr.mxu0 0.0
        %1471 = vmatpush2.msra.mxu0 0.0
        %1472 = vmatprep.subr.mxu0 0.0
        %1473 = vmatpush2.msra.mxu0 0.0
        %1474 = vmatprep.subr.mxu0 0.0
        %1475 = vmatpush2.msra.mxu0 0.0
        %1476 = vmatprep.subr.mxu0 0.0
        %1477 = vmatpush2.msra.mxu0 0.0
        %1478 = vmatprep.subr.mxu0 0.0
        %1479 = vmatpush2.msra.mxu0 0.0
        %1480 = vmatprep.subr.mxu0 0.0
        %1481 = vmatpush2.msra.mxu0 0.0
        %1482 = vmatprep.subr.mxu0 0.0
        %1483 = vmatpush2.msra.mxu0 0.0
        %1484 = vmatprep.subr.mxu0 0.0
        %1485 = vmatpush2.msra.mxu0 0.0
        %1486 = vmatprep.subr.mxu0 0.0
        %1487 = vmatpush2.msra.mxu0 0.0
        %1488 = vmatprep.subr.mxu0 0.0
        %1489 = vmatpush2.msra.mxu0 0.0
        %1490 = vmatprep.mubr.f32.mxu0 0.0
        %1491 = vmatmul.mubr.f32.gmra.mxu0 %v1424
        %v1492 = vpop.f32.mrf.mxu0
        %v1493 = vadd.f32 0.0, %v1492
        %v1494 = vpop.f32.mrf.mxu0
        %1495 = vdwg.mxu0
        %v1496 = vadd.f32 %v660, %v1493
        %v1497 = vsel %vm665, %v1496, 0.0
        %1498 = vadd.xlane.f32.xlu0 %v1497
        %v1499 = vpop.xlane.xlu0 %1498
        %v1500 = vrcp.pop 32.0
        %v1501 = vmul.f32 %v1499, %v1500
        %v1502 = vsub.f32 %v1496, %v1501
        %v1503 = vmul.f32 %v1502, %v1502
        %v1504 = vsel %vm665, %v1503, 0.0
        %1505 = vadd.xlane.f32.xlu0 %v1504
        %v1506 = vpop.xlane.xlu0 %1505
        %v1507 = vrcp.pop 31.0
        %v1508 = vmul.f32 %v1506, %v1507
        %v1509 = vrsqrt.pop %v1508
        %v1510 = vmul.f32 %v1508, %v1509
        %vm1511 = vcmp.eq.f32.partialorder %v1508, inf
        %v1512 = vsel %vm1511, %v1508, %v1510
        %vm1513 = vcmp.eq.f32.partialorder %v1508, 0.0
        %v1514 = vand.u32 %v1508, 2147483648
        %v1515 = vsel %vm1513, %v1514, %v1512
        %v1516 = vld [vmem:[%s5] sm:$0x1]
        %v1518 = vlaneseq
        %v1519 = vshrl.u32 %v1518, 7
        %v1520 = vsub.s32 0, %v1519
        %v1521 = vrot.slane %v1516, %v1520
        %v1523 = vmul.f32 %v1521, %v1502
        %v1524 = vadd.f32 %v1515, 1e-06
        %v1525 = vrcp.pop %v1524
        %v1526 = vmul.f32 %v1523, %v1525
        %v1527 = vld [vmem:[%s6] sm:$0x1]
        %v1529 = vlaneseq
        %v1530 = vshrl.u32 %v1529, 7
        %v1531 = vsub.s32 0, %v1530
        %v1532 = vrot.slane %v1527, %v1531
        %v1534 = vadd.f32 %v1526, %v1532
        %v1535 = vld [vmem:[#allocation10] sm:$0xff]
        %v1536 = vld [vmem:[#allocation10 + $0x8] sm:$0xff]
        %v1537 = vld [vmem:[#allocation10 + $0x10] sm:$0xff]
        %v1538 = vld [vmem:[#allocation10 + $0x18] sm:$0xff]
        %v1539 = vld [vmem:[%s8] sm:$0x1]
        %v1541 = vlaneseq
        %v1542 = vshrl.u32 %v1541, 7
        %v1543 = vsub.s32 0, %v1542
        %v1544 = vrot.slane %v1539, %v1543
        %v1547 = vsel %vm665, %v1534, 0
        %1549 = vmatprep.subr.mxu0 0.0
        %1550 = vmatpush1.msra.mxu0 0.0
        %1551 = vmatprep.subr.mxu0 0.0
        %1552 = vmatpush1.msra.mxu0 0.0
        %1553 = vmatprep.subr.mxu0 0.0
        %1554 = vmatpush1.msra.mxu0 0.0
        %1555 = vmatprep.subr.mxu0 0.0
        %1556 = vmatpush1.msra.mxu0 0.0
        %1557 = vmatprep.subr.mxu0 0.0
        %1558 = vmatpush1.msra.mxu0 0.0
        %1559 = vmatprep.subr.mxu0 0.0
        %1560 = vmatpush1.msra.mxu0 0.0
        %1561 = vmatprep.subr.mxu0 0.0
        %1562 = vmatpush1.msra.mxu0 0.0
        %1563 = vmatprep.subr.mxu0 0.0
        %1564 = vmatpush1.msra.mxu0 0.0
        %1565 = vmatprep.subr.mxu0 0.0
        %1566 = vmatpush1.msra.mxu0 0.0
        %1567 = vmatprep.subr.mxu0 0.0
        %1568 = vmatpush1.msra.mxu0 0.0
        %1569 = vmatprep.subr.mxu0 0.0
        %1570 = vmatpush1.msra.mxu0 0.0
        %1571 = vmatprep.subr.mxu0 0.0
        %1572 = vmatpush1.msra.mxu0 0.0
        %1573 = vmatprep.subr.mxu0 0.0
        %1574 = vmatpush1.msra.mxu0 %v1538
        %1575 = vmatprep.subr.mxu0 0.0
        %1576 = vmatpush1.msra.mxu0 %v1537
        %1577 = vmatprep.subr.mxu0 0.0
        %1578 = vmatpush1.msra.mxu0 %v1536
        %1579 = vmatprep.subr.mxu0 0.0
        %1580 = vmatpush1.msra.mxu0 %v1535
        %1581 = vmatprep.subr.mxu0 0.0
        %1582 = vmatpush2.msra.mxu0 0.0
        %1583 = vmatprep.subr.mxu0 0.0
        %1584 = vmatpush2.msra.mxu0 0.0
        %1585 = vmatprep.subr.mxu0 0.0
        %1586 = vmatpush2.msra.mxu0 0.0
        %1587 = vmatprep.subr.mxu0 0.0
        %1588 = vmatpush2.msra.mxu0 0.0
        %1589 = vmatprep.subr.mxu0 0.0
        %1590 = vmatpush2.msra.mxu0 0.0
        %1591 = vmatprep.subr.mxu0 0.0
        %1592 = vmatpush2.msra.mxu0 0.0
        %1593 = vmatprep.subr.mxu0 0.0
        %1594 = vmatpush2.msra.mxu0 0.0
        %1595 = vmatprep.subr.mxu0 0.0
        %1596 = vmatpush2.msra.mxu0 0.0
        %1597 = vmatprep.subr.mxu0 0.0
        %1598 = vmatpush2.msra.mxu0 0.0
        %1599 = vmatprep.subr.mxu0 0.0
        %1600 = vmatpush2.msra.mxu0 0.0
        %1601 = vmatprep.subr.mxu0 0.0
        %1602 = vmatpush2.msra.mxu0 0.0
        %1603 = vmatprep.subr.mxu0 0.0
        %1604 = vmatpush2.msra.mxu0 0.0
        %1605 = vmatprep.subr.mxu0 0.0
        %1606 = vmatpush2.msra.mxu0 0.0
        %1607 = vmatprep.subr.mxu0 0.0
        %1608 = vmatpush2.msra.mxu0 0.0
        %1609 = vmatprep.subr.mxu0 0.0
        %1610 = vmatpush2.msra.mxu0 0.0
        %1611 = vmatprep.subr.mxu0 0.0
        %1612 = vmatpush2.msra.mxu0 0.0
        %1613 = vmatprep.mubr.f32.mxu0 0.0
        %1614 = vmatmul.mubr.f32.gmra.mxu0 %v1547
        %v1615 = vpop.f32.mrf.mxu0
        %v1616 = vadd.f32 %v1544, %v1615
        %v1617 = vpop.f32.mrf.mxu0
        %1618 = vdwg.mxu0
        %v1619 = vmax.f32 %v1616, 0.0
        %v1620 = vld [vmem:[%s9] sm:$0xff]
        %v1621 = vld [vmem:[%s9 + $0x8] sm:$0xff]
        %v1622 = vld [vmem:[%s9 + $0x10] sm:$0xff]
        %v1623 = vld [vmem:[%s9 + $0x18] sm:$0xff]
        %v1624 = vld [vmem:[%s9 + $0x20] sm:$0xff]
        %v1625 = vld [vmem:[%s9 + $0x28] sm:$0xff]
        %v1626 = vld [vmem:[%s9 + $0x30] sm:$0xff]
        %v1627 = vld [vmem:[%s9 + $0x38] sm:$0xff]
        %v1628 = vld [vmem:[%s10] sm:$0x1]
        %v1630 = vlaneseq
        %v1631 = vshrl.u32 %v1630, 7
        %v1632 = vsub.s32 0, %v1631
        %v1633 = vrot.slane %v1628, %v1632
        %vm1635 = vcmask 523264
        %v1637 = vsel %vm1635, %v1619, 0
        %1639 = vmatprep.subr.mxu0 0.0
        %1640 = vmatpush1.msra.mxu0 0.0
        %1641 = vmatprep.subr.mxu0 0.0
        %1642 = vmatpush1.msra.mxu0 0.0
        %1643 = vmatprep.subr.mxu0 0.0
        %1644 = vmatpush1.msra.mxu0 0.0
        %1645 = vmatprep.subr.mxu0 0.0
        %1646 = vmatpush1.msra.mxu0 0.0
        %1647 = vmatprep.subr.mxu0 0.0
        %1648 = vmatpush1.msra.mxu0 0.0
        %1649 = vmatprep.subr.mxu0 0.0
        %1650 = vmatpush1.msra.mxu0 0.0
        %1651 = vmatprep.subr.mxu0 0.0
        %1652 = vmatpush1.msra.mxu0 0.0
        %1653 = vmatprep.subr.mxu0 0.0
        %1654 = vmatpush1.msra.mxu0 0.0
        %1655 = vmatprep.subr.mxu0 0.0
        %1656 = vmatpush1.msra.mxu0 %v1627
        %1657 = vmatprep.subr.mxu0 0.0
        %1658 = vmatpush1.msra.mxu0 %v1626
        %1659 = vmatprep.subr.mxu0 0.0
        %1660 = vmatpush1.msra.mxu0 %v1625
        %1661 = vmatprep.subr.mxu0 0.0
        %1662 = vmatpush1.msra.mxu0 %v1624
        %1663 = vmatprep.subr.mxu0 0.0
        %1664 = vmatpush1.msra.mxu0 %v1623
        %1665 = vmatprep.subr.mxu0 0.0
        %1666 = vmatpush1.msra.mxu0 %v1622
        %1667 = vmatprep.subr.mxu0 0.0
        %1668 = vmatpush1.msra.mxu0 %v1621
        %1669 = vmatprep.subr.mxu0 0.0
        %1670 = vmatpush1.msra.mxu0 %v1620
        %1671 = vmatprep.subr.mxu0 0.0
        %1672 = vmatpush2.msra.mxu0 0.0
        %1673 = vmatprep.subr.mxu0 0.0
        %1674 = vmatpush2.msra.mxu0 0.0
        %1675 = vmatprep.subr.mxu0 0.0
        %1676 = vmatpush2.msra.mxu0 0.0
        %1677 = vmatprep.subr.mxu0 0.0
        %1678 = vmatpush2.msra.mxu0 0.0
        %1679 = vmatprep.subr.mxu0 0.0
        %1680 = vmatpush2.msra.mxu0 0.0
        %1681 = vmatprep.subr.mxu0 0.0
        %1682 = vmatpush2.msra.mxu0 0.0
        %1683 = vmatprep.subr.mxu0 0.0
        %1684 = vmatpush2.msra.mxu0 0.0
        %1685 = vmatprep.subr.mxu0 0.0
        %1686 = vmatpush2.msra.mxu0 0.0
        %1687 = vmatprep.subr.mxu0 0.0
        %1688 = vmatpush2.msra.mxu0 0.0
        %1689 = vmatprep.subr.mxu0 0.0
        %1690 = vmatpush2.msra.mxu0 0.0
        %1691 = vmatprep.subr.mxu0 0.0
        %1692 = vmatpush2.msra.mxu0 0.0
        %1693 = vmatprep.subr.mxu0 0.0
        %1694 = vmatpush2.msra.mxu0 0.0
        %1695 = vmatprep.subr.mxu0 0.0
        %1696 = vmatpush2.msra.mxu0 0.0
        %1697 = vmatprep.subr.mxu0 0.0
        %1698 = vmatpush2.msra.mxu0 0.0
        %1699 = vmatprep.subr.mxu0 0.0
        %1700 = vmatpush2.msra.mxu0 0.0
        %1701 = vmatprep.subr.mxu0 0.0
        %1702 = vmatpush2.msra.mxu0 0.0
        %1703 = vmatprep.mubr.f32.mxu0 0.0
        %1704 = vmatmul.mubr.f32.gmra.mxu0 %v1637
        %v1705 = vpop.f32.mrf.mxu0
        %v1706 = vadd.f32 %v1633, %v1705
        %v1707 = vpop.f32.mrf.mxu0
        %1708 = vdwg.mxu0
        %v1709 = vadd.f32 %v1534, %v1706
        %v1710 = vsel %vm665, %v1709, 0.0
        %1711 = vadd.xlane.f32.xlu0 %v1710
        %v1712 = vpop.xlane.xlu0 %1711
        %v1713 = vmul.f32 %v1712, %v1500
        %v1714 = vsub.f32 %v1709, %v1713
        %v1715 = vmul.f32 %v1714, %v1714
        %v1716 = vsel %vm665, %v1715, 0.0
        %1717 = vadd.xlane.f32.xlu0 %v1716
        %v1718 = vpop.xlane.xlu0 %1717
        %v1719 = vmul.f32 %v1718, %v1507
        %v1720 = vrsqrt.pop %v1719
        %v1721 = vmul.f32 %v1719, %v1720
        %vm1722 = vcmp.eq.f32.partialorder %v1719, inf
        %v1723 = vsel %vm1722, %v1719, %v1721
        %vm1724 = vcmp.eq.f32.partialorder %v1719, 0.0
        %v1725 = vand.u32 %v1719, 2147483648
        %v1726 = vsel %vm1724, %v1725, %v1723
        %v1727 = vld [vmem:[%s11] sm:$0x1]
        %v1729 = vlaneseq
        %v1730 = vshrl.u32 %v1729, 7
        %v1731 = vsub.s32 0, %v1730
        %v1732 = vrot.slane %v1727, %v1731
        %v1734 = vmul.f32 %v1732, %v1714
        %v1735 = vadd.f32 %v1726, 1e-06
        %v1736 = vrcp.pop %v1735
        %v1737 = vmul.f32 %v1734, %v1736
        %v1738 = vld [vmem:[%s12] sm:$0x1]
        %v1740 = vlaneseq
        %v1741 = vshrl.u32 %v1740, 7
        %v1742 = vsub.s32 0, %v1741
        %v1743 = vrot.slane %v1738, %v1742
        %v1745 = vadd.f32 %v1737, %v1743
        %1746 = vst.msk [vmem:[%s498] sm:$0xff] %vm665, %v1745
        %s1747 = sand.u32 %s331, 1
        %s1748 = scalar_lea.sflag [#allocation7], %s1747
        %s1749 = sand.u32 %s331, 1
        %s1750 = smul.addr %s1749, 8
        %s1751 = scalar_lea.vmem [#allocation11], %s1750
        // Predicated region
        $region89: #{tpu_custom_call.1} parent=71 // pred_check
          %p1752 = pneg %p341
        $region90: #{tpu_custom_call.1} parent=71 // pred_check_branch
          %1754 = sbr.rel (%p1752) target = $region92
        $region91: #{tpu_custom_call.1} parent=71 // pred_region
          %s1756 = ssub.s32 128, 128
          %1757 = vsyncadd %s1748, %s1756
          %s1758 = sadd.s32 %s36, %s35
          %s1759 = smul.addr %s1758, 128
          %s1760 = scalar_lea.hbm %s13, %s1759
          %s1762 = sshll.u32 %s1751, 4
          %s1763 = int_to_ptr.vmem [resolvable:$true] %s1762
          %1765 = dma.vmem_to_hbm [thread:$0]  %s1763, 128, %s1760, %s1748
        $region92: #{tpu_custom_call.1} parent=71 // pred_fallthru
          _
      $region72: #{tpu_custom_call.1} parent=5 // pred_fallthru
        _
      %p1766 = scmp.le.s32.totalorder 2, %s26
      // Predicated region
      $region93: #{tpu_custom_call.1} parent=5 // pred_check
        %p1767 = pneg %p1766
      $region94: #{tpu_custom_call.1} parent=5 // pred_check_branch
        %1769 = sbr.rel (%p1767) target = $region96
      $region95: #{tpu_custom_call.1} parent=5 // pred_region
        %s1770 = ssub.s32 %s26, 2
        // Predicated region
        $region97: #{tpu_custom_call.1} parent=95 // pred_check
          %p1771 = pneg %p347
        $region98: #{tpu_custom_call.1} parent=95 // pred_check_branch
          %1773 = sbr.rel (%p1771) target = $region100
        $region99: #{tpu_custom_call.1} parent=95 // pred_region
          %s1774 = sand.u32 %s332, 1
          %s1775 = scalar_lea.sflag [#allocation7], %s1774
          %s1776 = sand.u32 %s332, 1
          %s1777 = smul.addr %s1776, 8
          %s1778 = scalar_lea.vmem [#allocation11], %s1777
          %1779 = dma.done %s1775, 128
        $region100: #{tpu_custom_call.1} parent=95 // pred_fallthru
          _
      $region96: #{tpu_custom_call.1} parent=5 // pred_fallthru
        _
    $region6: #{tpu_custom_call.1} parent=1 // loop_footer
      %s30 = sadd.s32 1, %s26
    $region7: #{tpu_custom_call.1} parent=1 // loop_footer_branch
      %25 = sbr.rel target = $region3
    $region8: #{tpu_custom_call.1} parent=1 // loop_exit
      _
    %1780 = vsyncpa [#allocation6], 1
    %s1781 = scalar_lea.sflag [#allocation6], 1
    %1782 = vsyncpa %s1781, 1
    %1783 = vsyncpa [#allocation9], 1
    %1784 = vsyncpa [#allocation7], 1
    %s1785 = scalar_lea.sflag [#allocation7], 1
    %1786 = vsyncpa %s1785, 1

// kernel: tpu_custom_call.1
$region0: #{tpu_custom_call.1}
  #allocation0 [shape = 'u32[]', space=smem, size = 0x4, offset = 0x4, fixed_abs, tag = 'smem constant byte address 0x4 - core index']
  #allocation1 [shape = 'u32[144,128]{1,0:T(1,128)}', space=vmem, size = 0x12000, scoped, tag = 'internal scratch']
  #allocation2 [shape = 'f32[8,32]{1,0:T(8,128)}', space=vmem, size = 0x1000, scoped, tag = 'scratch operand']
  #allocation3 [shape = 'f32[8,32]{1,0:T(8,128)}', space=vmem, size = 0x1000, scoped, tag = 'scratch operand']
  #allocation4 [shape = 'f32[8,32]{1,0:T(8,128)}', space=vmem, size = 0x1000, scoped, tag = 'scratch operand']
  %s0 = inlined_call_operand.hbm [shape: f32[2,8,32], index: 0, kind: input, shape index: {}]
  %s1 = inlined_call_operand.vmem [shape: f32[32,32], index: 1, kind: input, shape index: {}]
  %s2 = inlined_call_operand.vmem [shape: f32[32,32], index: 2, kind: input, shape index: {}]
  %s3 = inlined_call_operand.vmem [shape: f32[32,32], index: 3, kind: input, shape index: {}]
  %s4 = inlined_call_operand.hbm [shape: f32[32,32], index: 4, kind: input, shape index: {}]
  %s5 = inlined_call_operand.vmem [shape: f32[1,32], index: 5, kind: input, shape index: {}]
  %s6 = inlined_call_operand.vmem [shape: f32[1,32], index: 6, kind: input, shape index: {}]
  %s7 = inlined_call_operand.hbm [shape: f32[32,64], index: 7, kind: input, shape index: {}]
  %s8 = inlined_call_operand.vmem [shape: f32[1,64], index: 8, kind: input, shape index: {}]
  %s9 = inlined_call_operand.vmem [shape: f32[64,32], index: 9, kind: input, shape index: {}]
  %s10 = inlined_call_operand.vmem [shape: f32[1,32], index: 10, kind: input, shape index: {}]
  %s11 = inlined_call_operand.vmem [shape: f32[1,32], index: 11, kind: input, shape index: {}]
  %s12 = inlined_call_operand.vmem [shape: f32[1,32], index: 12, kind: input, shape index: {}]
  %s13 = inlined_call_operand.hbm [shape: f32[2,8,32], index: 13, kind: output, shape index: {}]
  %s14 = sld [smem:[#allocation0]]
  $region101: #{tpu_custom_call.1} parent=0
    _
  %s16 = ssub.s32 1, %s14
  %s17 = scalar_select 0, %s16, %s14
  $region1: #{tpu_custom_call.1} parent=0
    #allocation5 [shape = 'u8[8192]{0}', space=vmem, size = 0x2000, scoped, tag = 'input window, operand 0']
    #allocation6 [shape = 's32[2]{0}', space=sflag, size = 0x8, scoped, tag = 'scoped memory for tpu_custom_call.1']
    #allocation7 [shape = 's32[2]{0}', space=sflag, size = 0x8, scoped, tag = 'scoped memory for tpu_custom_call.1']
    #allocation8 [shape = 'u8[16384]{0}', space=vmem, size = 0x4000, scoped, tag = 'input window, operand 4, single buffered']
    #allocation9 [shape = 's32[1]{0}', space=sflag, size = 0x4, scoped, tag = 'scoped memory for tpu_custom_call.1']
    #allocation10 [shape = 'u8[16384]{0}', space=vmem, size = 0x4000, scoped, tag = 'input window, operand 7, single buffered']
    #allocation11 [shape = 'u8[8192]{0}', space=vmem, size = 0x2000, scoped, tag = 'output window, operand 0']
    %18 = vsyncpa [#allocation6], 0
    %s19 = scalar_lea.sflag [#allocation6], 1
    %20 = vsyncpa %s19, 0
    %21 = vsyncpa [#allocation9], 0
    %22 = vsyncpa [#allocation7], 0
    %s23 = scalar_lea.sflag [#allocation7], 1
    %24 = vsyncpa %s23, 0
    loop: start=0, step=1, limit=4
    $region2: #{tpu_custom_call.1} parent=1 // loop_pre_header
      _
    $region3: #{tpu_custom_call.1} parent=1 // loop_header
      %s26 = sphi 0, %s30
      %p27 = scmp.ge.s32.totalorder %s26, 4
      %s33 = sphi 0, %s45
      %s34 = sphi 0, %s41
      %s35 = sphi 0, %s33
      %s36 = sphi 0, %s34
      %s37 = sphi 0, %s35
      %s38 = sphi 0, %s36
      %s48 = sphi 0, %s50
      %s51 = sphi 0, %s48
      %s52 = sphi 0, %s51
      %s68 = sphi 0, %s52
      %s72 = sphi 0, %s72
      %s74 = sphi 0, %s72
      %s75 = sphi 0, %s74
      %s89 = sphi 0, %s75
      %s93 = sphi 0, %s93
      %s95 = sphi 0, %s93
      %s96 = sphi 0, %s95
      %s110 = sphi 0, %s96
      %s114 = sphi 0, %s114
      %s116 = sphi 0, %s114
      %s117 = sphi 0, %s116
      %s131 = sphi 0, %s117
      %s135 = sphi 0, %s135
      %s137 = sphi 0, %s135
      %s138 = sphi 0, %s137
      %s152 = sphi 0, %s138
      %s156 = sphi 0, %s156
      %s158 = sphi 0, %s156
      %s159 = sphi 0, %s158
      %s173 = sphi 0, %s159
      %s177 = sphi 0, %s177
      %s179 = sphi 0, %s177
      %s180 = sphi 0, %s179
      %s194 = sphi 0, %s180
      %s198 = sphi 0, %s198
      %s200 = sphi 0, %s198
      %s201 = sphi 0, %s200
      %s215 = sphi 0, %s201
      %s219 = sphi 0, %s219
      %s221 = sphi 0, %s219
      %s222 = sphi 0, %s221
      %s236 = sphi 0, %s222
      %s240 = sphi 0, %s240
      %s242 = sphi 0, %s240
      %s243 = sphi 0, %s242
      %s257 = sphi 0, %s243
      %s261 = sphi 0, %s261
      %s263 = sphi 0, %s261
      %s264 = sphi 0, %s263
      %s278 = sphi 0, %s264
      %s282 = sphi 0, %s282
      %s284 = sphi 0, %s282
      %s285 = sphi 0, %s284
      %s299 = sphi 0, %s285
      %s303 = sphi 0, %s303
      %s305 = sphi 0, %s303
      %s306 = sphi 0, %s305
      %s320 = sphi 0, %s306
      %s328 = sphi 0, %s330
      %s331 = sphi 0, %s328
      %s332 = sphi 0, %s331
      %s348 = sphi 0, %s332
    $region4: #{tpu_custom_call.1} parent=1 // loop_header_branch
      %29 = sbr.rel (%p27) target = $region8
    $region5: #{tpu_custom_call.1} parent=1 // loop_body
      %s31 = ssub.s32 %s26, 1
      %s32 = ssub.s32 %s26, 2
      %s39 = sadd.s32 1, %s34
      %p40 = scmp.ge.s32.totalorder %s39, 1
      %s41 = scalar_select %p40, 0, %s39
      %s42 = sadd.s32 1, %s33
      %s43 = scalar_select %p40, %s42, %s33
      %p44 = scmp.ge.s32.totalorder %s43, 2
      %s45 = scalar_select %p44, 0, %s43
      %s46 = ssub.s32 %s33, %s45
      %p47 = scmp.eq.s32.totalorder %s46, 0
      %s49 = sadd.s32 %s48, 1
      %s50 = scalar_select %p47, %s48, %s49
      %p53 = pneg %p47
      %p54 = scmp.eq.s32.totalorder %s26, 1
      %p55 = por %p53, %p54
      %p56 = scmp.ne.s32.totalorder %s48, %s51
      %p57 = scmp.eq.s32.totalorder %s26, 0
      %p58 = por %p56, %p57
      %p59 = scmp.ne.s32.totalorder %s48, %s51
      %p60 = scmp.eq.s32.totalorder %s31, 1
      %p61 = por %p59, %p60
      %p62 = scmp.ne.s32.totalorder %s51, %s52
      %p63 = scmp.eq.s32.totalorder %s31, 0
      %p64 = por %p62, %p63
      %p65 = scmp.ne.s32.totalorder %s51, %s52
      %p66 = scmp.eq.s32.totalorder %s32, 1
      %p67 = por %p65, %p66
      %p69 = scmp.ne.s32.totalorder %s52, %s68
      %p70 = scmp.eq.s32.totalorder %s32, 0
      %p71 = por %p69, %p70
      %s73 = sadd.s32 %s72, 1
      %p76 = scmp.eq.s32.totalorder %s26, 1
      %p77 = scmp.ne.s32.totalorder %s72, %s74
      %p78 = scmp.eq.s32.totalorder %s26, 0
      %p79 = por %p77, %p78
      %p80 = scmp.ne.s32.totalorder %s72, %s74
      %p81 = scmp.eq.s32.totalorder %s31, 1
      %p82 = por %p80, %p81
      %p83 = scmp.ne.s32.totalorder %s74, %s75
      %p84 = scmp.eq.s32.totalorder %s31, 0
      %p85 = por %p83, %p84
      %p86 = scmp.ne.s32.totalorder %s74, %s75
      %p87 = scmp.eq.s32.totalorder %s32, 1
      %p88 = por %p86, %p87
      %p90 = scmp.ne.s32.totalorder %s75, %s89
      %p91 = scmp.eq.s32.totalorder %s32, 0
      %p92 = por %p90, %p91
      %s94 = sadd.s32 %s93, 1
      %p97 = scmp.eq.s32.totalorder %s26, 1
      %p98 = scmp.ne.s32.totalorder %s93, %s95
      %p99 = scmp.eq.s32.totalorder %s26, 0
      %p100 = por %p98, %p99
      %p101 = scmp.ne.s32.totalorder %s93, %s95
      %p102 = scmp.eq.s32.totalorder %s31, 1
      %p103 = por %p101, %p102
      %p104 = scmp.ne.s32.totalorder %s95, %s96
      %p105 = scmp.eq.s32.totalorder %s31, 0
      %p106 = por %p104, %p105
      %p107 = scmp.ne.s32.totalorder %s95, %s96
      %p108 = scmp.eq.s32.totalorder %s32, 1
      %p109 = por %p107, %p108
      %p111 = scmp.ne.s32.totalorder %s96, %s110
      %p112 = scmp.eq.s32.totalorder %s32, 0
      %p113 = por %p111, %p112
      %s115 = sadd.s32 %s114, 1
      %p118 = scmp.eq.s32.totalorder %s26, 1
      %p119 = scmp.ne.s32.totalorder %s114, %s116
      %p120 = scmp.eq.s32.totalorder %s26, 0
      %p121 = por %p119, %p120
      %p122 = scmp.ne.s32.totalorder %s114, %s116
      %p123 = scmp.eq.s32.totalorder %s31, 1
      %p124 = por %p122, %p123
      %p125 = scmp.ne.s32.totalorder %s116, %s117
      %p126 = scmp.eq.s32.totalorder %s31, 0
      %p127 = por %p125, %p126
      %p128 = scmp.ne.s32.totalorder %s116, %s117
      %p129 = scmp.eq.s32.totalorder %s32, 1
      %p130 = por %p128, %p129
      %p132 = scmp.ne.s32.totalorder %s117, %s131
      %p133 = scmp.eq.s32.totalorder %s32, 0
      %p134 = por %p132, %p133
      %s136 = sadd.s32 %s135, 1
      %p139 = scmp.eq.s32.totalorder %s26, 1
      %p140 = scmp.ne.s32.totalorder %s135, %s137
      %p141 = scmp.eq.s32.totalorder %s26, 0
      %p142 = por %p140, %p141
      %p143 = scmp.ne.s32.totalorder %s135, %s137
      %p144 = scmp.eq.s32.totalorder %s31, 1
      %p145 = por %p143, %p144
      %p146 = scmp.ne.s32.totalorder %s137, %s138
      %p147 = scmp.eq.s32.totalorder %s31, 0
      %p148 = por %p146, %p147
      %p149 = scmp.ne.s32.totalorder %s137, %s138
      %p150 = scmp.eq.s32.totalorder %s32, 1
      %p151 = por %p149, %p150
      %p153 = scmp.ne.s32.totalorder %s138, %s152
      %p154 = scmp.eq.s32.totalorder %s32, 0
      %p155 = por %p153, %p154
      %s157 = sadd.s32 %s156, 1
      %p160 = scmp.eq.s32.totalorder %s26, 1
      %p161 = scmp.ne.s32.totalorder %s156, %s158
      %p162 = scmp.eq.s32.totalorder %s26, 0
      %p163 = por %p161, %p162
      %p164 = scmp.ne.s32.totalorder %s156, %s158
      %p165 = scmp.eq.s32.totalorder %s31, 1
      %p166 = por %p164, %p165
      %p167 = scmp.ne.s32.totalorder %s158, %s159
      %p168 = scmp.eq.s32.totalorder %s31, 0
      %p169 = por %p167, %p168
      %p170 = scmp.ne.s32.totalorder %s158, %s159
      %p171 = scmp.eq.s32.totalorder %s32, 1
      %p172 = por %p170, %p171
      %p174 = scmp.ne.s32.totalorder %s159, %s173
      %p175 = scmp.eq.s32.totalorder %s32, 0
      %p176 = por %p174, %p175
      %s178 = sadd.s32 %s177, 1
      %p181 = scmp.eq.s32.totalorder %s26, 1
      %p182 = scmp.ne.s32.totalorder %s177, %s179
      %p183 = scmp.eq.s32.totalorder %s26, 0
      %p184 = por %p182, %p183
      %p185 = scmp.ne.s32.totalorder %s177, %s179
      %p186 = scmp.eq.s32.totalorder %s31, 1
      %p187 = por %p185, %p186
      %p188 = scmp.ne.s32.totalorder %s179, %s180
      %p189 = scmp.eq.s32.totalorder %s31, 0
      %p190 = por %p188, %p189
      %p191 = scmp.ne.s32.totalorder %s179, %s180
      %p192 = scmp.eq.s32.totalorder %s32, 1
      %p193 = por %p191, %p192
      %p195 = scmp.ne.s32.totalorder %s180, %s194
      %p196 = scmp.eq.s32.totalorder %s32, 0
      %p197 = por %p195, %p196
      %s199 = sadd.s32 %s198, 1
      %p202 = scmp.eq.s32.totalorder %s26, 1
      %p203 = scmp.ne.s32.totalorder %s198, %s200
      %p204 = scmp.eq.s32.totalorder %s26, 0
      %p205 = por %p203, %p204
      %p206 = scmp.ne.s32.totalorder %s198, %s200
      %p207 = scmp.eq.s32.totalorder %s31, 1
      %p208 = por %p206, %p207
      %p209 = scmp.ne.s32.totalorder %s200, %s201
      %p210 = scmp.eq.s32.totalorder %s31, 0
      %p211 = por %p209, %p210
      %p212 = scmp.ne.s32.totalorder %s200, %s201
      %p213 = scmp.eq.s32.totalorder %s32, 1
      %p214 = por %p212, %p213
      %p216 = scmp.ne.s32.totalorder %s201, %s215
      %p217 = scmp.eq.s32.totalorder %s32, 0
      %p218 = por %p216, %p217
      %s220 = sadd.s32 %s219, 1
      %p223 = scmp.eq.s32.totalorder %s26, 1
      %p224 = scmp.ne.s32.totalorder %s219, %s221
      %p225 = scmp.eq.s32.totalorder %s26, 0
      %p226 = por %p224, %p225
      %p227 = scmp.ne.s32.totalorder %s219, %s221
      %p228 = scmp.eq.s32.totalorder %s31, 1
      %p229 = por %p227, %p228
      %p230 = scmp.ne.s32.totalorder %s221, %s222
      %p231 = scmp.eq.s32.totalorder %s31, 0
      %p232 = por %p230, %p231
      %p233 = scmp.ne.s32.totalorder %s221, %s222
      %p234 = scmp.eq.s32.totalorder %s32, 1
      %p235 = por %p233, %p234
      %p237 = scmp.ne.s32.totalorder %s222, %s236
      %p238 = scmp.eq.s32.totalorder %s32, 0
      %p239 = por %p237, %p238
      %s241 = sadd.s32 %s240, 1
      %p244 = scmp.eq.s32.totalorder %s26, 1
      %p245 = scmp.ne.s32.totalorder %s240, %s242
      %p246 = scmp.eq.s32.totalorder %s26, 0
      %p247 = por %p245, %p246
      %p248 = scmp.ne.s32.totalorder %s240, %s242
      %p249 = scmp.eq.s32.totalorder %s31, 1
      %p250 = por %p248, %p249
      %p251 = scmp.ne.s32.totalorder %s242, %s243
      %p252 = scmp.eq.s32.totalorder %s31, 0
      %p253 = por %p251, %p252
      %p254 = scmp.ne.s32.totalorder %s242, %s243
      %p255 = scmp.eq.s32.totalorder %s32, 1
      %p256 = por %p254, %p255
      %p258 = scmp.ne.s32.totalorder %s243, %s257
      %p259 = scmp.eq.s32.totalorder %s32, 0
      %p260 = por %p258, %p259
      %s262 = sadd.s32 %s261, 1
      %p265 = scmp.eq.s32.totalorder %s26, 1
      %p266 = scmp.ne.s32.totalorder %s261, %s263
      %p267 = scmp.eq.s32.totalorder %s26, 0
      %p268 = por %p266, %p267
      %p269 = scmp.ne.s32.totalorder %s261, %s263
      %p270 = scmp.eq.s32.totalorder %s31, 1
      %p271 = por %p269, %p270
      %p272 = scmp.ne.s32.totalorder %s263, %s264
      %p273 = scmp.eq.s32.totalorder %s31, 0
      %p274 = por %p272, %p273
      %p275 = scmp.ne.s32.totalorder %s263, %s264
      %p276 = scmp.eq.s32.totalorder %s32, 1
      %p277 = por %p275, %p276
      %p279 = scmp.ne.s32.totalorder %s264, %s278
      %p280 = scmp.eq.s32.totalorder %s32, 0
      %p281 = por %p279, %p280
      %s283 = sadd.s32 %s282, 1
      %p286 = scmp.eq.s32.totalorder %s26, 1
      %p287 = scmp.ne.s32.totalorder %s282, %s284
      %p288 = scmp.eq.s32.totalorder %s26, 0
      %p289 = por %p287, %p288
      %p290 = scmp.ne.s32.totalorder %s282, %s284
      %p291 = scmp.eq.s32.totalorder %s31, 1
      %p292 = por %p290, %p291
      %p293 = scmp.ne.s32.totalorder %s284, %s285
      %p294 = scmp.eq.s32.totalorder %s31, 0
      %p295 = por %p293, %p294
      %p296 = scmp.ne.s32.totalorder %s284, %s285
      %p297 = scmp.eq.s32.totalorder %s32, 1
      %p298 = por %p296, %p297
      %p300 = scmp.ne.s32.totalorder %s285, %s299
      %p301 = scmp.eq.s32.totalorder %s32, 0
      %p302 = por %p300, %p301
      %s304 = sadd.s32 %s303, 1
      %p307 = scmp.eq.s32.totalorder %s26, 1
      %p308 = scmp.ne.s32.totalorder %s303, %s305
      %p309 = scmp.eq.s32.totalorder %s26, 0
      %p310 = por %p308, %p309
      %p311 = scmp.ne.s32.totalorder %s303, %s305
      %p312 = scmp.eq.s32.totalorder %s31, 1
      %p313 = por %p311, %p312
      %p314 = scmp.ne.s32.totalorder %s305, %s306
      %p315 = scmp.eq.s32.totalorder %s31, 0
      %p316 = por %p314, %p315
      %p317 = scmp.ne.s32.totalorder %s305, %s306
      %p318 = scmp.eq.s32.totalorder %s32, 1
      %p319 = por %p317, %p318
      %p321 = scmp.ne.s32.totalorder %s306, %s320
      %p322 = scmp.eq.s32.totalorder %s32, 0
      %p323 = por %p321, %p322
      %s324 = ssub.s32 %s33, %s45
      %s325 = ssub.s32 %s34, %s41
      %s326 = sor.u32 %s324, %s325
      %p327 = scmp.eq.s32.totalorder %s326, 0
      %s329 = sadd.s32 %s328, 1
      %s330 = scalar_select %p327, %s328, %s329
      %p333 = pneg %p327
      %p334 = scmp.eq.s32.totalorder %s26, 1
      %p335 = por %p333, %p334
      %p336 = scmp.ne.s32.totalorder %s328, %s331
      %p337 = scmp.eq.s32.totalorder %s26, 0
      %p338 = por %p336, %p337
      %p339 = scmp.ne.s32.totalorder %s328, %s331
      %p340 = scmp.eq.s32.totalorder %s31, 1
      %p341 = por %p339, %p340
      %p342 = scmp.ne.s32.totalorder %s331, %s332
      %p343 = scmp.eq.s32.totalorder %s31, 0
      %p344 = por %p342, %p343
      %p345 = scmp.ne.s32.totalorder %s331, %s332
      %p346 = scmp.eq.s32.totalorder %s32, 1
      %p347 = por %p345, %p346
      %p349 = scmp.ne.s32.totalorder %s332, %s348
      %p350 = scmp.eq.s32.totalorder %s32, 0
      %p351 = por %p349, %p350
      %p352 = scmp.le.s32.totalorder 1, %s26
      %p353 = scmp.lt.s32.totalorder %s26, 3
      %p354 = pnand %p352, %p353
      %p355 = pneg %p354
      // Predicated region
      $region9: #{tpu_custom_call.1} parent=5 // pred_check
        _
      $region10: #{tpu_custom_call.1} parent=5 // pred_check_branch
        %357 = sbr.rel (%p354) target = $region12
      $region11: #{tpu_custom_call.1} parent=5 // pred_region
        %s358 = ssub.s32 %s26, 1
        // Predicated region
        $region13: #{tpu_custom_call.1} parent=11 // pred_check
          %p359 = pneg %p85
        $region14: #{tpu_custom_call.1} parent=11 // pred_check_branch
          %361 = sbr.rel (%p359) target = $region16
        $region15: #{tpu_custom_call.1} parent=11 // pred_region
          _
        $region16: #{tpu_custom_call.1} parent=11 // pred_fallthru
          _
        // Predicated region
        $region17: #{tpu_custom_call.1} parent=11 // pred_check
          %p362 = pneg %p106
        $region18: #{tpu_custom_call.1} parent=11 // pred_check_branch
          %364 = sbr.rel (%p362) target = $region20
        $region19: #{tpu_custom_call.1} parent=11 // pred_region
          _
        $region20: #{tpu_custom_call.1} parent=11 // pred_fallthru
          _
        // Predicated region
        $region21: #{tpu_custom_call.1} parent=11 // pred_check
          %p365 = pneg %p127
        $region22: #{tpu_custom_call.1} parent=11 // pred_check_branch
          %367 = sbr.rel (%p365) target = $region24
        $region23: #{tpu_custom_call.1} parent=11 // pred_region
          _
        $region24: #{tpu_custom_call.1} parent=11 // pred_fallthru
          _
        // Predicated region
        $region25: #{tpu_custom_call.1} parent=11 // pred_check
          %p368 = pneg %p148
        $region26: #{tpu_custom_call.1} parent=11 // pred_check_branch
          %370 = sbr.rel (%p368) target = $region28
        $region27: #{tpu_custom_call.1} parent=11 // pred_region
          %s372 = ssub.s32 512, 512
          %373 = vsyncadd [#allocation9], %s372
          %s374 = sshll.u32 [#allocation8], 4
          %s375 = int_to_ptr.vmem [resolvable:$true] %s374
          %380 = dma.hbm_to_vmem [thread:$0]  %s4, 512, %s375, [#allocation9], 128, 128, 8
        $region28: #{tpu_custom_call.1} parent=11 // pred_fallthru
          _
        // Predicated region
        $region29: #{tpu_custom_call.1} parent=11 // pred_check
          %p381 = pneg %p169
        $region30: #{tpu_custom_call.1} parent=11 // pred_check_branch
          %383 = sbr.rel (%p381) target = $region32
        $region31: #{tpu_custom_call.1} parent=11 // pred_region
          _
        $region32: #{tpu_custom_call.1} parent=11 // pred_fallthru
          _
        // Predicated region
        $region33: #{tpu_custom_call.1} parent=11 // pred_check
          %p384 = pneg %p190
        $region34: #{tpu_custom_call.1} parent=11 // pred_check_branch
          %386 = sbr.rel (%p384) target = $region36
        $region35: #{tpu_custom_call.1} parent=11 // pred_region
          _
        $region36: #{tpu_custom_call.1} parent=11 // pred_fallthru
          _
        // Predicated region
        $region37: #{tpu_custom_call.1} parent=11 // pred_check
          %p387 = pneg %p211
        $region38: #{tpu_custom_call.1} parent=11 // pred_check_branch
          %389 = sbr.rel (%p387) target = $region40
        $region39: #{tpu_custom_call.1} parent=11 // pred_region
          %s391 = ssub.s32 512, 512
          %392 = vsyncadd [#allocation9], %s391
          %s393 = sshll.u32 [#allocation10], 4
          %s394 = int_to_ptr.vmem [resolvable:$true] %s393
          %399 = dma.hbm_to_vmem [thread:$0]  %s7, 512, %s394, [#allocation9], 128, 128, 8
        $region40: #{tpu_custom_call.1} parent=11 // pred_fallthru
          _
        // Predicated region
        $region41: #{tpu_custom_call.1} parent=11 // pred_check
          %p400 = pneg %p232
        $region42: #{tpu_custom_call.1} parent=11 // pred_check_branch
          %402 = sbr.rel (%p400) target = $region44
        $region43: #{tpu_custom_call.1} parent=11 // pred_region
          _
        $region44: #{tpu_custom_call.1} parent=11 // pred_fallthru
          _
        // Predicated region
        $region45: #{tpu_custom_call.1} parent=11 // pred_check
          %p403 = pneg %p253
        $region46: #{tpu_custom_call.1} parent=11 // pred_check_branch
          %405 = sbr.rel (%p403) target = $region48
        $region47: #{tpu_custom_call.1} parent=11 // pred_region
          _
        $region48: #{tpu_custom_call.1} parent=11 // pred_fallthru
          _
        // Predicated region
        $region49: #{tpu_custom_call.1} parent=11 // pred_check
          %p406 = pneg %p274
        $region50: #{tpu_custom_call.1} parent=11 // pred_check_branch
          %408 = sbr.rel (%p406) target = $region52
        $region51: #{tpu_custom_call.1} parent=11 // pred_region
          _
        $region52: #{tpu_custom_call.1} parent=11 // pred_fallthru
          _
        // Predicated region
        $region53: #{tpu_custom_call.1} parent=11 // pred_check
          %p409 = pneg %p295
        $region54: #{tpu_custom_call.1} parent=11 // pred_check_branch
          %411 = sbr.rel (%p409) target = $region56
        $region55: #{tpu_custom_call.1} parent=11 // pred_region
          _
        $region56: #{tpu_custom_call.1} parent=11 // pred_fallthru
          _
        // Predicated region
        $region57: #{tpu_custom_call.1} parent=11 // pred_check
          %p412 = pneg %p316
        $region58: #{tpu_custom_call.1} parent=11 // pred_check_branch
          %414 = sbr.rel (%p412) target = $region60
        $region59: #{tpu_custom_call.1} parent=11 // pred_region
          _
        $region60: #{tpu_custom_call.1} parent=11 // pred_fallthru
          _
      $region12: #{tpu_custom_call.1} parent=5 // pred_fallthru
        _
      %p415 = scmp.lt.s32.totalorder %s26, 2
      // Predicated region
      $region61: #{tpu_custom_call.1} parent=5 // pred_check
        %p416 = pneg %p415
      $region62: #{tpu_custom_call.1} parent=5 // pred_check_branch
        %418 = sbr.rel (%p416) target = $region64
      $region63: #{tpu_custom_call.1} parent=5 // pred_region
        // Predicated region
        $region65: #{tpu_custom_call.1} parent=63 // pred_check
          %p419 = pneg %p58
        $region66: #{tpu_custom_call.1} parent=63 // pred_check_branch
          %421 = sbr.rel (%p419) target = $region68
        $region67: #{tpu_custom_call.1} parent=63 // pred_region
          %s422 = sand.u32 %s48, 1
          %s423 = scalar_lea.sflag [#allocation6], %s422
          %s424 = sand.u32 %s48, 1
          %s425 = smul.addr %s424, 8
          %s426 = scalar_lea.vmem [#allocation5], %s425
          %s428 = ssub.s32 128, 128
          %429 = vsyncadd %s423, %s428
          %s430 = smul.addr %s33, 128
          %s431 = scalar_lea.hbm %s0, %s430
          %s433 = sshll.u32 %s426, 4
          %s434 = int_to_ptr.vmem [resolvable:$true] %s433
          %436 = dma.hbm_to_vmem [thread:$0]  %s431, 128, %s434, %s423
        $region68: #{tpu_custom_call.1} parent=63 // pred_fallthru
          _
      $region64: #{tpu_custom_call.1} parent=5 // pred_fallthru
        _
      %p437 = scmp.le.s32.totalorder 1, %s26
      %p438 = scmp.lt.s32.totalorder %s26, 3
      %p439 = pnand %p437, %p438
      %p440 = pneg %p439
      // Predicated region
      $region69: #{tpu_custom_call.1} parent=5 // pred_check
        _
      $region70: #{tpu_custom_call.1} parent=5 // pred_check_branch
        %442 = sbr.rel (%p439) target = $region72
      $region71: #{tpu_custom_call.1} parent=5 // pred_region
        %s443 = ssub.s32 %s26, 1
        %s444 = sand.u32 %s51, 1
        %s445 = scalar_lea.sflag [#allocation6], %s444
        %s446 = sand.u32 %s51, 1
        %s447 = smul.addr %s446, 8
        %s448 = scalar_lea.vmem [#allocation5], %s447
        // Predicated region
        $region73: #{tpu_custom_call.1} parent=71 // pred_check
          %p449 = pneg %p64
        $region74: #{tpu_custom_call.1} parent=71 // pred_check_branch
          %451 = sbr.rel (%p449) target = $region76
        $region75: #{tpu_custom_call.1} parent=71 // pred_region
          %452 = dma.done %s445, 128
        $region76: #{tpu_custom_call.1} parent=71 // pred_fallthru
          _
        // Predicated region
        $region77: #{tpu_custom_call.1} parent=71 // pred_check
          %p453 = pneg %p148
        $region78: #{tpu_custom_call.1} parent=71 // pred_check_branch
          %455 = sbr.rel (%p453) target = $region80
        $region79: #{tpu_custom_call.1} parent=71 // pred_region
          %456 = dma.done [#allocation9], 512
        $region80: #{tpu_custom_call.1} parent=71 // pred_fallthru
          _
        // Predicated region
        $region81: #{tpu_custom_call.1} parent=71 // pred_check
          %p457 = pneg %p211
        $region82: #{tpu_custom_call.1} parent=71 // pred_check_branch
          %459 = sbr.rel (%p457) target = $region84
        $region83: #{tpu_custom_call.1} parent=71 // pred_region
          %460 = dma.done [#allocation9], 512
        $region84: #{tpu_custom_call.1} parent=71 // pred_fallthru
          _
        %s461 = sand.u32 %s51, 1
        %s462 = scalar_lea.sflag [#allocation6], %s461
        %s463 = sand.u32 %s51, 1
        %s464 = smul.addr %s463, 8
        %s465 = scalar_lea.vmem [#allocation5], %s464
        %p466 = pneg %p64
        %p467 = pneg %p61
        %p468 = pneg %p85
        %p469 = pneg %p82
        %p470 = pneg %p106
        %p471 = pneg %p103
        %p472 = pneg %p127
        %p473 = pneg %p124
        %p474 = pneg %p148
        %p475 = pneg %p145
        %p476 = pneg %p169
        %p477 = pneg %p166
        %p478 = pneg %p190
        %p479 = pneg %p187
        %p480 = pneg %p211
        %p481 = pneg %p208
        %p482 = pneg %p232
        %p483 = pneg %p229
        %p484 = pneg %p253
        %p485 = pneg %p250
        %p486 = pneg %p274
        %p487 = pneg %p271
        %p488 = pneg %p295
        %p489 = pneg %p292
        %p490 = pneg %p316
        %p491 = pneg %p313
        %p492 = pneg %p344
        %p493 = pneg %p341
        %s494 = sand.u32 %s331, 1
        %s495 = scalar_lea.sflag [#allocation7], %s494
        %s496 = sand.u32 %s331, 1
        %s497 = smul.addr %s496, 8
        %s498 = scalar_lea.vmem [#allocation11], %s497
        %p499 = scmp.eq.s32.totalorder %s36, 0
        // Predicated region
        $region85: #{tpu_custom_call.1} parent=71 // pred_check
          %p500 = pneg %p499
        $region86: #{tpu_custom_call.1} parent=71 // pred_check_branch
          %502 = sbr.rel (%p500) target = $region88
        $region87: #{tpu_custom_call.1} parent=71 // pred_region
          %v503 = vld [vmem:[%s448] sm:$0xff]
          %v504 = vld [vmem:[%s2] sm:$0xff]
          %v505 = vld [vmem:[%s2 + $0x8] sm:$0xff]
          %v506 = vld [vmem:[%s2 + $0x10] sm:$0xff]
          %v507 = vld [vmem:[%s2 + $0x18] sm:$0xff]
          %vm508 = vcmask 261120
          %v510 = vsel %vm508, %v503, 0
          %512 = vmatprep.subr.mxu0 0.0
          %513 = vmatpush1.msra.mxu0 0.0
          %514 = vmatprep.subr.mxu0 0.0
          %515 = vmatpush1.msra.mxu0 0.0
          %516 = vmatprep.subr.mxu0 0.0
          %517 = vmatpush1.msra.mxu0 0.0
          %518 = vmatprep.subr.mxu0 0.0
          %519 = vmatpush1.msra.mxu0 0.0
          %520 = vmatprep.subr.mxu0 0.0
          %521 = vmatpush1.msra.mxu0 0.0
          %522 = vmatprep.subr.mxu0 0.0
          %523 = vmatpush1.msra.mxu0 0.0
          %524 = vmatprep.subr.mxu0 0.0
          %525 = vmatpush1.msra.mxu0 0.0
          %526 = vmatprep.subr.mxu0 0.0
          %527 = vmatpush1.msra.mxu0 0.0
          %528 = vmatprep.subr.mxu0 0.0
          %529 = vmatpush1.msra.mxu0 0.0
          %530 = vmatprep.subr.mxu0 0.0
          %531 = vmatpush1.msra.mxu0 0.0
          %532 = vmatprep.subr.mxu0 0.0
          %533 = vmatpush1.msra.mxu0 0.0
          %534 = vmatprep.subr.mxu0 0.0
          %535 = vmatpush1.msra.mxu0 0.0
          %536 = vmatprep.subr.mxu0 0.0
          %537 = vmatpush1.msra.mxu0 %v507
          %538 = vmatprep.subr.mxu0 0.0
          %539 = vmatpush1.msra.mxu0 %v506
          %540 = vmatprep.subr.mxu0 0.0
          %541 = vmatpush1.msra.mxu0 %v505
          %542 = vmatprep.subr.mxu0 0.0
          %543 = vmatpush1.msra.mxu0 %v504
          %544 = vmatprep.subr.mxu0 0.0
          %545 = vmatpush2.msra.mxu0 0.0
          %546 = vmatprep.subr.mxu0 0.0
          %547 = vmatpush2.msra.mxu0 0.0
          %548 = vmatprep.subr.mxu0 0.0
          %549 = vmatpush2.msra.mxu0 0.0
          %550 = vmatprep.subr.mxu0 0.0
          %551 = vmatpush2.msra.mxu0 0.0
          %552 = vmatprep.subr.mxu0 0.0
          %553 = vmatpush2.msra.mxu0 0.0
          %554 = vmatprep.subr.mxu0 0.0
          %555 = vmatpush2.msra.mxu0 0.0
          %556 = vmatprep.subr.mxu0 0.0
          %557 = vmatpush2.msra.mxu0 0.0
          %558 = vmatprep.subr.mxu0 0.0
          %559 = vmatpush2.msra.mxu0 0.0
          %560 = vmatprep.subr.mxu0 0.0
          %561 = vmatpush2.msra.mxu0 0.0
          %562 = vmatprep.subr.mxu0 0.0
          %563 = vmatpush2.msra.mxu0 0.0
          %564 = vmatprep.subr.mxu0 0.0
          %565 = vmatpush2.msra.mxu0 0.0
          %566 = vmatprep.subr.mxu0 0.0
          %567 = vmatpush2.msra.mxu0 0.0
          %568 = vmatprep.subr.mxu0 0.0
          %569 = vmatpush2.msra.mxu0 0.0
          %570 = vmatprep.subr.mxu0 0.0
          %571 = vmatpush2.msra.mxu0 0.0
          %572 = vmatprep.subr.mxu0 0.0
          %573 = vmatpush2.msra.mxu0 0.0
          %574 = vmatprep.subr.mxu0 0.0
          %575 = vmatpush2.msra.mxu0 0.0
          %576 = vmatprep.mubr.f32.mxu0 0.0
          %577 = vmatmul.mubr.f32.gmra.mxu0 %v510
          %v578 = vpop.f32.mrf.mxu0
          %v579 = vadd.f32 0.0, %v578
          %v580 = vpop.f32.mrf.mxu0
          %581 = vdwg.mxu0
          %582 = vst.msk [vmem:[#allocation2] sm:$0xff] %vm508, %v579
          %v583 = vld [vmem:[%s3] sm:$0xff]
          %v584 = vld [vmem:[%s3 + $0x8] sm:$0xff]
          %v585 = vld [vmem:[%s3 + $0x10] sm:$0xff]
          %v586 = vld [vmem:[%s3 + $0x18] sm:$0xff]
          %587 = vmatprep.subr.mxu0 0.0
          %588 = vmatpush1.msra.mxu0 0.0
          %589 = vmatprep.subr.mxu0 0.0
          %590 = vmatpush1.msra.mxu0 0.0
          %591 = vmatprep.subr.mxu0 0.0
          %592 = vmatpush1.msra.mxu0 0.0
          %593 = vmatprep.subr.mxu0 0.0
          %594 = vmatpush1.msra.mxu0 0.0
          %595 = vmatprep.subr.mxu0 0.0
          %596 = vmatpush1.msra.mxu0 0.0
          %597 = vmatprep.subr.mxu0 0.0
          %598 = vmatpush1.msra.mxu0 0.0
          %599 = vmatprep.subr.mxu0 0.0
          %600 = vmatpush1.msra.mxu0 0.0
          %601 = vmatprep.subr.mxu0 0.0
          %602 = vmatpush1.msra.mxu0 0.0
          %603 = vmatprep.subr.mxu0 0.0
          %604 = vmatpush1.msra.mxu0 0.0
          %605 = vmatprep.subr.mxu0 0.0
          %606 = vmatpush1.msra.mxu0 0.0
          %607 = vmatprep.subr.mxu0 0.0
          %608 = vmatpush1.msra.mxu0 0.0
          %609 = vmatprep.subr.mxu0 0.0
          %610 = vmatpush1.msra.mxu0 0.0
          %611 = vmatprep.subr.mxu0 0.0
          %612 = vmatpush1.msra.mxu0 %v586
          %613 = vmatprep.subr.mxu0 0.0
          %614 = vmatpush1.msra.mxu0 %v585
          %615 = vmatprep.subr.mxu0 0.0
          %616 = vmatpush1.msra.mxu0 %v584
          %617 = vmatprep.subr.mxu0 0.0
          %618 = vmatpush1.msra.mxu0 %v583
          %619 = vmatprep.subr.mxu0 0.0
          %620 = vmatpush2.msra.mxu0 0.0
          %621 = vmatprep.subr.mxu0 0.0
          %622 = vmatpush2.msra.mxu0 0.0
          %623 = vmatprep.subr.mxu0 0.0
          %624 = vmatpush2.msra.mxu0 0.0
          %625 = vmatprep.subr.mxu0 0.0
          %626 = vmatpush2.msra.mxu0 0.0
          %627 = vmatprep.subr.mxu0 0.0
          %628 = vmatpush2.msra.mxu0 0.0
          %629 = vmatprep.subr.mxu0 0.0
          %630 = vmatpush2.msra.mxu0 0.0
          %631 = vmatprep.subr.mxu0 0.0
          %632 = vmatpush2.msra.mxu0 0.0
          %633 = vmatprep.subr.mxu0 0.0
          %634 = vmatpush2.msra.mxu0 0.0
          %635 = vmatprep.subr.mxu0 0.0
          %636 = vmatpush2.msra.mxu0 0.0
          %637 = vmatprep.subr.mxu0 0.0
          %638 = vmatpush2.msra.mxu0 0.0
          %639 = vmatprep.subr.mxu0 0.0
          %640 = vmatpush2.msra.mxu0 0.0
          %641 = vmatprep.subr.mxu0 0.0
          %642 = vmatpush2.msra.mxu0 0.0
          %643 = vmatprep.subr.mxu0 0.0
          %644 = vmatpush2.msra.mxu0 0.0
          %645 = vmatprep.subr.mxu0 0.0
          %646 = vmatpush2.msra.mxu0 0.0
          %647 = vmatprep.subr.mxu0 0.0
          %648 = vmatpush2.msra.mxu0 0.0
          %649 = vmatprep.subr.mxu0 0.0
          %650 = vmatpush2.msra.mxu0 0.0
          %651 = vmatprep.mubr.f32.mxu0 0.0
          %652 = vmatmul.mubr.f32.gmra.mxu0 %v510
          %v653 = vpop.f32.mrf.mxu0
          %v654 = vadd.f32 0.0, %v653
          %v655 = vpop.f32.mrf.mxu0
          %656 = vdwg.mxu0
          %657 = vst.msk [vmem:[#allocation3] sm:$0xff] %vm508, %v654
        $region88: #{tpu_custom_call.1} parent=71 // pred_fallthru
          _
        %s658 = smul.u32 %s36, 8
        %s659 = scalar_lea.vmem %s448, %s658 [#allocation5]
        %v660 = vld [vmem:[%s659] sm:$0xff]
        %v661 = vld [vmem:[%s1] sm:$0xff]
        %v662 = vld [vmem:[%s1 + $0x8] sm:$0xff]
        %v663 = vld [vmem:[%s1 + $0x10] sm:$0xff]
        %v664 = vld [vmem:[%s1 + $0x18] sm:$0xff]
        %vm665 = vcmask 261120
        %v667 = vsel %vm665, %v660, 0
        %669 = vmatprep.subr.mxu0 0.0
        %670 = vmatpush1.msra.mxu0 0.0
        %671 = vmatprep.subr.mxu0 0.0
        %672 = vmatpush1.msra.mxu0 0.0
        %673 = vmatprep.subr.mxu0 0.0
        %674 = vmatpush1.msra.mxu0 0.0
        %675 = vmatprep.subr.mxu0 0.0
        %676 = vmatpush1.msra.mxu0 0.0
        %677 = vmatprep.subr.mxu0 0.0
        %678 = vmatpush1.msra.mxu0 0.0
        %679 = vmatprep.subr.mxu0 0.0
        %680 = vmatpush1.msra.mxu0 0.0
        %681 = vmatprep.subr.mxu0 0.0
        %682 = vmatpush1.msra.mxu0 0.0
        %683 = vmatprep.subr.mxu0 0.0
        %684 = vmatpush1.msra.mxu0 0.0
        %685 = vmatprep.subr.mxu0 0.0
        %686 = vmatpush1.msra.mxu0 0.0
        %687 = vmatprep.subr.mxu0 0.0
        %688 = vmatpush1.msra.mxu0 0.0
        %689 = vmatprep.subr.mxu0 0.0
        %690 = vmatpush1.msra.mxu0 0.0
        %691 = vmatprep.subr.mxu0 0.0
        %692 = vmatpush1.msra.mxu0 0.0
        %693 = vmatprep.subr.mxu0 0.0
        %694 = vmatpush1.msra.mxu0 %v664
        %695 = vmatprep.subr.mxu0 0.0
        %696 = vmatpush1.msra.mxu0 %v663
        %697 = vmatprep.subr.mxu0 0.0
        %698 = vmatpush1.msra.mxu0 %v662
        %699 = vmatprep.subr.mxu0 0.0
        %700 = vmatpush1.msra.mxu0 %v661
        %701 = vmatprep.subr.mxu0 0.0
        %702 = vmatpush2.msra.mxu0 0.0
        %703 = vmatprep.subr.mxu0 0.0
        %704 = vmatpush2.msra.mxu0 0.0
        %705 = vmatprep.subr.mxu0 0.0
        %706 = vmatpush2.msra.mxu0 0.0
        %707 = vmatprep.subr.mxu0 0.0
        %708 = vmatpush2.msra.mxu0 0.0
        %709 = vmatprep.subr.mxu0 0.0
        %710 = vmatpush2.msra.mxu0 0.0
        %711 = vmatprep.subr.mxu0 0.0
        %712 = vmatpush2.msra.mxu0 0.0
        %713 = vmatprep.subr.mxu0 0.0
        %714 = vmatpush2.msra.mxu0 0.0
        %715 = vmatprep.subr.mxu0 0.0
        %716 = vmatpush2.msra.mxu0 0.0
        %717 = vmatprep.subr.mxu0 0.0
        %718 = vmatpush2.msra.mxu0 0.0
        %719 = vmatprep.subr.mxu0 0.0
        %720 = vmatpush2.msra.mxu0 0.0
        %721 = vmatprep.subr.mxu0 0.0
        %722 = vmatpush2.msra.mxu0 0.0
        %723 = vmatprep.subr.mxu0 0.0
        %724 = vmatpush2.msra.mxu0 0.0
        %725 = vmatprep.subr.mxu0 0.0
        %726 = vmatpush2.msra.mxu0 0.0
        %727 = vmatprep.subr.mxu0 0.0
        %728 = vmatpush2.msra.mxu0 0.0
        %729 = vmatprep.subr.mxu0 0.0
        %730 = vmatpush2.msra.mxu0 0.0
        %731 = vmatprep.subr.mxu0 0.0
        %732 = vmatpush2.msra.mxu0 0.0
        %733 = vmatprep.mubr.f32.mxu0 0.0
        %734 = vmatmul.mubr.f32.gmra.mxu0 %v667
        %v735 = vpop.f32.mrf.mxu0
        %v736 = vadd.f32 0.0, %v735
        %v737 = vpop.f32.mrf.mxu0
        %738 = vdwg.mxu0
        %v739 = vmul.f32 %v736, 0.17677669
        %v740 = vld [vmem:[#allocation2] sm:$0xff]
        %v741 = vld [vmem:[#allocation3] sm:$0xff]
        %vm742 = vcmask 64512
        %v744 = vsel %vm742, %v739, 0
        %v747 = vsel %vm742, %v740, 0
        %749 = vmatprep.subr.mxu0 0.0
        %750 = vmatpush1.xpose.msra.mxu0 0.0
        %751 = vmatprep.subr.mxu0 0.0
        %752 = vmatpush1.xpose.msra.mxu0 0.0
        %753 = vmatprep.subr.mxu0 0.0
        %754 = vmatpush1.xpose.msra.mxu0 0.0
        %755 = vmatprep.subr.mxu0 0.0
        %756 = vmatpush1.xpose.msra.mxu0 0.0
        %757 = vmatprep.subr.mxu0 0.0
        %758 = vmatpush1.xpose.msra.mxu0 0.0
        %759 = vmatprep.subr.mxu0 0.0
        %760 = vmatpush1.xpose.msra.mxu0 0.0
        %761 = vmatprep.subr.mxu0 0.0
        %762 = vmatpush1.xpose.msra.mxu0 0.0
        %763 = vmatprep.subr.mxu0 0.0
        %764 = vmatpush1.xpose.msra.mxu0 0.0
        %765 = vmatprep.subr.mxu0 0.0
        %766 = vmatpush1.xpose.msra.mxu0 0.0
        %767 = vmatprep.subr.mxu0 0.0
        %768 = vmatpush1.xpose.msra.mxu0 0.0
        %769 = vmatprep.subr.mxu0 0.0
        %770 = vmatpush1.xpose.msra.mxu0 0.0
        %771 = vmatprep.subr.mxu0 0.0
        %772 = vmatpush1.xpose.msra.mxu0 0.0
        %773 = vmatprep.subr.mxu0 0.0
        %774 = vmatpush1.xpose.msra.mxu0 0.0
        %775 = vmatprep.subr.mxu0 0.0
        %776 = vmatpush1.xpose.msra.mxu0 0.0
        %777 = vmatprep.subr.mxu0 0.0
        %778 = vmatpush1.xpose.msra.mxu0 0.0
        %779 = vmatprep.subr.mxu0 0.0
        %780 = vmatpush1.xpose.msra.mxu0 %v747
        %781 = vmatprep.subr.mxu0 0.0
        %782 = vmatpush2.xpose.msra.mxu0 0.0
        %783 = vmatprep.subr.mxu0 0.0
        %784 = vmatpush2.xpose.msra.mxu0 0.0
        %785 = vmatprep.subr.mxu0 0.0
        %786 = vmatpush2.xpose.msra.mxu0 0.0
        %787 = vmatprep.subr.mxu0 0.0
        %788 = vmatpush2.xpose.msra.mxu0 0.0
        %789 = vmatprep.subr.mxu0 0.0
        %790 = vmatpush2.xpose.msra.mxu0 0.0
        %791 = vmatprep.subr.mxu0 0.0
        %792 = vmatpush2.xpose.msra.mxu0 0.0
        %793 = vmatprep.subr.mxu0 0.0
        %794 = vmatpush2.xpose.msra.mxu0 0.0
        %795 = vmatprep.subr.mxu0 0.0
        %796 = vmatpush2.xpose.msra.mxu0 0.0
        %797 = vmatprep.subr.mxu0 0.0
        %798 = vmatpush2.xpose.msra.mxu0 0.0
        %799 = vmatprep.subr.mxu0 0.0
        %800 = vmatpush2.xpose.msra.mxu0 0.0
        %801 = vmatprep.subr.mxu0 0.0
        %802 = vmatpush2.xpose.msra.mxu0 0.0
        %803 = vmatprep.subr.mxu0 0.0
        %804 = vmatpush2.xpose.msra.mxu0 0.0
        %805 = vmatprep.subr.mxu0 0.0
        %806 = vmatpush2.xpose.msra.mxu0 0.0
        %807 = vmatprep.subr.mxu0 0.0
        %808 = vmatpush2.xpose.msra.mxu0 0.0
        %809 = vmatprep.subr.mxu0 0.0
        %810 = vmatpush2.xpose.msra.mxu0 0.0
        %811 = vmatprep.subr.mxu0 0.0
        %812 = vmatpush2.xpose.msra.mxu0 0.0
        %813 = vmatprep.mubr.f32.mxu0 0.0
        %814 = vmatmul.mubr.f32.gmra.mxu0 %v744
        %v815 = vpop.f32.mrf.mxu0
        %v816 = vadd.f32 0.0, %v815
        %v817 = vpop.f32.mrf.mxu0
        %818 = vdwg.mxu0
        %v819 = vsel %vm742, %v816, -inf
        %820 = vmax.xlane.f32.xlu0 %v819
        %v821 = vpop.xlane.xlu0 %820
        %v822 = vsub.f32 %v816, %v821
        %v823 = vmul.f32 %v822, 1.442695
        %v824 = vpow.pop %v823
        %v825 = vsel %vm742, %v824, 0.0
        %826 = vadd.xlane.f32.xlu0 %v825
        %v827 = vpop.xlane.xlu0 %826
        %v828 = vrcp.pop %v827
        %v829 = vmul.f32 %v824, %v828
        %v831 = vsel %vm742, %v829, 0
        %833 = vmatprep.subr.mxu0 0.0
        %834 = vmatpush1.msra.mxu0 0.0
        %835 = vmatprep.subr.mxu0 0.0
        %836 = vmatpush1.msra.mxu0 0.0
        %837 = vmatprep.subr.mxu0 0.0
        %838 = vmatpush1.msra.mxu0 0.0
        %839 = vmatprep.subr.mxu0 0.0
        %840 = vmatpush1.msra.mxu0 0.0
        %841 = vmatprep.subr.mxu0 0.0
        %842 = vmatpush1.msra.mxu0 0.0
        %843 = vmatprep.subr.mxu0 0.0
        %844 = vmatpush1.msra.mxu0 0.0
        %845 = vmatprep.subr.mxu0 0.0
        %846 = vmatpush1.msra.mxu0 0.0
        %847 = vmatprep.subr.mxu0 0.0
        %848 = vmatpush1.msra.mxu0 0.0
        %849 = vmatprep.subr.mxu0 0.0
        %850 = vmatpush1.msra.mxu0 0.0
        %851 = vmatprep.subr.mxu0 0.0
        %852 = vmatpush1.msra.mxu0 0.0
        %853 = vmatprep.subr.mxu0 0.0
        %854 = vmatpush1.msra.mxu0 0.0
        %855 = vmatprep.subr.mxu0 0.0
        %856 = vmatpush1.msra.mxu0 0.0
        %857 = vmatprep.subr.mxu0 0.0
        %858 = vmatpush1.msra.mxu0 0.0
        %859 = vmatprep.subr.mxu0 0.0
        %860 = vmatpush1.msra.mxu0 0.0
        %861 = vmatprep.subr.mxu0 0.0
        %862 = vmatpush1.msra.mxu0 0.0
        %863 = vmatprep.subr.mxu0 0.0
        %864 = vmatpush1.msra.mxu0 %v741
        %865 = vmatprep.subr.mxu0 0.0
        %866 = vmatpush2.msra.mxu0 0.0
        %867 = vmatprep.subr.mxu0 0.0
        %868 = vmatpush2.msra.mxu0 0.0
        %869 = vmatprep.subr.mxu0 0.0
        %870 = vmatpush2.msra.mxu0 0.0
        %871 = vmatprep.subr.mxu0 0.0
        %872 = vmatpush2.msra.mxu0 0.0
        %873 = vmatprep.subr.mxu0 0.0
        %874 = vmatpush2.msra.mxu0 0.0
        %875 = vmatprep.subr.mxu0 0.0
        %876 = vmatpush2.msra.mxu0 0.0
        %877 = vmatprep.subr.mxu0 0.0
        %878 = vmatpush2.msra.mxu0 0.0
        %879 = vmatprep.subr.mxu0 0.0
        %880 = vmatpush2.msra.mxu0 0.0
        %881 = vmatprep.subr.mxu0 0.0
        %882 = vmatpush2.msra.mxu0 0.0
        %883 = vmatprep.subr.mxu0 0.0
        %884 = vmatpush2.msra.mxu0 0.0
        %885 = vmatprep.subr.mxu0 0.0
        %886 = vmatpush2.msra.mxu0 0.0
        %887 = vmatprep.subr.mxu0 0.0
        %888 = vmatpush2.msra.mxu0 0.0
        %889 = vmatprep.subr.mxu0 0.0
        %890 = vmatpush2.msra.mxu0 0.0
        %891 = vmatprep.subr.mxu0 0.0
        %892 = vmatpush2.msra.mxu0 0.0
        %893 = vmatprep.subr.mxu0 0.0
        %894 = vmatpush2.msra.mxu0 0.0
        %895 = vmatprep.subr.mxu0 0.0
        %896 = vmatpush2.msra.mxu0 0.0
        %897 = vmatprep.mubr.f32.mxu0 0.0
        %898 = vmatmul.mubr.f32.gmra.mxu0 %v831
        %v899 = vpop.f32.mrf.mxu0
        %v900 = vadd.f32 0.0, %v899
        %v901 = vpop.f32.mrf.mxu0
        %902 = vdwg.mxu0
        %903 = vst.msk [vmem:[#allocation4] sm:$0xff] %vm742, %v900
        %904 = vrot.lane.b32.xlu0 %v739, 120
        %v905 = vpop.permute.xlu0 %904
        %906 = vrot.lane.b32.xlu0 %v740, 120
        %v907 = vpop.permute.xlu0 %906
        %v908 = vsel %vm742, %v905, 0
        %v910 = vsel %vm742, %v907, 0
        %912 = vmatprep.subr.mxu0 0.0
        %913 = vmatpush1.xpose.msra.mxu0 0.0
        %914 = vmatprep.subr.mxu0 0.0
        %915 = vmatpush1.xpose.msra.mxu0 0.0
        %916 = vmatprep.subr.mxu0 0.0
        %917 = vmatpush1.xpose.msra.mxu0 0.0
        %918 = vmatprep.subr.mxu0 0.0
        %919 = vmatpush1.xpose.msra.mxu0 0.0
        %920 = vmatprep.subr.mxu0 0.0
        %921 = vmatpush1.xpose.msra.mxu0 0.0
        %922 = vmatprep.subr.mxu0 0.0
        %923 = vmatpush1.xpose.msra.mxu0 0.0
        %924 = vmatprep.subr.mxu0 0.0
        %925 = vmatpush1.xpose.msra.mxu0 0.0
        %926 = vmatprep.subr.mxu0 0.0
        %927 = vmatpush1.xpose.msra.mxu0 0.0
        %928 = vmatprep.subr.mxu0 0.0
        %929 = vmatpush1.xpose.msra.mxu0 0.0
        %930 = vmatprep.subr.mxu0 0.0
        %931 = vmatpush1.xpose.msra.mxu0 0.0
        %932 = vmatprep.subr.mxu0 0.0
        %933 = vmatpush1.xpose.msra.mxu0 0.0
        %934 = vmatprep.subr.mxu0 0.0
        %935 = vmatpush1.xpose.msra.mxu0 0.0
        %936 = vmatprep.subr.mxu0 0.0
        %937 = vmatpush1.xpose.msra.mxu0 0.0
        %938 = vmatprep.subr.mxu0 0.0
        %939 = vmatpush1.xpose.msra.mxu0 0.0
        %940 = vmatprep.subr.mxu0 0.0
        %941 = vmatpush1.xpose.msra.mxu0 0.0
        %942 = vmatprep.subr.mxu0 0.0
        %943 = vmatpush1.xpose.msra.mxu0 %v910
        %944 = vmatprep.subr.mxu0 0.0
        %945 = vmatpush2.xpose.msra.mxu0 0.0
        %946 = vmatprep.subr.mxu0 0.0
        %947 = vmatpush2.xpose.msra.mxu0 0.0
        %948 = vmatprep.subr.mxu0 0.0
        %949 = vmatpush2.xpose.msra.mxu0 0.0
        %950 = vmatprep.subr.mxu0 0.0
        %951 = vmatpush2.xpose.msra.mxu0 0.0
        %952 = vmatprep.subr.mxu0 0.0
        %953 = vmatpush2.xpose.msra.mxu0 0.0
        %954 = vmatprep.subr.mxu0 0.0
        %955 = vmatpush2.xpose.msra.mxu0 0.0
        %956 = vmatprep.subr.mxu0 0.0
        %957 = vmatpush2.xpose.msra.mxu0 0.0
        %958 = vmatprep.subr.mxu0 0.0
        %959 = vmatpush2.xpose.msra.mxu0 0.0
        %960 = vmatprep.subr.mxu0 0.0
        %961 = vmatpush2.xpose.msra.mxu0 0.0
        %962 = vmatprep.subr.mxu0 0.0
        %963 = vmatpush2.xpose.msra.mxu0 0.0
        %964 = vmatprep.subr.mxu0 0.0
        %965 = vmatpush2.xpose.msra.mxu0 0.0
        %966 = vmatprep.subr.mxu0 0.0
        %967 = vmatpush2.xpose.msra.mxu0 0.0
        %968 = vmatprep.subr.mxu0 0.0
        %969 = vmatpush2.xpose.msra.mxu0 0.0
        %970 = vmatprep.subr.mxu0 0.0
        %971 = vmatpush2.xpose.msra.mxu0 0.0
        %972 = vmatprep.subr.mxu0 0.0
        %973 = vmatpush2.xpose.msra.mxu0 0.0
        %974 = vmatprep.subr.mxu0 0.0
        %975 = vmatpush2.xpose.msra.mxu0 0.0
        %976 = vmatprep.mubr.f32.mxu0 0.0
        %977 = vmatmul.mubr.f32.gmra.mxu0 %v908
        %v978 = vpop.f32.mrf.mxu0
        %v979 = vadd.f32 0.0, %v978
        %v980 = vpop.f32.mrf.mxu0
        %981 = vdwg.mxu0
        %v982 = vsel %vm742, %v979, -inf
        %983 = vmax.xlane.f32.xlu0 %v982
        %v984 = vpop.xlane.xlu0 %983
        %v985 = vsub.f32 %v979, %v984
        %v986 = vmul.f32 %v985, 1.442695
        %v987 = vpow.pop %v986
        %v988 = vsel %vm742, %v987, 0.0
        %989 = vadd.xlane.f32.xlu0 %v988
        %v990 = vpop.xlane.xlu0 %989
        %v991 = vrcp.pop %v990
        %v992 = vmul.f32 %v987, %v991
        %994 = vrot.lane.b32.xlu0 %v741, 120
        %v995 = vpop.permute.xlu0 %994
        %v998 = vsel %vm742, %v992, 0
        %1000 = vmatprep.subr.mxu0 0.0
        %1001 = vmatpush1.msra.mxu0 0.0
        %1002 = vmatprep.subr.mxu0 0.0
        %1003 = vmatpush1.msra.mxu0 0.0
        %1004 = vmatprep.subr.mxu0 0.0
        %1005 = vmatpush1.msra.mxu0 0.0
        %1006 = vmatprep.subr.mxu0 0.0
        %1007 = vmatpush1.msra.mxu0 0.0
        %1008 = vmatprep.subr.mxu0 0.0
        %1009 = vmatpush1.msra.mxu0 0.0
        %1010 = vmatprep.subr.mxu0 0.0
        %1011 = vmatpush1.msra.mxu0 0.0
        %1012 = vmatprep.subr.mxu0 0.0
        %1013 = vmatpush1.msra.mxu0 0.0
        %1014 = vmatprep.subr.mxu0 0.0
        %1015 = vmatpush1.msra.mxu0 0.0
        %1016 = vmatprep.subr.mxu0 0.0
        %1017 = vmatpush1.msra.mxu0 0.0
        %1018 = vmatprep.subr.mxu0 0.0
        %1019 = vmatpush1.msra.mxu0 0.0
        %1020 = vmatprep.subr.mxu0 0.0
        %1021 = vmatpush1.msra.mxu0 0.0
        %1022 = vmatprep.subr.mxu0 0.0
        %1023 = vmatpush1.msra.mxu0 0.0
        %1024 = vmatprep.subr.mxu0 0.0
        %1025 = vmatpush1.msra.mxu0 0.0
        %1026 = vmatprep.subr.mxu0 0.0
        %1027 = vmatpush1.msra.mxu0 0.0
        %1028 = vmatprep.subr.mxu0 0.0
        %1029 = vmatpush1.msra.mxu0 0.0
        %1030 = vmatprep.subr.mxu0 0.0
        %1031 = vmatpush1.msra.mxu0 %v995
        %1032 = vmatprep.subr.mxu0 0.0
        %1033 = vmatpush2.msra.mxu0 0.0
        %1034 = vmatprep.subr.mxu0 0.0
        %1035 = vmatpush2.msra.mxu0 0.0
        %1036 = vmatprep.subr.mxu0 0.0
        %1037 = vmatpush2.msra.mxu0 0.0
        %1038 = vmatprep.subr.mxu0 0.0
        %1039 = vmatpush2.msra.mxu0 0.0
        %1040 = vmatprep.subr.mxu0 0.0
        %1041 = vmatpush2.msra.mxu0 0.0
        %1042 = vmatprep.subr.mxu0 0.0
        %1043 = vmatpush2.msra.mxu0 0.0
        %1044 = vmatprep.subr.mxu0 0.0
        %1045 = vmatpush2.msra.mxu0 0.0
        %1046 = vmatprep.subr.mxu0 0.0
        %1047 = vmatpush2.msra.mxu0 0.0
        %1048 = vmatprep.subr.mxu0 0.0
        %1049 = vmatpush2.msra.mxu0 0.0
        %1050 = vmatprep.subr.mxu0 0.0
        %1051 = vmatpush2.msra.mxu0 0.0
        %1052 = vmatprep.subr.mxu0 0.0
        %1053 = vmatpush2.msra.mxu0 0.0
        %1054 = vmatprep.subr.mxu0 0.0
        %1055 = vmatpush2.msra.mxu0 0.0
        %1056 = vmatprep.subr.mxu0 0.0
        %1057 = vmatpush2.msra.mxu0 0.0
        %1058 = vmatprep.subr.mxu0 0.0
        %1059 = vmatpush2.msra.mxu0 0.0
        %1060 = vmatprep.subr.mxu0 0.0
        %1061 = vmatpush2.msra.mxu0 0.0
        %1062 = vmatprep.subr.mxu0 0.0
        %1063 = vmatpush2.msra.mxu0 0.0
        %1064 = vmatprep.mubr.f32.mxu0 0.0
        %1065 = vmatmul.mubr.f32.gmra.mxu0 %v998
        %v1066 = vpop.f32.mrf.mxu0
        %v1067 = vadd.f32 0.0, %v1066
        %v1068 = vpop.f32.mrf.mxu0
        %1069 = vdwg.mxu0
        %1071 = vrot.lane.b32.xlu0 %v1067, 8
        %v1072 = vpop.permute.xlu0 %1071
        %vm1074 = vcmask 130112
        %1075 = vst.msk [vmem:[#allocation4] sm:$0xff] %vm1074, %v1072
        %1076 = vrot.lane.b32.xlu0 %v739, 112
        %v1077 = vpop.permute.xlu0 %1076
        %1078 = vrot.lane.b32.xlu0 %v740, 112
        %v1079 = vpop.permute.xlu0 %1078
        %v1080 = vsel %vm742, %v1077, 0
        %v1082 = vsel %vm742, %v1079, 0
        %1084 = vmatprep.subr.mxu0 0.0
        %1085 = vmatpush1.xpose.msra.mxu0 0.0
        %1086 = vmatprep.subr.mxu0 0.0
        %1087 = vmatpush1.xpose.msra.mxu0 0.0
        %1088 = vmatprep.subr.mxu0 0.0
        %1089 = vmatpush1.xpose.msra.mxu0 0.0
        %1090 = vmatprep.subr.mxu0 0.0
        %1091 = vmatpush1.xpose.msra.mxu0 0.0
        %1092 = vmatprep.subr.mxu0 0.0
        %1093 = vmatpush1.xpose.msra.mxu0 0.0
        %1094 = vmatprep.subr.mxu0 0.0
        %1095 = vmatpush1.xpose.msra.mxu0 0.0
        %1096 = vmatprep.subr.mxu0 0.0
        %1097 = vmatpush1.xpose.msra.mxu0 0.0
        %1098 = vmatprep.subr.mxu0 0.0
        %1099 = vmatpush1.xpose.msra.mxu0 0.0
        %1100 = vmatprep.subr.mxu0 0.0
        %1101 = vmatpush1.xpose.msra.mxu0 0.0
        %1102 = vmatprep.subr.mxu0 0.0
        %1103 = vmatpush1.xpose.msra.mxu0 0.0
        %1104 = vmatprep.subr.mxu0 0.0
        %1105 = vmatpush1.xpose.msra.mxu0 0.0
        %1106 = vmatprep.subr.mxu0 0.0
        %1107 = vmatpush1.xpose.msra.mxu0 0.0
        %1108 = vmatprep.subr.mxu0 0.0
        %1109 = vmatpush1.xpose.msra.mxu0 0.0
        %1110 = vmatprep.subr.mxu0 0.0
        %1111 = vmatpush1.xpose.msra.mxu0 0.0
        %1112 = vmatprep.subr.mxu0 0.0
        %1113 = vmatpush1.xpose.msra.mxu0 0.0
        %1114 = vmatprep.subr.mxu0 0.0
        %1115 = vmatpush1.xpose.msra.mxu0 %v1082
        %1116 = vmatprep.subr.mxu0 0.0
        %1117 = vmatpush2.xpose.msra.mxu0 0.0
        %1118 = vmatprep.subr.mxu0 0.0
        %1119 = vmatpush2.xpose.msra.mxu0 0.0
        %1120 = vmatprep.subr.mxu0 0.0
        %1121 = vmatpush2.xpose.msra.mxu0 0.0
        %1122 = vmatprep.subr.mxu0 0.0
        %1123 = vmatpush2.xpose.msra.mxu0 0.0
        %1124 = vmatprep.subr.mxu0 0.0
        %1125 = vmatpush2.xpose.msra.mxu0 0.0
        %1126 = vmatprep.subr.mxu0 0.0
        %1127 = vmatpush2.xpose.msra.mxu0 0.0
        %1128 = vmatprep.subr.mxu0 0.0
        %1129 = vmatpush2.xpose.msra.mxu0 0.0
        %1130 = vmatprep.subr.mxu0 0.0
        %1131 = vmatpush2.xpose.msra.mxu0 0.0
        %1132 = vmatprep.subr.mxu0 0.0
        %1133 = vmatpush2.xpose.msra.mxu0 0.0
        %1134 = vmatprep.subr.mxu0 0.0
        %1135 = vmatpush2.xpose.msra.mxu0 0.0
        %1136 = vmatprep.subr.mxu0 0.0
        %1137 = vmatpush2.xpose.msra.mxu0 0.0
        %1138 = vmatprep.subr.mxu0 0.0
        %1139 = vmatpush2.xpose.msra.mxu0 0.0
        %1140 = vmatprep.subr.mxu0 0.0
        %1141 = vmatpush2.xpose.msra.mxu0 0.0
        %1142 = vmatprep.subr.mxu0 0.0
        %1143 = vmatpush2.xpose.msra.mxu0 0.0
        %1144 = vmatprep.subr.mxu0 0.0
        %1145 = vmatpush2.xpose.msra.mxu0 0.0
        %1146 = vmatprep.subr.mxu0 0.0
        %1147 = vmatpush2.xpose.msra.mxu0 0.0
        %1148 = vmatprep.mubr.f32.mxu0 0.0
        %1149 = vmatmul.mubr.f32.gmra.mxu0 %v1080
        %v1150 = vpop.f32.mrf.mxu0
        %v1151 = vadd.f32 0.0, %v1150
        %v1152 = vpop.f32.mrf.mxu0
        %1153 = vdwg.mxu0
        %v1154 = vsel %vm742, %v1151, -inf
        %1155 = vmax.xlane.f32.xlu0 %v1154
        %v1156 = vpop.xlane.xlu0 %1155
        %v1157 = vsub.f32 %v1151, %v1156
        %v1158 = vmul.f32 %v1157, 1.442695
        %v1159 = vpow.pop %v1158
        %v1160 = vsel %vm742, %v1159, 0.0
        %1161 = vadd.xlane.f32.xlu0 %v1160
        %v1162 = vpop.xlane.xlu0 %1161
        %v1163 = vrcp.pop %v1162
        %v1164 = vmul.f32 %v1159, %v1163
        %1165 = vrot.lane.b32.xlu0 %v741, 112
        %v1166 = vpop.permute.xlu0 %1165
        %v1169 = vsel %vm742, %v1164, 0
        %1171 = vmatprep.subr.mxu0 0.0
        %1172 = vmatpush1.msra.mxu0 0.0
        %1173 = vmatprep.subr.mxu0 0.0
        %1174 = vmatpush1.msra.mxu0 0.0
        %1175 = vmatprep.subr.mxu0 0.0
        %1176 = vmatpush1.msra.mxu0 0.0
        %1177 = vmatprep.subr.mxu0 0.0
        %1178 = vmatpush1.msra.mxu0 0.0
        %1179 = vmatprep.subr.mxu0 0.0
        %1180 = vmatpush1.msra.mxu0 0.0
        %1181 = vmatprep.subr.mxu0 0.0
        %1182 = vmatpush1.msra.mxu0 0.0
        %1183 = vmatprep.subr.mxu0 0.0
        %1184 = vmatpush1.msra.mxu0 0.0
        %1185 = vmatprep.subr.mxu0 0.0
        %1186 = vmatpush1.msra.mxu0 0.0
        %1187 = vmatprep.subr.mxu0 0.0
        %1188 = vmatpush1.msra.mxu0 0.0
        %1189 = vmatprep.subr.mxu0 0.0
        %1190 = vmatpush1.msra.mxu0 0.0
        %1191 = vmatprep.subr.mxu0 0.0
        %1192 = vmatpush1.msra.mxu0 0.0
        %1193 = vmatprep.subr.mxu0 0.0
        %1194 = vmatpush1.msra.mxu0 0.0
        %1195 = vmatprep.subr.mxu0 0.0
        %1196 = vmatpush1.msra.mxu0 0.0
        %1197 = vmatprep.subr.mxu0 0.0
        %1198 = vmatpush1.msra.mxu0 0.0
        %1199 = vmatprep.subr.mxu0 0.0
        %1200 = vmatpush1.msra.mxu0 0.0
        %1201 = vmatprep.subr.mxu0 0.0
        %1202 = vmatpush1.msra.mxu0 %v1166
        %1203 = vmatprep.subr.mxu0 0.0
        %1204 = vmatpush2.msra.mxu0 0.0
        %1205 = vmatprep.subr.mxu0 0.0
        %1206 = vmatpush2.msra.mxu0 0.0
        %1207 = vmatprep.subr.mxu0 0.0
        %1208 = vmatpush2.msra.mxu0 0.0
        %1209 = vmatprep.subr.mxu0 0.0
        %1210 = vmatpush2.msra.mxu0 0.0
        %1211 = vmatprep.subr.mxu0 0.0
        %1212 = vmatpush2.msra.mxu0 0.0
        %1213 = vmatprep.subr.mxu0 0.0
        %1214 = vmatpush2.msra.mxu0 0.0
        %1215 = vmatprep.subr.mxu0 0.0
        %1216 = vmatpush2.msra.mxu0 0.0
        %1217 = vmatprep.subr.mxu0 0.0
        %1218 = vmatpush2.msra.mxu0 0.0
        %1219 = vmatprep.subr.mxu0 0.0
        %1220 = vmatpush2.msra.mxu0 0.0
        %1221 = vmatprep.subr.mxu0 0.0
        %1222 = vmatpush2.msra.mxu0 0.0
        %1223 = vmatprep.subr.mxu0 0.0
        %1224 = vmatpush2.msra.mxu0 0.0
        %1225 = vmatprep.subr.mxu0 0.0
        %1226 = vmatpush2.msra.mxu0 0.0
        %1227 = vmatprep.subr.mxu0 0.0
        %1228 = vmatpush2.msra.mxu0 0.0
        %1229 = vmatprep.subr.mxu0 0.0
        %1230 = vmatpush2.msra.mxu0 0.0
        %1231 = vmatprep.subr.mxu0 0.0
        %1232 = vmatpush2.msra.mxu0 0.0
        %1233 = vmatprep.subr.mxu0 0.0
        %1234 = vmatpush2.msra.mxu0 0.0
        %1235 = vmatprep.mubr.f32.mxu0 0.0
        %1236 = vmatmul.mubr.f32.gmra.mxu0 %v1169
        %v1237 = vpop.f32.mrf.mxu0
        %v1238 = vadd.f32 0.0, %v1237
        %v1239 = vpop.f32.mrf.mxu0
        %1240 = vdwg.mxu0
        %1242 = vrot.lane.b32.xlu0 %v1238, 16
        %v1243 = vpop.permute.xlu0 %1242
        %vm1245 = vcmask 195712
        %1246 = vst.msk [vmem:[#allocation4] sm:$0xff] %vm1245, %v1243
        %1247 = vrot.lane.b32.xlu0 %v739, 104
        %v1248 = vpop.permute.xlu0 %1247
        %1249 = vrot.lane.b32.xlu0 %v740, 104
        %v1250 = vpop.permute.xlu0 %1249
        %v1251 = vsel %vm742, %v1248, 0
        %v1253 = vsel %vm742, %v1250, 0
        %1255 = vmatprep.subr.mxu0 0.0
        %1256 = vmatpush1.xpose.msra.mxu0 0.0
        %1257 = vmatprep.subr.mxu0 0.0
        %1258 = vmatpush1.xpose.msra.mxu0 0.0
        %1259 = vmatprep.subr.mxu0 0.0
        %1260 = vmatpush1.xpose.msra.mxu0 0.0
        %1261 = vmatprep.subr.mxu0 0.0
        %1262 = vmatpush1.xpose.msra.mxu0 0.0
        %1263 = vmatprep.subr.mxu0 0.0
        %1264 = vmatpush1.xpose.msra.mxu0 0.0
        %1265 = vmatprep.subr.mxu0 0.0
        %1266 = vmatpush1.xpose.msra.mxu0 0.0
        %1267 = vmatprep.subr.mxu0 0.0
        %1268 = vmatpush1.xpose.msra.mxu0 0.0
        %1269 = vmatprep.subr.mxu0 0.0
        %1270 = vmatpush1.xpose.msra.mxu0 0.0
        %1271 = vmatprep.subr.mxu0 0.0
        %1272 = vmatpush1.xpose.msra.mxu0 0.0
        %1273 = vmatprep.subr.mxu0 0.0
        %1274 = vmatpush1.xpose.msra.mxu0 0.0
        %1275 = vmatprep.subr.mxu0 0.0
        %1276 = vmatpush1.xpose.msra.mxu0 0.0
        %1277 = vmatprep.subr.mxu0 0.0
        %1278 = vmatpush1.xpose.msra.mxu0 0.0
        %1279 = vmatprep.subr.mxu0 0.0
        %1280 = vmatpush1.xpose.msra.mxu0 0.0
        %1281 = vmatprep.subr.mxu0 0.0
        %1282 = vmatpush1.xpose.msra.mxu0 0.0
        %1283 = vmatprep.subr.mxu0 0.0
        %1284 = vmatpush1.xpose.msra.mxu0 0.0
        %1285 = vmatprep.subr.mxu0 0.0
        %1286 = vmatpush1.xpose.msra.mxu0 %v1253
        %1287 = vmatprep.subr.mxu0 0.0
        %1288 = vmatpush2.xpose.msra.mxu0 0.0
        %1289 = vmatprep.subr.mxu0 0.0
        %1290 = vmatpush2.xpose.msra.mxu0 0.0
        %1291 = vmatprep.subr.mxu0 0.0
        %1292 = vmatpush2.xpose.msra.mxu0 0.0
        %1293 = vmatprep.subr.mxu0 0.0
        %1294 = vmatpush2.xpose.msra.mxu0 0.0
        %1295 = vmatprep.subr.mxu0 0.0
        %1296 = vmatpush2.xpose.msra.mxu0 0.0
        %1297 = vmatprep.subr.mxu0 0.0
        %1298 = vmatpush2.xpose.msra.mxu0 0.0
        %1299 = vmatprep.subr.mxu0 0.0
        %1300 = vmatpush2.xpose.msra.mxu0 0.0
        %1301 = vmatprep.subr.mxu0 0.0
        %1302 = vmatpush2.xpose.msra.mxu0 0.0
        %1303 = vmatprep.subr.mxu0 0.0
        %1304 = vmatpush2.xpose.msra.mxu0 0.0
        %1305 = vmatprep.subr.mxu0 0.0
        %1306 = vmatpush2.xpose.msra.mxu0 0.0
        %1307 = vmatprep.subr.mxu0 0.0
        %1308 = vmatpush2.xpose.msra.mxu0 0.0
        %1309 = vmatprep.subr.mxu0 0.0
        %1310 = vmatpush2.xpose.msra.mxu0 0.0
        %1311 = vmatprep.subr.mxu0 0.0
        %1312 = vmatpush2.xpose.msra.mxu0 0.0
        %1313 = vmatprep.subr.mxu0 0.0
        %1314 = vmatpush2.xpose.msra.mxu0 0.0
        %1315 = vmatprep.subr.mxu0 0.0
        %1316 = vmatpush2.xpose.msra.mxu0 0.0
        %1317 = vmatprep.subr.mxu0 0.0
        %1318 = vmatpush2.xpose.msra.mxu0 0.0
        %1319 = vmatprep.mubr.f32.mxu0 0.0
        %1320 = vmatmul.mubr.f32.gmra.mxu0 %v1251
        %v1321 = vpop.f32.mrf.mxu0
        %v1322 = vadd.f32 0.0, %v1321
        %v1323 = vpop.f32.mrf.mxu0
        %1324 = vdwg.mxu0
        %v1325 = vsel %vm742, %v1322, -inf
        %1326 = vmax.xlane.f32.xlu0 %v1325
        %v1327 = vpop.xlane.xlu0 %1326
        %v1328 = vsub.f32 %v1322, %v1327
        %v1329 = vmul.f32 %v1328, 1.442695
        %v1330 = vpow.pop %v1329
        %v1331 = vsel %vm742, %v1330, 0.0
        %1332 = vadd.xlane.f32.xlu0 %v1331
        %v1333 = vpop.xlane.xlu0 %1332
        %v1334 = vrcp.pop %v1333
        %v1335 = vmul.f32 %v1330, %v1334
        %1336 = vrot.lane.b32.xlu0 %v741, 104
        %v1337 = vpop.permute.xlu0 %1336
        %v1340 = vsel %vm742, %v1335, 0
        %1342 = vmatprep.subr.mxu0 0.0
        %1343 = vmatpush1.msra.mxu0 0.0
        %1344 = vmatprep.subr.mxu0 0.0
        %1345 = vmatpush1.msra.mxu0 0.0
        %1346 = vmatprep.subr.mxu0 0.0
        %1347 = vmatpush1.msra.mxu0 0.0
        %1348 = vmatprep.subr.mxu0 0.0
        %1349 = vmatpush1.msra.mxu0 0.0
        %1350 = vmatprep.subr.mxu0 0.0
        %1351 = vmatpush1.msra.mxu0 0.0
        %1352 = vmatprep.subr.mxu0 0.0
        %1353 = vmatpush1.msra.mxu0 0.0
        %1354 = vmatprep.subr.mxu0 0.0
        %1355 = vmatpush1.msra.mxu0 0.0
        %1356 = vmatprep.subr.mxu0 0.0
        %1357 = vmatpush1.msra.mxu0 0.0
        %1358 = vmatprep.subr.mxu0 0.0
        %1359 = vmatpush1.msra.mxu0 0.0
        %1360 = vmatprep.subr.mxu0 0.0
        %1361 = vmatpush1.msra.mxu0 0.0
        %1362 = vmatprep.subr.mxu0 0.0
        %1363 = vmatpush1.msra.mxu0 0.0
        %1364 = vmatprep.subr.mxu0 0.0
        %1365 = vmatpush1.msra.mxu0 0.0
        %1366 = vmatprep.subr.mxu0 0.0
        %1367 = vmatpush1.msra.mxu0 0.0
        %1368 = vmatprep.subr.mxu0 0.0
        %1369 = vmatpush1.msra.mxu0 0.0
        %1370 = vmatprep.subr.mxu0 0.0
        %1371 = vmatpush1.msra.mxu0 0.0
        %1372 = vmatprep.subr.mxu0 0.0
        %1373 = vmatpush1.msra.mxu0 %v1337
        %1374 = vmatprep.subr.mxu0 0.0
        %1375 = vmatpush2.msra.mxu0 0.0
        %1376 = vmatprep.subr.mxu0 0.0
        %1377 = vmatpush2.msra.mxu0 0.0
        %1378 = vmatprep.subr.mxu0 0.0
        %1379 = vmatpush2.msra.mxu0 0.0
        %1380 = vmatprep.subr.mxu0 0.0
        %1381 = vmatpush2.msra.mxu0 0.0
        %1382 = vmatprep.subr.mxu0 0.0
        %1383 = vmatpush2.msra.mxu0 0.0
        %1384 = vmatprep.subr.mxu0 0.0
        %1385 = vmatpush2.msra.mxu0 0.0
        %1386 = vmatprep.subr.mxu0 0.0
        %1387 = vmatpush2.msra.mxu0 0.0
        %1388 = vmatprep.subr.mxu0 0.0
        %1389 = vmatpush2.msra.mxu0 0.0
        %1390 = vmatprep.subr.mxu0 0.0
        %1391 = vmatpush2.msra.mxu0 0.0
        %1392 = vmatprep.subr.mxu0 0.0
        %1393 = vmatpush2.msra.mxu0 0.0
        %1394 = vmatprep.subr.mxu0 0.0
        %1395 = vmatpush2.msra.mxu0 0.0
        %1396 = vmatprep.subr.mxu0 0.0
        %1397 = vmatpush2.msra.mxu0 0.0
        %1398 = vmatprep.subr.mxu0 0.0
        %1399 = vmatpush2.msra.mxu0 0.0
        %1400 = vmatprep.subr.mxu0 0.0
        %1401 = vmatpush2.msra.mxu0 0.0
        %1402 = vmatprep.subr.mxu0 0.0
        %1403 = vmatpush2.msra.mxu0 0.0
        %1404 = vmatprep.subr.mxu0 0.0
        %1405 = vmatpush2.msra.mxu0 0.0
        %1406 = vmatprep.mubr.f32.mxu0 0.0
        %1407 = vmatmul.mubr.f32.gmra.mxu0 %v1340
        %v1408 = vpop.f32.mrf.mxu0
        %v1409 = vadd.f32 0.0, %v1408
        %v1410 = vpop.f32.mrf.mxu0
        %1411 = vdwg.mxu0
        %1413 = vrot.lane.b32.xlu0 %v1409, 24
        %v1414 = vpop.permute.xlu0 %1413
        %vm1416 = vcmask 261312
        %1417 = vst.msk [vmem:[#allocation4] sm:$0xff] %vm1416, %v1414
        %v1418 = vld [vmem:[#allocation4] sm:$0xff]
        %v1419 = vld [vmem:[#allocation8] sm:$0xff]
        %v1420 = vld [vmem:[#allocation8 + $0x8] sm:$0xff]
        %v1421 = vld [vmem:[#allocation8 + $0x10] sm:$0xff]
        %v1422 = vld [vmem:[#allocation8 + $0x18] sm:$0xff]
        %v1424 = vsel %vm665, %v1418, 0
        %1426 = vmatprep.subr.mxu0 0.0
        %1427 = vmatpush1.msra.mxu0 0.0
        %1428 = vmatprep.subr.mxu0 0.0
        %1429 = vmatpush1.msra.mxu0 0.0
        %1430 = vmatprep.subr.mxu0 0.0
        %1431 = vmatpush1.msra.mxu0 0.0
        %1432 = vmatprep.subr.mxu0 0.0
        %1433 = vmatpush1.msra.mxu0 0.0
        %1434 = vmatprep.subr.mxu0 0.0
        %1435 = vmatpush1.msra.mxu0 0.0
        %1436 = vmatprep.subr.mxu0 0.0
        %1437 = vmatpush1.msra.mxu0 0.0
        %1438 = vmatprep.subr.mxu0 0.0
        %1439 = vmatpush1.msra.mxu0 0.0
        %1440 = vmatprep.subr.mxu0 0.0
        %1441 = vmatpush1.msra.mxu0 0.0
        %1442 = vmatprep.subr.mxu0 0.0
        %1443 = vmatpush1.msra.mxu0 0.0
        %1444 = vmatprep.subr.mxu0 0.0
        %1445 = vmatpush1.msra.mxu0 0.0
        %1446 = vmatprep.subr.mxu0 0.0
        %1447 = vmatpush1.msra.mxu0 0.0
        %1448 = vmatprep.subr.mxu0 0.0
        %1449 = vmatpush1.msra.mxu0 0.0
        %1450 = vmatprep.subr.mxu0 0.0
        %1451 = vmatpush1.msra.mxu0 %v1422
        %1452 = vmatprep.subr.mxu0 0.0
        %1453 = vmatpush1.msra.mxu0 %v1421
        %1454 = vmatprep.subr.mxu0 0.0
        %1455 = vmatpush1.msra.mxu0 %v1420
        %1456 = vmatprep.subr.mxu0 0.0
        %1457 = vmatpush1.msra.mxu0 %v1419
        %1458 = vmatprep.subr.mxu0 0.0
        %1459 = vmatpush2.msra.mxu0 0.0
        %1460 = vmatprep.subr.mxu0 0.0
        %1461 = vmatpush2.msra.mxu0 0.0
        %1462 = vmatprep.subr.mxu0 0.0
        %1463 = vmatpush2.msra.mxu0 0.0
        %1464 = vmatprep.subr.mxu0 0.0
        %1465 = vmatpush2.msra.mxu0 0.0
        %1466 = vmatprep.subr.mxu0 0.0
        %1467 = vmatpush2.msra.mxu0 0.0
        %1468 = vmatprep.subr.mxu0 0.0
        %1469 = vmatpush2.msra.mxu0 0.0
        %1470 = vmatprep.subr.mxu0 0.0
        %1471 = vmatpush2.msra.mxu0 0.0
        %1472 = vmatprep.subr.mxu0 0.0
        %1473 = vmatpush2.msra.mxu0 0.0
        %1474 = vmatprep.subr.mxu0 0.0
        %1475 = vmatpush2.msra.mxu0 0.0
        %1476 = vmatprep.subr.mxu0 0.0
        %1477 = vmatpush2.msra.mxu0 0.0
        %1478 = vmatprep.subr.mxu0 0.0
        %1479 = vmatpush2.msra.mxu0 0.0
        %1480 = vmatprep.subr.mxu0 0.0
        %1481 = vmatpush2.msra.mxu0 0.0
        %1482 = vmatprep.subr.mxu0 0.0
        %1483 = vmatpush2.msra.mxu0 0.0
        %1484 = vmatprep.subr.mxu0 0.0
        %1485 = vmatpush2.msra.mxu0 0.0
        %1486 = vmatprep.subr.mxu0 0.0
        %1487 = vmatpush2.msra.mxu0 0.0
        %1488 = vmatprep.subr.mxu0 0.0
        %1489 = vmatpush2.msra.mxu0 0.0
        %1490 = vmatprep.mubr.f32.mxu0 0.0
        %1491 = vmatmul.mubr.f32.gmra.mxu0 %v1424
        %v1492 = vpop.f32.mrf.mxu0
        %v1493 = vadd.f32 0.0, %v1492
        %v1494 = vpop.f32.mrf.mxu0
        %1495 = vdwg.mxu0
        %v1496 = vadd.f32 %v660, %v1493
        %v1497 = vsel %vm665, %v1496, 0.0
        %1498 = vadd.xlane.f32.xlu0 %v1497
        %v1499 = vpop.xlane.xlu0 %1498
        %v1500 = vrcp.pop 32.0
        %v1501 = vmul.f32 %v1499, %v1500
        %v1502 = vsub.f32 %v1496, %v1501
        %v1503 = vmul.f32 %v1502, %v1502
        %v1504 = vsel %vm665, %v1503, 0.0
        %1505 = vadd.xlane.f32.xlu0 %v1504
        %v1506 = vpop.xlane.xlu0 %1505
        %v1507 = vrcp.pop 31.0
        %v1508 = vmul.f32 %v1506, %v1507
        %v1509 = vrsqrt.pop %v1508
        %v1510 = vmul.f32 %v1508, %v1509
        %vm1511 = vcmp.eq.f32.partialorder %v1508, inf
        %v1512 = vsel %vm1511, %v1508, %v1510
        %vm1513 = vcmp.eq.f32.partialorder %v1508, 0.0
        %v1514 = vand.u32 %v1508, 2147483648
        %v1515 = vsel %vm1513, %v1514, %v1512
        %v1516 = vld [vmem:[%s5] sm:$0x1]
        %v1518 = vlaneseq
        %v1519 = vshrl.u32 %v1518, 7
        %v1520 = vsub.s32 0, %v1519
        %v1521 = vrot.slane %v1516, %v1520
        %v1523 = vmul.f32 %v1521, %v1502
        %v1524 = vadd.f32 %v1515, 1e-06
        %v1525 = vrcp.pop %v1524
        %v1526 = vmul.f32 %v1523, %v1525
        %v1527 = vld [vmem:[%s6] sm:$0x1]
        %v1529 = vlaneseq
        %v1530 = vshrl.u32 %v1529, 7
        %v1531 = vsub.s32 0, %v1530
        %v1532 = vrot.slane %v1527, %v1531
        %v1534 = vadd.f32 %v1526, %v1532
        %v1535 = vld [vmem:[#allocation10] sm:$0xff]
        %v1536 = vld [vmem:[#allocation10 + $0x8] sm:$0xff]
        %v1537 = vld [vmem:[#allocation10 + $0x10] sm:$0xff]
        %v1538 = vld [vmem:[#allocation10 + $0x18] sm:$0xff]
        %v1539 = vld [vmem:[%s8] sm:$0x1]
        %v1541 = vlaneseq
        %v1542 = vshrl.u32 %v1541, 7
        %v1543 = vsub.s32 0, %v1542
        %v1544 = vrot.slane %v1539, %v1543
        %v1547 = vsel %vm665, %v1534, 0
        %1549 = vmatprep.subr.mxu0 0.0
        %1550 = vmatpush1.msra.mxu0 0.0
        %1551 = vmatprep.subr.mxu0 0.0
        %1552 = vmatpush1.msra.mxu0 0.0
        %1553 = vmatprep.subr.mxu0 0.0
        %1554 = vmatpush1.msra.mxu0 0.0
        %1555 = vmatprep.subr.mxu0 0.0
        %1556 = vmatpush1.msra.mxu0 0.0
        %1557 = vmatprep.subr.mxu0 0.0
        %1558 = vmatpush1.msra.mxu0 0.0
        %1559 = vmatprep.subr.mxu0 0.0
        %1560 = vmatpush1.msra.mxu0 0.0
        %1561 = vmatprep.subr.mxu0 0.0
        %1562 = vmatpush1.msra.mxu0 0.0
        %1563 = vmatprep.subr.mxu0 0.0
        %1564 = vmatpush1.msra.mxu0 0.0
        %1565 = vmatprep.subr.mxu0 0.0
        %1566 = vmatpush1.msra.mxu0 0.0
        %1567 = vmatprep.subr.mxu0 0.0
        %1568 = vmatpush1.msra.mxu0 0.0
        %1569 = vmatprep.subr.mxu0 0.0
        %1570 = vmatpush1.msra.mxu0 0.0
        %1571 = vmatprep.subr.mxu0 0.0
        %1572 = vmatpush1.msra.mxu0 0.0
        %1573 = vmatprep.subr.mxu0 0.0
        %1574 = vmatpush1.msra.mxu0 %v1538
        %1575 = vmatprep.subr.mxu0 0.0
        %1576 = vmatpush1.msra.mxu0 %v1537
        %1577 = vmatprep.subr.mxu0 0.0
        %1578 = vmatpush1.msra.mxu0 %v1536
        %1579 = vmatprep.subr.mxu0 0.0
        %1580 = vmatpush1.msra.mxu0 %v1535
        %1581 = vmatprep.subr.mxu0 0.0
        %1582 = vmatpush2.msra.mxu0 0.0
        %1583 = vmatprep.subr.mxu0 0.0
        %1584 = vmatpush2.msra.mxu0 0.0
        %1585 = vmatprep.subr.mxu0 0.0
        %1586 = vmatpush2.msra.mxu0 0.0
        %1587 = vmatprep.subr.mxu0 0.0
        %1588 = vmatpush2.msra.mxu0 0.0
        %1589 = vmatprep.subr.mxu0 0.0
        %1590 = vmatpush2.msra.mxu0 0.0
        %1591 = vmatprep.subr.mxu0 0.0
        %1592 = vmatpush2.msra.mxu0 0.0
        %1593 = vmatprep.subr.mxu0 0.0
        %1594 = vmatpush2.msra.mxu0 0.0
        %1595 = vmatprep.subr.mxu0 0.0
        %1596 = vmatpush2.msra.mxu0 0.0
        %1597 = vmatprep.subr.mxu0 0.0
        %1598 = vmatpush2.msra.mxu0 0.0
        %1599 = vmatprep.subr.mxu0 0.0
        %1600 = vmatpush2.msra.mxu0 0.0
        %1601 = vmatprep.subr.mxu0 0.0
        %1602 = vmatpush2.msra.mxu0 0.0
        %1603 = vmatprep.subr.mxu0 0.0
        %1604 = vmatpush2.msra.mxu0 0.0
        %1605 = vmatprep.subr.mxu0 0.0
        %1606 = vmatpush2.msra.mxu0 0.0
        %1607 = vmatprep.subr.mxu0 0.0
        %1608 = vmatpush2.msra.mxu0 0.0
        %1609 = vmatprep.subr.mxu0 0.0
        %1610 = vmatpush2.msra.mxu0 0.0
        %1611 = vmatprep.subr.mxu0 0.0
        %1612 = vmatpush2.msra.mxu0 0.0
        %1613 = vmatprep.mubr.f32.mxu0 0.0
        %1614 = vmatmul.mubr.f32.gmra.mxu0 %v1547
        %v1615 = vpop.f32.mrf.mxu0
        %v1616 = vadd.f32 %v1544, %v1615
        %v1617 = vpop.f32.mrf.mxu0
        %1618 = vdwg.mxu0
        %v1619 = vmax.f32 %v1616, 0.0
        %v1620 = vld [vmem:[%s9] sm:$0xff]
        %v1621 = vld [vmem:[%s9 + $0x8] sm:$0xff]
        %v1622 = vld [vmem:[%s9 + $0x10] sm:$0xff]
        %v1623 = vld [vmem:[%s9 + $0x18] sm:$0xff]
        %v1624 = vld [vmem:[%s9 + $0x20] sm:$0xff]
        %v1625 = vld [vmem:[%s9 + $0x28] sm:$0xff]
        %v1626 = vld [vmem:[%s9 + $0x30] sm:$0xff]
        %v1627 = vld [vmem:[%s9 + $0x38] sm:$0xff]
        %v1628 = vld [vmem:[%s10] sm:$0x1]
        %v1630 = vlaneseq
        %v1631 = vshrl.u32 %v1630, 7
        %v1632 = vsub.s32 0, %v1631
        %v1633 = vrot.slane %v1628, %v1632
        %vm1635 = vcmask 523264
        %v1637 = vsel %vm1635, %v1619, 0
        %1639 = vmatprep.subr.mxu0 0.0
        %1640 = vmatpush1.msra.mxu0 0.0
        %1641 = vmatprep.subr.mxu0 0.0
        %1642 = vmatpush1.msra.mxu0 0.0
        %1643 = vmatprep.subr.mxu0 0.0
        %1644 = vmatpush1.msra.mxu0 0.0
        %1645 = vmatprep.subr.mxu0 0.0
        %1646 = vmatpush1.msra.mxu0 0.0
        %1647 = vmatprep.subr.mxu0 0.0
        %1648 = vmatpush1.msra.mxu0 0.0
        %1649 = vmatprep.subr.mxu0 0.0
        %1650 = vmatpush1.msra.mxu0 0.0
        %1651 = vmatprep.subr.mxu0 0.0
        %1652 = vmatpush1.msra.mxu0 0.0
        %1653 = vmatprep.subr.mxu0 0.0
        %1654 = vmatpush1.msra.mxu0 0.0
        %1655 = vmatprep.subr.mxu0 0.0
        %1656 = vmatpush1.msra.mxu0 %v1627
        %1657 = vmatprep.subr.mxu0 0.0
        %1658 = vmatpush1.msra.mxu0 %v1626
        %1659 = vmatprep.subr.mxu0 0.0
        %1660 = vmatpush1.msra.mxu0 %v1625
        %1661 = vmatprep.subr.mxu0 0.0
        %1662 = vmatpush1.msra.mxu0 %v1624
        %1663 = vmatprep.subr.mxu0 0.0
        %1664 = vmatpush1.msra.mxu0 %v1623
        %1665 = vmatprep.subr.mxu0 0.0
        %1666 = vmatpush1.msra.mxu0 %v1622
        %1667 = vmatprep.subr.mxu0 0.0
        %1668 = vmatpush1.msra.mxu0 %v1621
        %1669 = vmatprep.subr.mxu0 0.0
        %1670 = vmatpush1.msra.mxu0 %v1620
        %1671 = vmatprep.subr.mxu0 0.0
        %1672 = vmatpush2.msra.mxu0 0.0
        %1673 = vmatprep.subr.mxu0 0.0
        %1674 = vmatpush2.msra.mxu0 0.0
        %1675 = vmatprep.subr.mxu0 0.0
        %1676 = vmatpush2.msra.mxu0 0.0
        %1677 = vmatprep.subr.mxu0 0.0
        %1678 = vmatpush2.msra.mxu0 0.0
        %1679 = vmatprep.subr.mxu0 0.0
        %1680 = vmatpush2.msra.mxu0 0.0
        %1681 = vmatprep.subr.mxu0 0.0
        %1682 = vmatpush2.msra.mxu0 0.0
        %1683 = vmatprep.subr.mxu0 0.0
        %1684 = vmatpush2.msra.mxu0 0.0
        %1685 = vmatprep.subr.mxu0 0.0
        %1686 = vmatpush2.msra.mxu0 0.0
        %1687 = vmatprep.subr.mxu0 0.0
        %1688 = vmatpush2.msra.mxu0 0.0
        %1689 = vmatprep.subr.mxu0 0.0
        %1690 = vmatpush2.msra.mxu0 0.0
        %1691 = vmatprep.subr.mxu0 0.0
        %1692 = vmatpush2.msra.mxu0 0.0
        %1693 = vmatprep.subr.mxu0 0.0
        %1694 = vmatpush2.msra.mxu0 0.0
        %1695 = vmatprep.subr.mxu0 0.0
        %1696 = vmatpush2.msra.mxu0 0.0
        %1697 = vmatprep.subr.mxu0 0.0
        %1698 = vmatpush2.msra.mxu0 0.0
        %1699 = vmatprep.subr.mxu0 0.0
        %1700 = vmatpush2.msra.mxu0 0.0
        %1701 = vmatprep.subr.mxu0 0.0
        %1702 = vmatpush2.msra.mxu0 0.0
        %1703 = vmatprep.mubr.f32.mxu0 0.0
        %1704 = vmatmul.mubr.f32.gmra.mxu0 %v1637
        %v1705 = vpop.f32.mrf.mxu0
        %v1706 = vadd.f32 %v1633, %v1705
        %v1707 = vpop.f32.mrf.mxu0
        %1708 = vdwg.mxu0
        %v1709 = vadd.f32 %v1534, %v1706
        %v1710 = vsel %vm665, %v1709, 0.0
        %1711 = vadd.xlane.f32.xlu0 %v1710
        %v1712 = vpop.xlane.xlu0 %1711
        %v1713 = vmul.f32 %v1712, %v1500
        %v1714 = vsub.f32 %v1709, %v1713
        %v1715 = vmul.f32 %v1714, %v1714
        %v1716 = vsel %vm665, %v1715, 0.0
        %1717 = vadd.xlane.f32.xlu0 %v1716
        %v1718 = vpop.xlane.xlu0 %1717
        %v1719 = vmul.f32 %v1718, %v1507
        %v1720 = vrsqrt.pop %v1719
        %v1721 = vmul.f32 %v1719, %v1720
        %vm1722 = vcmp.eq.f32.partialorder %v1719, inf
        %v1723 = vsel %vm1722, %v1719, %v1721
        %vm1724 = vcmp.eq.f32.partialorder %v1719, 0.0
        %v1725 = vand.u32 %v1719, 2147483648
        %v1726 = vsel %vm1724, %v1725, %v1723
        %v1727 = vld [vmem:[%s11] sm:$0x1]
        %v1729 = vlaneseq
        %v1730 = vshrl.u32 %v1729, 7
        %v1731 = vsub.s32 0, %v1730
        %v1732 = vrot.slane %v1727, %v1731
        %v1734 = vmul.f32 %v1732, %v1714
        %v1735 = vadd.f32 %v1726, 1e-06
        %v1736 = vrcp.pop %v1735
        %v1737 = vmul.f32 %v1734, %v1736
        %v1738 = vld [vmem:[%s12] sm:$0x1]
        %v1740 = vlaneseq
        %v1741 = vshrl.u32 %v1740, 7
        %v1742 = vsub.s32 0, %v1741
        %v1743 = vrot.slane %v1738, %v1742
        %v1745 = vadd.f32 %v1737, %v1743
        %1746 = vst.msk [vmem:[%s498] sm:$0xff] %vm665, %v1745
        %s1747 = sand.u32 %s331, 1
        %s1748 = scalar_lea.sflag [#allocation7], %s1747
        %s1749 = sand.u32 %s331, 1
        %s1750 = smul.addr %s1749, 8
        %s1751 = scalar_lea.vmem [#allocation11], %s1750
        // Predicated region
        $region89: #{tpu_custom_call.1} parent=71 // pred_check
          %p1752 = pneg %p341
        $region90: #{tpu_custom_call.1} parent=71 // pred_check_branch
          %1754 = sbr.rel (%p1752) target = $region92
        $region91: #{tpu_custom_call.1} parent=71 // pred_region
          %s1756 = ssub.s32 128, 128
          %1757 = vsyncadd %s1748, %s1756
          %s1758 = sadd.s32 %s36, %s35
          %s1759 = smul.addr %s1758, 128
          %s1760 = scalar_lea.hbm %s13, %s1759
          %s1762 = sshll.u32 %s1751, 4
          %s1763 = int_to_ptr.vmem [resolvable:$true] %s1762
          %1765 = dma.vmem_to_hbm [thread:$0]  %s1763, 128, %s1760, %s1748
        $region92: #{tpu_custom_call.1} parent=71 // pred_fallthru
          _
      $region72: #{tpu_custom_call.1} parent=5 // pred_fallthru
        _
      %p1766 = scmp.le.s32.totalorder 2, %s26
      // Predicated region
      $region93: #{tpu_custom_call.1} parent=5 // pred_check
        %p1767 = pneg %p1766
      $region94: #{tpu_custom_call.1} parent=5 // pred_check_branch
        %1769 = sbr.rel (%p1767) target = $region96
      $region95: #{tpu_custom_call.1} parent=5 // pred_region
        %s1770 = ssub.s32 %s26, 2
        // Predicated region
        $region97: #{tpu_custom_call.1} parent=95 // pred_check
          %p1771 = pneg %p347
        $region98: #{tpu_custom_call.1} parent=95 // pred_check_branch
          %1773 = sbr.rel (%p1771) target = $region100
        $region99: #{tpu_custom_call.1} parent=95 // pred_region
          %s1774 = sand.u32 %s332, 1
          %s1775 = scalar_lea.sflag [#allocation7], %s1774
          %s1776 = sand.u32 %s332, 1
          %s1777 = smul.addr %s1776, 8
          %s1778 = scalar_lea.vmem [#allocation11], %s1777
          %1779 = dma.done %s1775, 128
        $region100: #{tpu_custom_call.1} parent=95 // pred_fallthru
          _
      $region96: #{tpu_custom_call.1} parent=5 // pred_fallthru
        _
    $region6: #{tpu_custom_call.1} parent=1 // loop_footer
      %s30 = sadd.s32 1, %s26
    $region7: #{tpu_custom_call.1} parent=1 // loop_footer_branch
      %25 = sbr.rel target = $region3
    $region8: #{tpu_custom_call.1} parent=1 // loop_exit
      _
    %1780 = vsyncpa [#allocation6], 1
    %s1781 = scalar_lea.sflag [#allocation6], 1
    %1782 = vsyncpa %s1781, 1
    %1783 = vsyncpa [#allocation9], 1
    %1784 = vsyncpa [#allocation7], 1
    %s1785 = scalar_lea.sflag [#allocation7], 1
    %1786 = vsyncpa %s1785, 1

</llo_original>
